<compile_context>
chip_gen: v7x
topology: tpu7x:2x2x1
jax: 0.10.0
libtpu: 0.0.40
codegen_flags: <defaults>
</compile_context>

<pallas_src>
import functools
import math

import jax
import jax.numpy as jnp
from jax.experimental import pallas as pl
from jax.experimental.pallas import tpu as pltpu

LANE = 128
BN_EPS = 1e-5


# --------------------------------------------------------------------------
# helpers
# --------------------------------------------------------------------------
def autopad(k, p=None, d=1):
    """Pad to 'same' shape outputs (same as the PyTorch helper)."""
    if d > 1:
        k = d * (k - 1) + 1 if isinstance(k, int) else [d * (x - 1) + 1 for x in k]
    if p is None:
        p = k // 2 if isinstance(k, int) else [x // 2 for x in k]
    return p


def _round_up(x, m):
    return ((x + m - 1) // m) * m


# --------------------------------------------------------------------------
# Fused bottleneck kernel: cv1 -> (VMEM) -> cv2 -> (+ shortcut)
# --------------------------------------------------------------------------
def _bottleneck_kernel(x_ref, w1_ref, s1_ref, w2_ref, s2_ref, o_ref, y1_ref,
                       *, k1, k2, H, W, p1, p2, add):
    """One (stream, image) grid step.

    x_ref : (H+2p1, W+2p1, cin_p)    bf16  spatially zero-padded NHWC input tile
    w1_ref: (k1, k1*cin_p, cmid_p)   bf16  cv1 weight, BN-scale folded, kw stacked on K
    s1_ref: (1, cmid_p)              f32   cv1 folded BN shift
    w2_ref: (k2, k2*cmid_p, cout_p)  bf16  cv2 weight (same packing)
    s2_ref: (1, cout_p)              f32   cv2 folded BN shift
    o_ref : (H, W, cout_p)           f32   output
    y1_ref: (H+2p2, W+2p2, cmid_p)   bf16  VMEM scratch: zero-padded cv1 activation
    """
    cin = x_ref.shape[-1]
    cmid = w1_ref.shape[-1]
    cout = w2_ref.shape[-1]

    # ---------------- cv1: k1 x k1 conv (stride 1) + BN shift + SiLU ----------------
    # One lane-concat of the k1 kw-shifted slices (reused across kh) -> k1 MXU dots of
    # depth k1*cin instead of k1*k1 dots of depth cin.
    x_cat = jnp.concatenate(
        [x_ref[:, kw:kw + W, :] for kw in range(k1)], axis=-1)    # (H+2p1, W, k1*cin)
    acc1 = None
    for kh in range(k1):
        slab = x_cat[kh:kh + H].reshape(H * W, k1 * cin)          # row-range slice: cheap
        part = jnp.dot(slab, w1_ref[kh], preferred_element_type=jnp.float32)
        acc1 = part if acc1 is None else acc1 + part
    y1 = acc1 + s1_ref[...]                                       # folded-BN shift
    y1 = y1 * jax.nn.sigmoid(y1)                                  # SiLU (f32, EUP)

    # cv1 activation never leaves VMEM: write it (bf16) into the zero-padded scratch
    # that cv2 consumes; the zero border IS cv2's zero padding (SiLU(0) == 0).
    y1_ref[...] = jnp.zeros_like(y1_ref)
    y1_ref[p2:p2 + H, p2:p2 + W, :] = y1.reshape(H, W, cmid).astype(jnp.bfloat16)

    # ---------------- cv2: k2 x k2 conv + BN shift + SiLU (+ fused shortcut) --------
    y_cat = jnp.concatenate(
        [y1_ref[:, kw:kw + W, :] for kw in range(k2)], axis=-1)   # (H+2p2, W, k2*cmid)
    acc2 = None
    for kh in range(k2):
        slab = y_cat[kh:kh + H].reshape(H * W, k2 * cmid)
        part = jnp.dot(slab, w2_ref[kh], preferred_element_type=jnp.float32)
        acc2 = part if acc2 is None else acc2 + part
    y2 = acc2 + s2_ref[...]
    y2 = y2 * jax.nn.sigmoid(y2)

    if add:
        # Shortcut fused into the epilogue; residual re-uses the already-resident bf16
        # input tile -> zero extra HBM traffic.
        # TODO(synk): PyTorch adds the f32 input; this adds its bf16-rounded value.
        res = x_ref[p1:p1 + H, p1:p1 + W, :].astype(jnp.float32).reshape(H * W, cout)
        y2 = y2 + res

    o_ref[...] = y2.reshape(H, W, cout).astype(o_ref.dtype)


def _fused_bottleneck_pallas(x_all, w1_all, s1_all, w2_all, s2_all, *,
                             k1, k2, H, W, p1, p2, add, cmid_p, cout_p):
    """x_all: (2*N, Hp, Wp, cin_p) bf16 (rgb images then ir images);
    weights/shifts stacked per stream.  Returns (2*N, H, W, cout_p) f32."""
    SN, Hp, Wp, cin_p = x_all.shape
    n_img = SN // 2

    kernel = functools.partial(_bottleneck_kernel, k1=k1, k2=k2, H=H, W=W,
                               p1=p1, p2=p2, add=add)
    return pl.pallas_call(
        kernel,
        out_shape=jax.ShapeDtypeStruct((SN, H, W, cout_p), jnp.float32),
        grid=(2, n_img),                 # stream outermost: weights re-DMA'd only twice
        in_specs=[
            pl.BlockSpec((None, Hp, Wp, cin_p),
                         lambda s, n: (s * n_img + n, 0, 0, 0)),
            pl.BlockSpec((None, k1, k1 * cin_p, cmid_p), lambda s, n: (s, 0, 0, 0)),
            pl.BlockSpec((None, 1, cmid_p), lambda s, n: (s, 0, 0)),
            pl.BlockSpec((None, k2, k2 * cmid_p, cout_p), lambda s, n: (s, 0, 0, 0)),
            pl.BlockSpec((None, 1, cout_p), lambda s, n: (s, 0, 0)),
        ],
        out_specs=pl.BlockSpec((None, H, W, cout_p),
                               lambda s, n: (s * n_img + n, 0, 0, 0)),
        scratch_shapes=[pltpu.VMEM((H + 2 * p2, W + 2 * p2, cmid_p), jnp.bfloat16)],
        compiler_params=pltpu.CompilerParams(
            dimension_semantics=("parallel", "parallel"),   # megacore sharding
            vmem_limit_bytes=32 * 1024 * 1024),              # ~2 MiB used at demo sizes
    )(x_all, w1_all, s1_all, w2_all, s2_all)


# --------------------------------------------------------------------------
# LoRA weight composition + eval-BN fold + kw-stacked packing (tiny; plain XLA)
# --------------------------------------------------------------------------
def _compose_folded_weight(p, c_in, c_out, k, stream):
    """(cat([B,Bx],1) @ cat([A,Ax],0)).view(c_out,c_in,k,k) * scaling with the eval-mode
    BN scale folded into the weight.  Returns (W_folded OIHW f32, shift f32)."""
    B = jnp.concatenate([p["lora_B"], p[f"lora_B_{stream}"]], axis=1)
    A = jnp.concatenate([p["lora_A"], p[f"lora_A_{stream}"]], axis=0)
    W = (B @ A).reshape(c_out, c_in, k, k) * p["scaling"]
    scale = p[f"bn_{stream}_gamma"] / jnp.sqrt(p[f"bn_{stream}_var"] + BN_EPS)
    shift = p[f"bn_{stream}_beta"] - p[f"bn_{stream}_mean"] * scale
    return W * scale[:, None, None, None], shift


def _pack_weight(w_oihw, c_in, c_out, kk, cin_p, cout_p):
    """OIHW -> (kh, kw*cin_p, cout_p) bf16 with kw stacked along the contraction axis
    (matching the kernel's lane-concatenated kw slabs)."""
    w = jnp.transpose(w_oihw, (2, 3, 1, 0))                       # (kh, kw, cin, cout)
    w = jnp.pad(w, ((0, 0), (0, 0), (0, cin_p - c_in), (0, cout_p - c_out)))
    return w.reshape(kk, kk * cin_p, cout_p).astype(jnp.bfloat16)


# --------------------------------------------------------------------------
# Bottleneck_all_lora_m forward
# --------------------------------------------------------------------------
def bottleneck_all_lora_m_forward(params, x_rgb, x_ir, *, c1, c2, shortcut=True,
                                  g=1, k=(3, 3), e=0.5):
    assert g == 1, "groups > 1 not implemented"      # TODO(synk): grouped conv path
    k1, k2 = k
    assert k1 % 2 == 1 and k2 % 2 == 1, "even kernel sizes not implemented"
    c_ = int(c2 * e)
    add = shortcut and c1 == c2
    p1, p2 = autopad(k1), autopad(k2)
    N, _, H, W = x_rgb.shape
    cin_p = _round_up(c1, LANE)
    cmid_p = _round_up(c_, LANE)
    cout_p = _round_up(c2, LANE)

    # ---- compose LoRA weights + fold BN, pack per stream, stack streams ----
    w1, s1, w2, s2 = [], [], [], []
    for stream in ("rgb", "ir"):
        wf1, sh1 = _compose_folded_weight(params["cv1"], c1, c_, k1, stream)
        wf2, sh2 = _compose_folded_weight(params["cv2"], c_, c2, k2, stream)
        w1.append(_pack_weight(wf1, c1, c_, k1, cin_p, cmid_p))
        w2.append(_pack_weight(wf2, c_, c2, k2, cmid_p, cout_p))
        s1.append(jnp.pad(sh1, (0, cmid_p - c_)).reshape(1, cmid_p).astype(jnp.float32))
        s2.append(jnp.pad(sh2, (0, cout_p - c2)).reshape(1, cout_p).astype(jnp.float32))
    w1_all, w2_all = jnp.stack(w1), jnp.stack(w2)     # (2, k, k*cin_p, cout_p) bf16
    s1_all, s2_all = jnp.stack(s1), jnp.stack(s2)     # (2, 1, c*_p) f32

    # ---- one NCHW->NHWC transpose + lane/spatial zero-pad + bf16 cast at entry ----
    def prep(x):
        x = jnp.transpose(x, (0, 2, 3, 1))
        x = jnp.pad(x, ((0, 0), (p1, p1), (p1, p1), (0, cin_p - c1)))
        return x.astype(jnp.bfloat16)

    x_all = jnp.concatenate([prep(x_rgb), prep(x_ir)], axis=0)   # (2N, Hp, Wp, cin_p)

    out = _fused_bottleneck_pallas(x_all, w1_all, s1_all, w2_all, s2_all,
                                   k1=k1, k2=k2, H=H, W=W, p1=p1, p2=p2,
                                   add=add, cmid_p=cmid_p, cout_p=cout_p)
    out = jnp.transpose(out[..., :c2], (0, 3, 1, 2))             # back to NCHW once
    return out[:N], out[N:]


# --------------------------------------------------------------------------
# Parameter init (mirrors the PyTorch module's reset_parameters; BN in eval mode
# with deterministic, non-trivial synthetic running stats)
# --------------------------------------------------------------------------
def init_conv_params(key, c_in, c_out, k, r, lora_alpha):
    base = c_in * c_out * k * k / (c_in * k + c_out * k)
    inter_r = max(math.floor(base * r), 1)
    inter_r_aux = max(math.floor(base * (1 - r)), 1)

    def kaiming_uniform(key, shape):
        # kaiming_uniform_(a=sqrt(5)) on a 2-D tensor -> bound = 1/sqrt(fan_in)
        bound = 1.0 / math.sqrt(shape[1])
        return jax.random.uniform(key, shape, jnp.float32, -bound, bound)

    ks = jax.random.split(key, 14)
    return {
        "lora_A":     kaiming_uniform(ks[0], (inter_r, c_out * k)),
        "lora_B":     kaiming_uniform(ks[1], (k * c_in, inter_r)),
        "lora_A_rgb": kaiming_uniform(ks[2], (inter_r_aux, c_out * k)),
        "lora_B_rgb": kaiming_uniform(ks[3], (k * c_in, inter_r_aux)),
        "lora_A_ir":  kaiming_uniform(ks[4], (inter_r_aux, c_out * k)),
        "lora_B_ir":  kaiming_uniform(ks[5], (k * c_in, inter_r_aux)),
        "bn_rgb_gamma": 1.0 + 0.1 * jax.random.normal(ks[6], (c_out,), jnp.float32),
        "bn_rgb_beta":  0.05 * jax.random.normal(ks[7], (c_out,), jnp.float32),
        "bn_rgb_mean":  0.1 * jax.random.normal(ks[8], (c_out,), jnp.float32),
        "bn_rgb_var":   1.0 + 0.1 * jnp.abs(jax.random.normal(ks[9], (c_out,), jnp.float32)),
        "bn_ir_gamma":  1.0 + 0.1 * jax.random.normal(ks[10], (c_out,), jnp.float32),
        "bn_ir_beta":   0.05 * jax.random.normal(ks[11], (c_out,), jnp.float32),
        "bn_ir_mean":   0.1 * jax.random.normal(ks[12], (c_out,), jnp.float32),
        "bn_ir_var":    1.0 + 0.1 * jnp.abs(jax.random.normal(ks[13], (c_out,), jnp.float32)),
        "scaling": lora_alpha / r,
    }


# --------------------------------------------------------------------------
# Pure-JAX references
# --------------------------------------------------------------------------
def reference_matched(params, x_rgb, x_ir, *, c1, c2, shortcut, g, k, e):
    """XLA reference mirroring the kernel's precision choices (bf16 conv inputs with
    BN-folded weights, f32 accumulation/epilogue, bf16-rounded residual)."""
    c_ = int(c2 * e)
    add = shortcut and c1 == c2

    def layer(x_nhwc, p, c_in, c_out, kk, stream):
        pad = autopad(kk)
        w_fold, shift = _compose_folded_weight(p, c_in, c_out, kk, stream)
        w_hwio = jnp.transpose(w_fold, (2, 3, 1, 0)).astype(jnp.bfloat16)
        y = jax.lax.conv_general_dilated(
            x_nhwc.astype(jnp.bfloat16), w_hwio, (1, 1),
            [(pad, pad), (pad, pad)],
            dimension_numbers=("NHWC", "HWIO", "NHWC"),
            preferred_element_type=jnp.float32)
        y = y + shift[None, None, None, :]
        return y * jax.nn.sigmoid(y)

    def stream(x_nchw, name):
        x = jnp.transpose(x_nchw, (0, 2, 3, 1))
        y = layer(x, params["cv1"], c1, c_, k[0], name)
        y = layer(y, params["cv2"], c_, c2, k[1], name)
        if add:
            y = y + x.astype(jnp.bfloat16).astype(jnp.float32)
        return jnp.transpose(y, (0, 3, 1, 2))

    return stream(x_rgb, "rgb"), stream(x_ir, "ir")


def reference_f32(params, x_rgb, x_ir, *, c1, c2, shortcut, g, k, e):
    """All-f32 PyTorch-semantics reference (conv -> eval BN -> SiLU, + shortcut)."""
    c_ = int(c2 * e)
    add = shortcut and c1 == c2

    def layer(x, p, c_in, c_out, kk, stream):
        pad = autopad(kk)
        B = jnp.concatenate([p["lora_B"], p[f"lora_B_{stream}"]], axis=1)
        A = jnp.concatenate([p["lora_A"], p[f"lora_A_{stream}"]], axis=0)
        W = (B @ A).reshape(c_out, c_in, kk, kk) * p["scaling"]
        y = jax.lax.conv_general_dilated(
            x, W, (1, 1), [(pad, pad), (pad, pad)],
            dimension_numbers=("NCHW", "OIHW", "NCHW"))
        sc = p[f"bn_{stream}_gamma"] / jnp.sqrt(p[f"bn_{stream}_var"] + BN_EPS)
        sh = p[f"bn_{stream}_beta"] - p[f"bn_{stream}_mean"] * sc
        y = y * sc[None, :, None, None] + sh[None, :, None, None]
        return y * jax.nn.sigmoid(y)

    def stream(x, name):
        y = layer(x, params["cv1"], c1, c_, k[0], name)
        y = layer(y, params["cv2"], c_, c2, k[1], name)
        return x + y if add else y

    return stream(x_rgb, "rgb"), stream(x_ir, "ir")


# --------------------------------------------------------------------------
if __name__ == "__main__":
    # Bottleneck_all_lora_m(c1, c2, shortcut=True, g=1, k=(3,3), e=0.5, r, lora_alpha)
    N, c1, c2, H, W = 2, 8, 8, 16, 16
    k, e, g, shortcut = (3, 3), 0.5, 1, True
    r, lora_alpha = 0.5, 1.0
    c_ = int(c2 * e)

    key = jax.random.PRNGKey(0)
    k_rgb, k_ir, k_cv1, k_cv2 = jax.random.split(key, 4)
    x_rgb = jax.random.normal(k_rgb, (N, c1, H, W), jnp.float32)
    x_ir = jax.random.normal(k_ir, (N, c1, H, W), jnp.float32)

    params = {
        "cv1": init_conv_params(k_cv1, c1, c_, k[0], r, lora_alpha),
        "cv2": init_conv_params(k_cv2, c_, c2, k[1], r, lora_alpha),
    }

    fwd = jax.jit(functools.partial(
        bottleneck_all_lora_m_forward,
        c1=c1, c2=c2, shortcut=shortcut, g=g, k=k, e=e))
    y_rgb, y_ir = fwd(params, x_rgb, x_ir)
    jax.block_until_ready((y_rgb, y_ir))
    assert y_rgb.shape == (N, c2, H, W) and y_ir.shape == (N, c2, H, W)

    # Check 1: against an XLA reference with matching precision choices.
    mr_rgb, mr_ir = reference_matched(params, x_rgb, x_ir, c1=c1, c2=c2,
                                      shortcut=shortcut, g=g, k=k, e=e)
    assert jnp.allclose(y_rgb, mr_rgb, rtol=1e-2, atol=2e-2)
    assert jnp.allclose(y_ir, mr_ir, rtol=1e-2, atol=2e-2)

    # Check 2: sanity against the all-f32 PyTorch-semantics reference
    # (loose tolerance accounts for the intentional bf16 MXU inputs / bf16 residual).
    fr_rgb, fr_ir = reference_f32(params, x_rgb, x_ir, c1=c1, c2=c2,
                                  shortcut=shortcut, g=g, k=k, e=e)
    assert jnp.allclose(y_rgb, fr_rgb, rtol=1e-1, atol=2e-1)
    assert jnp.allclose(y_ir, fr_ir, rtol=1e-1, atol=2e-1)

    print("KERNEL_OK")
</pallas_src>

<mosaic_0001>
module attributes {stable_mosaic.version = 11 : i64} {
  func.func @_bottleneck_kernel(%arg0: i32, %arg1: i32, %arg2: memref<1x18x18x128xbf16, #tpu.memory_space<vmem>>, %arg3: memref<1x3x384x128xbf16, #tpu.memory_space<vmem>>, %arg4: memref<1x1x128xf32, #tpu.memory_space<vmem>>, %arg5: memref<1x3x384x128xbf16, #tpu.memory_space<vmem>>, %arg6: memref<1x1x128xf32, #tpu.memory_space<vmem>>, %arg7: memref<1x16x16x128xf32, #tpu.memory_space<vmem>>, %arg8: memref<18x18x128xbf16, #tpu.memory_space<vmem>>) attributes {dimension_semantics = [#tpu.dimension_semantics<parallel>, #tpu.dimension_semantics<parallel>], iteration_bounds = array<i64: 2, 2>, scalar_prefetch = 0 : i64, scratch_operands = 1 : i64, tpu.core_type = #tpu.core_type<tc>, window_params = [{transform_indices = @transform_0, window_bounds = array<i64: 1, 18, 18, 128>}, {transform_indices = @transform_1, window_bounds = array<i64: 1, 3, 384, 128>}, {transform_indices = @transform_2, window_bounds = array<i64: 1, 1, 128>}, {transform_indices = @transform_3, window_bounds = array<i64: 1, 3, 384, 128>}, {transform_indices = @transform_4, window_bounds = array<i64: 1, 1, 128>}, {transform_indices = @transform_5, window_bounds = array<i64: 1, 16, 16, 128>}]} {
    %c0 = arith.constant 0 : index
    %c0_0 = arith.constant 0 : index
    %c0_1 = arith.constant 0 : index
    %c0_2 = arith.constant 0 : index
    %0 = vector.load %arg2[%c0, %c0_0, %c0_1, %c0_2] : memref<1x18x18x128xbf16, #tpu.memory_space<vmem>>, vector<1x18x16x128xbf16>
    %1 = vector.shape_cast %0 : vector<1x18x16x128xbf16> to vector<18x16x128xbf16>
    %c0_3 = arith.constant 0 : index
    %c0_4 = arith.constant 0 : index
    %c1 = arith.constant 1 : index
    %c0_5 = arith.constant 0 : index
    %2 = vector.load %arg2[%c0_3, %c0_4, %c1, %c0_5] : memref<1x18x18x128xbf16, #tpu.memory_space<vmem>>, vector<1x18x16x128xbf16>
    %3 = vector.shape_cast %2 : vector<1x18x16x128xbf16> to vector<18x16x128xbf16>
    %c0_6 = arith.constant 0 : index
    %c0_7 = arith.constant 0 : index
    %c2 = arith.constant 2 : index
    %c0_8 = arith.constant 0 : index
    %4 = vector.load %arg2[%c0_6, %c0_7, %c2, %c0_8] : memref<1x18x18x128xbf16, #tpu.memory_space<vmem>>, vector<1x18x16x128xbf16>
    %5 = vector.shape_cast %4 : vector<1x18x16x128xbf16> to vector<18x16x128xbf16>
    %6 = tpu.concatenate %1, %3, %5 in 2 : vector<18x16x128xbf16>, vector<18x16x128xbf16>, vector<18x16x128xbf16> -> vector<18x16x384xbf16>
    %7 = vector.extract_strided_slice %6 {offsets = [0, 0, 0], sizes = [16, 16, 384], strides = [1, 1, 1]} : vector<18x16x384xbf16> to vector<16x16x384xbf16>
    %8 = vector.shape_cast %7 : vector<16x16x384xbf16> to vector<256x384xbf16>
    %c0_9 = arith.constant 0 : index
    %c0_10 = arith.constant 0 : index
    %c0_11 = arith.constant 0 : index
    %c0_12 = arith.constant 0 : index
    %9 = vector.load %arg3[%c0_9, %c0_10, %c0_11, %c0_12] : memref<1x3x384x128xbf16, #tpu.memory_space<vmem>>, vector<1x1x384x128xbf16>
    %10 = vector.shape_cast %9 : vector<1x1x384x128xbf16> to vector<384x128xbf16>
    %cst = arith.constant dense<0.000000e+00> : vector<256x128xf32>
    %11 = tpu.matmul %8, %10, %cst {dimension_numbers = #tpu.dot_dimension_numbers<[1], [0], [0], [1], [0, 0, 1, 1], [], []>} : vector<256x384xbf16>, vector<384x128xbf16>, vector<256x128xf32> -> vector<256x128xf32>
    %12 = vector.extract_strided_slice %6 {offsets = [1, 0, 0], sizes = [16, 16, 384], strides = [1, 1, 1]} : vector<18x16x384xbf16> to vector<16x16x384xbf16>
    %13 = vector.shape_cast %12 : vector<16x16x384xbf16> to vector<256x384xbf16>
    %c0_13 = arith.constant 0 : index
    %c1_14 = arith.constant 1 : index
    %c0_15 = arith.constant 0 : index
    %c0_16 = arith.constant 0 : index
    %14 = vector.load %arg3[%c0_13, %c1_14, %c0_15, %c0_16] : memref<1x3x384x128xbf16, #tpu.memory_space<vmem>>, vector<1x1x384x128xbf16>
    %15 = vector.shape_cast %14 : vector<1x1x384x128xbf16> to vector<384x128xbf16>
    %cst_17 = arith.constant dense<0.000000e+00> : vector<256x128xf32>
    %16 = tpu.matmul %13, %15, %cst_17 {dimension_numbers = #tpu.dot_dimension_numbers<[1], [0], [0], [1], [0, 0, 1, 1], [], []>} : vector<256x384xbf16>, vector<384x128xbf16>, vector<256x128xf32> -> vector<256x128xf32>
    %17 = arith.addf %11, %16 : vector<256x128xf32>
    %18 = vector.extract_strided_slice %6 {offsets = [2, 0, 0], sizes = [16, 16, 384], strides = [1, 1, 1]} : vector<18x16x384xbf16> to vector<16x16x384xbf16>
    %19 = vector.shape_cast %18 : vector<16x16x384xbf16> to vector<256x384xbf16>
    %c0_18 = arith.constant 0 : index
    %c2_19 = arith.constant 2 : index
    %c0_20 = arith.constant 0 : index
    %c0_21 = arith.constant 0 : index
    %20 = vector.load %arg3[%c0_18, %c2_19, %c0_20, %c0_21] : memref<1x3x384x128xbf16, #tpu.memory_space<vmem>>, vector<1x1x384x128xbf16>
    %21 = vector.shape_cast %20 : vector<1x1x384x128xbf16> to vector<384x128xbf16>
    %cst_22 = arith.constant dense<0.000000e+00> : vector<256x128xf32>
    %22 = tpu.matmul %19, %21, %cst_22 {dimension_numbers = #tpu.dot_dimension_numbers<[1], [0], [0], [1], [0, 0, 1, 1], [], []>} : vector<256x384xbf16>, vector<384x128xbf16>, vector<256x128xf32> -> vector<256x128xf32>
    %23 = arith.addf %17, %22 : vector<256x128xf32>
    %c0_23 = arith.constant 0 : index
    %c0_24 = arith.constant 0 : index
    %c0_25 = arith.constant 0 : index
    %24 = vector.load %arg4[%c0_23, %c0_24, %c0_25] : memref<1x1x128xf32, #tpu.memory_space<vmem>>, vector<1x1x128xf32>
    %25 = vector.shape_cast %24 : vector<1x1x128xf32> to vector<1x128xf32>
    %26 = vector.broadcast %25 : vector<1x128xf32> to vector<256x128xf32>
    %27 = arith.addf %23, %26 : vector<256x128xf32>
    %28 = arith.negf %27 : vector<256x128xf32>
    %29 = math.exp %28 : vector<256x128xf32>
    %cst_26 = arith.constant 1.000000e+00 : f32
    %30 = vector.broadcast %cst_26 : f32 to vector<256x128xf32>
    %31 = arith.addf %30, %29 : vector<256x128xf32>
    %32 = arith.divf %30, %31 : vector<256x128xf32>
    %33 = arith.mulf %27, %32 : vector<256x128xf32>
    %cst_27 = arith.constant 0.000000e+00 : bf16
    %34 = vector.broadcast %cst_27 : bf16 to vector<18x18x128xbf16>
    %c0_28 = arith.constant 0 : index
    %c0_29 = arith.constant 0 : index
    %c0_30 = arith.constant 0 : index
    %35 = vector.load %arg8[%c0_28, %c0_29, %c0_30] : memref<18x18x128xbf16, #tpu.memory_space<vmem>>, vector<18x18x128xbf16>
    tpu.vector_store %arg8[%c0_28, %c0_29, %c0_30], %34 {strides = array<i32>} : memref<18x18x128xbf16, #tpu.memory_space<vmem>>, vector<18x18x128xbf16>,
    %36 = vector.shape_cast %33 : vector<256x128xf32> to vector<16x16x128xf32>
    %37 = arith.truncf %36 : vector<16x16x128xf32> to vector<16x16x128xbf16>
    %c1_31 = arith.constant 1 : index
    %c1_32 = arith.constant 1 : index
    %c0_33 = arith.constant 0 : index
    %38 = vector.load %arg8[%c1_31, %c1_32, %c0_33] : memref<18x18x128xbf16, #tpu.memory_space<vmem>>, vector<16x16x128xbf16>
    tpu.vector_store %arg8[%c1_31, %c1_32, %c0_33], %37 {strides = array<i32>} : memref<18x18x128xbf16, #tpu.memory_space<vmem>>, vector<16x16x128xbf16>,
    %c0_34 = arith.constant 0 : index
    %c0_35 = arith.constant 0 : index
    %c0_36 = arith.constant 0 : index
    %39 = vector.load %arg8[%c0_34, %c0_35, %c0_36] : memref<18x18x128xbf16, #tpu.memory_space<vmem>>, vector<18x16x128xbf16>
    %c0_37 = arith.constant 0 : index
    %c1_38 = arith.constant 1 : index
    %c0_39 = arith.constant 0 : index
    %40 = vector.load %arg8[%c0_37, %c1_38, %c0_39] : memref<18x18x128xbf16, #tpu.memory_space<vmem>>, vector<18x16x128xbf16>
    %c0_40 = arith.constant 0 : index
    %c2_41 = arith.constant 2 : index
    %c0_42 = arith.constant 0 : index
    %41 = vector.load %arg8[%c0_40, %c2_41, %c0_42] : memref<18x18x128xbf16, #tpu.memory_space<vmem>>, vector<18x16x128xbf16>
    %42 = tpu.concatenate %39, %40, %41 in 2 : vector<18x16x128xbf16>, vector<18x16x128xbf16>, vector<18x16x128xbf16> -> vector<18x16x384xbf16>
    %43 = vector.extract_strided_slice %42 {offsets = [0, 0, 0], sizes = [16, 16, 384], strides = [1, 1, 1]} : vector<18x16x384xbf16> to vector<16x16x384xbf16>
    %44 = vector.shape_cast %43 : vector<16x16x384xbf16> to vector<256x384xbf16>
    %c0_43 = arith.constant 0 : index
    %c0_44 = arith.constant 0 : index
    %c0_45 = arith.constant 0 : index
    %c0_46 = arith.constant 0 : index
    %45 = vector.load %arg5[%c0_43, %c0_44, %c0_45, %c0_46] : memref<1x3x384x128xbf16, #tpu.memory_space<vmem>>, vector<1x1x384x128xbf16>
    %46 = vector.shape_cast %45 : vector<1x1x384x128xbf16> to vector<384x128xbf16>
    %cst_47 = arith.constant dense<0.000000e+00> : vector<256x128xf32>
    %47 = tpu.matmul %44, %46, %cst_47 {dimension_numbers = #tpu.dot_dimension_numbers<[1], [0], [0], [1], [0, 0, 1, 1], [], []>} : vector<256x384xbf16>, vector<384x128xbf16>, vector<256x128xf32> -> vector<256x128xf32>
    %48 = vector.extract_strided_slice %42 {offsets = [1, 0, 0], sizes = [16, 16, 384], strides = [1, 1, 1]} : vector<18x16x384xbf16> to vector<16x16x384xbf16>
    %49 = vector.shape_cast %48 : vector<16x16x384xbf16> to vector<256x384xbf16>
    %c0_48 = arith.constant 0 : index
    %c1_49 = arith.constant 1 : index
    %c0_50 = arith.constant 0 : index
    %c0_51 = arith.constant 0 : index
    %50 = vector.load %arg5[%c0_48, %c1_49, %c0_50, %c0_51] : memref<1x3x384x128xbf16, #tpu.memory_space<vmem>>, vector<1x1x384x128xbf16>
    %51 = vector.shape_cast %50 : vector<1x1x384x128xbf16> to vector<384x128xbf16>
    %cst_52 = arith.constant dense<0.000000e+00> : vector<256x128xf32>
    %52 = tpu.matmul %49, %51, %cst_52 {dimension_numbers = #tpu.dot_dimension_numbers<[1], [0], [0], [1], [0, 0, 1, 1], [], []>} : vector<256x384xbf16>, vector<384x128xbf16>, vector<256x128xf32> -> vector<256x128xf32>
    %53 = arith.addf %47, %52 : vector<256x128xf32>
    %54 = vector.extract_strided_slice %42 {offsets = [2, 0, 0], sizes = [16, 16, 384], strides = [1, 1, 1]} : vector<18x16x384xbf16> to vector<16x16x384xbf16>
    %55 = vector.shape_cast %54 : vector<16x16x384xbf16> to vector<256x384xbf16>
    %c0_53 = arith.constant 0 : index
    %c2_54 = arith.constant 2 : index
    %c0_55 = arith.constant 0 : index
    %c0_56 = arith.constant 0 : index
    %56 = vector.load %arg5[%c0_53, %c2_54, %c0_55, %c0_56] : memref<1x3x384x128xbf16, #tpu.memory_space<vmem>>, vector<1x1x384x128xbf16>
    %57 = vector.shape_cast %56 : vector<1x1x384x128xbf16> to vector<384x128xbf16>
    %cst_57 = arith.constant dense<0.000000e+00> : vector<256x128xf32>
    %58 = tpu.matmul %55, %57, %cst_57 {dimension_numbers = #tpu.dot_dimension_numbers<[1], [0], [0], [1], [0, 0, 1, 1], [], []>} : vector<256x384xbf16>, vector<384x128xbf16>, vector<256x128xf32> -> vector<256x128xf32>
    %59 = arith.addf %53, %58 : vector<256x128xf32>
    %c0_58 = arith.constant 0 : index
    %c0_59 = arith.constant 0 : index
    %c0_60 = arith.constant 0 : index
    %60 = vector.load %arg6[%c0_58, %c0_59, %c0_60] : memref<1x1x128xf32, #tpu.memory_space<vmem>>, vector<1x1x128xf32>
    %61 = vector.shape_cast %60 : vector<1x1x128xf32> to vector<1x128xf32>
    %62 = vector.broadcast %61 : vector<1x128xf32> to vector<256x128xf32>
    %63 = arith.addf %59, %62 : vector<256x128xf32>
    %64 = arith.negf %63 : vector<256x128xf32>
    %65 = math.exp %64 : vector<256x128xf32>
    %cst_61 = arith.constant 1.000000e+00 : f32
    %66 = vector.broadcast %cst_61 : f32 to vector<256x128xf32>
    %67 = arith.addf %66, %65 : vector<256x128xf32>
    %68 = arith.divf %66, %67 : vector<256x128xf32>
    %69 = arith.mulf %63, %68 : vector<256x128xf32>
    %c0_62 = arith.constant 0 : index
    %c1_63 = arith.constant 1 : index
    %c1_64 = arith.constant 1 : index
    %c0_65 = arith.constant 0 : index
    %70 = vector.load %arg2[%c0_62, %c1_63, %c1_64, %c0_65] : memref<1x18x18x128xbf16, #tpu.memory_space<vmem>>, vector<1x16x16x128xbf16>
    %71 = vector.shape_cast %70 : vector<1x16x16x128xbf16> to vector<16x16x128xbf16>
    %72 = arith.extf %71 : vector<16x16x128xbf16> to vector<16x16x128xf32>
    %73 = vector.shape_cast %72 : vector<16x16x128xf32> to vector<256x128xf32>
    %74 = arith.addf %69, %73 : vector<256x128xf32>
    %75 = vector.shape_cast %74 : vector<256x128xf32> to vector<16x16x128xf32>
    %c0_66 = arith.constant 0 : index
    %c0_67 = arith.constant 0 : index
    %c0_68 = arith.constant 0 : index
    %c0_69 = arith.constant 0 : index
    %76 = vector.load %arg7[%c0_66, %c0_67, %c0_68, %c0_69] : memref<1x16x16x128xf32, #tpu.memory_space<vmem>>, vector<1x16x16x128xf32>
    %77 = vector.shape_cast %76 : vector<1x16x16x128xf32> to vector<16x16x128xf32>
    %78 = vector.shape_cast %75 : vector<16x16x128xf32> to vector<1x16x16x128xf32>
    tpu.vector_store %arg7[%c0_66, %c0_67, %c0_68, %c0_69], %78 {strides = array<i32>} : memref<1x16x16x128xf32, #tpu.memory_space<vmem>>, vector<1x16x16x128xf32>,
    return
  }
  func.func @transform_0(%arg0: i32, %arg1: i32) -> (i32, i32, i32, i32) {
    %c2_i32 = arith.constant 2 : i32
    %0 = arith.muli %arg0, %c2_i32 : i32
    %1 = arith.addi %0, %arg1 : i32
    %c0_i32 = arith.constant 0 : i32
    %c0_i32_0 = arith.constant 0 : i32
    %c0_i32_1 = arith.constant 0 : i32
    %c0_i32_2 = arith.constant 0 : i32
    return %1, %c0_i32, %c0_i32_0, %c0_i32_1 : i32, i32, i32, i32
  }
  func.func @transform_1(%arg0: i32, %arg1: i32) -> (i32, i32, i32, i32) {
    %c0_i32 = arith.constant 0 : i32
    %c0_i32_0 = arith.constant 0 : i32
    %c0_i32_1 = arith.constant 0 : i32
    %c0_i32_2 = arith.constant 0 : i32
    return %arg0, %c0_i32, %c0_i32_0, %c0_i32_1 : i32, i32, i32, i32
  }
  func.func @transform_2(%arg0: i32, %arg1: i32) -> (i32, i32, i32) {
    %c0_i32 = arith.constant 0 : i32
    %c0_i32_0 = arith.constant 0 : i32
    %c0_i32_1 = arith.constant 0 : i32
    return %arg0, %c0_i32, %c0_i32_0 : i32, i32, i32
  }
  func.func @transform_3(%arg0: i32, %arg1: i32) -> (i32, i32, i32, i32) {
    %c0_i32 = arith.constant 0 : i32
    %c0_i32_0 = arith.constant 0 : i32
    %c0_i32_1 = arith.constant 0 : i32
    %c0_i32_2 = arith.constant 0 : i32
    return %arg0, %c0_i32, %c0_i32_0, %c0_i32_1 : i32, i32, i32, i32
  }
  func.func @transform_4(%arg0: i32, %arg1: i32) -> (i32, i32, i32) {
    %c0_i32 = arith.constant 0 : i32
    %c0_i32_0 = arith.constant 0 : i32
    %c0_i32_1 = arith.constant 0 : i32
    return %arg0, %c0_i32, %c0_i32_0 : i32, i32, i32
  }
  func.func @transform_5(%arg0: i32, %arg1: i32) -> (i32, i32, i32, i32) {
    %c2_i32 = arith.constant 2 : i32
    %0 = arith.muli %arg0, %c2_i32 : i32
    %1 = arith.addi %0, %arg1 : i32
    %c0_i32 = arith.constant 0 : i32
    %c0_i32_0 = arith.constant 0 : i32
    %c0_i32_1 = arith.constant 0 : i32
    %c0_i32_2 = arith.constant 0 : i32
    return %1, %c0_i32, %c0_i32_0, %c0_i32_1 : i32, i32, i32, i32
  }
}

</mosaic_0001>

<llo_original>
// kernel: bottleneck_all_lora_m_forward.1
$region0: #{bottleneck_all_lora_m_forward.1}
  #allocation0 [shape = 'u32[]', space=smem, size = 0x4, offset = 0x4, fixed_abs, tag = 'smem constant byte address 0x4 - core index']
  #allocation1 [shape = 'u32[144,128]{1,0:T(1,128)}', space=vmem, size = 0x12000, scoped, tag = 'internal scratch']
  #allocation2 [shape = 'bf16[18,18,128]{2,1,0:T(8,128)(2,1)}', space=vmem, size = 0x1b000, scoped, tag = 'scratch operand']
  %s0 = inlined_call_operand.vmem [shape: bf16[4,18,18,128], index: 0, kind: input, shape index: {}]
  %s1 = inlined_call_operand.vmem [shape: bf16[2,3,384,128], index: 1, kind: input, shape index: {}]
  %s2 = inlined_call_operand.vmem [shape: f32[2,1,128], index: 2, kind: input, shape index: {}]
  %s3 = inlined_call_operand.vmem [shape: bf16[2,3,384,128], index: 3, kind: input, shape index: {}]
  %s4 = inlined_call_operand.vmem [shape: f32[2,1,128], index: 4, kind: input, shape index: {}]
  %s5 = inlined_call_operand.vmem [shape: f32[4,16,16,128], index: 5, kind: output, shape index: {}]
  %s6 = sld [smem:[#allocation0]]
  $region53: #{bottleneck_all_lora_m_forward.1} parent=0
    _
  %s8 = ssub.s32 1, %s6
  %s9 = scalar_select 0, %s8, %s6
  loop: start=0, step=1, limit=6
  $region2: #{bottleneck_all_lora_m_forward.1} parent=0 // loop_pre_header
    _
  $region3: #{bottleneck_all_lora_m_forward.1} parent=0 // loop_header
    %s11 = sphi 0, %s15
    %p12 = scmp.ge.s32.totalorder %s11, 6
    %s18 = sphi 0, %s30
    %s19 = sphi 0, %s26
    %s20 = sphi 0, %s18
    %s21 = sphi 0, %s19
    %s22 = sphi 0, %s20
    %s23 = sphi 0, %s21
    %s37 = sphi 0, %s39
    %s40 = sphi 0, %s37
    %s41 = sphi 0, %s40
    %s57 = sphi 0, %s41
    %s63 = sphi 0, %s65
    %s66 = sphi 0, %s63
    %s67 = sphi 0, %s66
    %s83 = sphi 0, %s67
    %s89 = sphi 0, %s91
    %s92 = sphi 0, %s89
    %s93 = sphi 0, %s92
    %s109 = sphi 0, %s93
    %s115 = sphi 0, %s117
    %s118 = sphi 0, %s115
    %s119 = sphi 0, %s118
    %s135 = sphi 0, %s119
    %s141 = sphi 0, %s143
    %s144 = sphi 0, %s141
    %s145 = sphi 0, %s144
    %s161 = sphi 0, %s145
    %s171 = sphi 0, %s173
    %s174 = sphi 0, %s171
    %s175 = sphi 0, %s174
    %s191 = sphi 0, %s175
  $region4: #{bottleneck_all_lora_m_forward.1} parent=0 // loop_header_branch
    %14 = sbr.rel (%p12) target = $region8
  $region5: #{bottleneck_all_lora_m_forward.1} parent=0 // loop_body
    %s16 = ssub.s32 %s11, 1
    %s17 = ssub.s32 %s11, 2
    %s24 = sadd.s32 1, %s19
    %p25 = scmp.ge.s32.totalorder %s24, 2
    %s26 = scalar_select %p25, 0, %s24
    %s27 = sadd.s32 1, %s18
    %s28 = scalar_select %p25, %s27, %s18
    %p29 = scmp.ge.s32.totalorder %s28, 2
    %s30 = scalar_select %p29, 0, %s28
    %s31 = smul.u32 %s18, 2
    %s32 = sadd.s32 %s31, %s19
    %s33 = smul.u32 %s30, 2
    %s34 = sadd.s32 %s33, %s26
    %s35 = ssub.s32 %s32, %s34
    %p36 = scmp.eq.s32.totalorder %s35, 0
    %s38 = sadd.s32 %s37, 1
    %s39 = scalar_select %p36, %s37, %s38
    %p42 = pneg %p36
    %p43 = scmp.eq.s32.totalorder %s11, 3
    %p44 = por %p42, %p43
    %p45 = scmp.ne.s32.totalorder %s37, %s40
    %p46 = scmp.eq.s32.totalorder %s11, 0
    %p47 = por %p45, %p46
    %p48 = scmp.ne.s32.totalorder %s37, %s40
    %p49 = scmp.eq.s32.totalorder %s16, 3
    %p50 = por %p48, %p49
    %p51 = scmp.ne.s32.totalorder %s40, %s41
    %p52 = scmp.eq.s32.totalorder %s16, 0
    %p53 = por %p51, %p52
    %p54 = scmp.ne.s32.totalorder %s40, %s41
    %p55 = scmp.eq.s32.totalorder %s17, 3
    %p56 = por %p54, %p55
    %p58 = scmp.ne.s32.totalorder %s41, %s57
    %p59 = scmp.eq.s32.totalorder %s17, 0
    %p60 = por %p58, %p59
    %s61 = ssub.s32 %s18, %s30
    %p62 = scmp.eq.s32.totalorder %s61, 0
    %s64 = sadd.s32 %s63, 1
    %s65 = scalar_select %p62, %s63, %s64
    %p68 = pneg %p62
    %p69 = scmp.eq.s32.totalorder %s11, 3
    %p70 = por %p68, %p69
    %p71 = scmp.ne.s32.totalorder %s63, %s66
    %p72 = scmp.eq.s32.totalorder %s11, 0
    %p73 = por %p71, %p72
    %p74 = scmp.ne.s32.totalorder %s63, %s66
    %p75 = scmp.eq.s32.totalorder %s16, 3
    %p76 = por %p74, %p75
    %p77 = scmp.ne.s32.totalorder %s66, %s67
    %p78 = scmp.eq.s32.totalorder %s16, 0
    %p79 = por %p77, %p78
    %p80 = scmp.ne.s32.totalorder %s66, %s67
    %p81 = scmp.eq.s32.totalorder %s17, 3
    %p82 = por %p80, %p81
    %p84 = scmp.ne.s32.totalorder %s67, %s83
    %p85 = scmp.eq.s32.totalorder %s17, 0
    %p86 = por %p84, %p85
    %s87 = ssub.s32 %s18, %s30
    %p88 = scmp.eq.s32.totalorder %s87, 0
    %s90 = sadd.s32 %s89, 1
    %s91 = scalar_select %p88, %s89, %s90
    %p94 = pneg %p88
    %p95 = scmp.eq.s32.totalorder %s11, 3
    %p96 = por %p94, %p95
    %p97 = scmp.ne.s32.totalorder %s89, %s92
    %p98 = scmp.eq.s32.totalorder %s11, 0
    %p99 = por %p97, %p98
    %p100 = scmp.ne.s32.totalorder %s89, %s92
    %p101 = scmp.eq.s32.totalorder %s16, 3
    %p102 = por %p100, %p101
    %p103 = scmp.ne.s32.totalorder %s92, %s93
    %p104 = scmp.eq.s32.totalorder %s16, 0
    %p105 = por %p103, %p104
    %p106 = scmp.ne.s32.totalorder %s92, %s93
    %p107 = scmp.eq.s32.totalorder %s17, 3
    %p108 = por %p106, %p107
    %p110 = scmp.ne.s32.totalorder %s93, %s109
    %p111 = scmp.eq.s32.totalorder %s17, 0
    %p112 = por %p110, %p111
    %s113 = ssub.s32 %s18, %s30
    %p114 = scmp.eq.s32.totalorder %s113, 0
    %s116 = sadd.s32 %s115, 1
    %s117 = scalar_select %p114, %s115, %s116
    %p120 = pneg %p114
    %p121 = scmp.eq.s32.totalorder %s11, 3
    %p122 = por %p120, %p121
    %p123 = scmp.ne.s32.totalorder %s115, %s118
    %p124 = scmp.eq.s32.totalorder %s11, 0
    %p125 = por %p123, %p124
    %p126 = scmp.ne.s32.totalorder %s115, %s118
    %p127 = scmp.eq.s32.totalorder %s16, 3
    %p128 = por %p126, %p127
    %p129 = scmp.ne.s32.totalorder %s118, %s119
    %p130 = scmp.eq.s32.totalorder %s16, 0
    %p131 = por %p129, %p130
    %p132 = scmp.ne.s32.totalorder %s118, %s119
    %p133 = scmp.eq.s32.totalorder %s17, 3
    %p134 = por %p132, %p133
    %p136 = scmp.ne.s32.totalorder %s119, %s135
    %p137 = scmp.eq.s32.totalorder %s17, 0
    %p138 = por %p136, %p137
    %s139 = ssub.s32 %s18, %s30
    %p140 = scmp.eq.s32.totalorder %s139, 0
    %s142 = sadd.s32 %s141, 1
    %s143 = scalar_select %p140, %s141, %s142
    %p146 = pneg %p140
    %p147 = scmp.eq.s32.totalorder %s11, 3
    %p148 = por %p146, %p147
    %p149 = scmp.ne.s32.totalorder %s141, %s144
    %p150 = scmp.eq.s32.totalorder %s11, 0
    %p151 = por %p149, %p150
    %p152 = scmp.ne.s32.totalorder %s141, %s144
    %p153 = scmp.eq.s32.totalorder %s16, 3
    %p154 = por %p152, %p153
    %p155 = scmp.ne.s32.totalorder %s144, %s145
    %p156 = scmp.eq.s32.totalorder %s16, 0
    %p157 = por %p155, %p156
    %p158 = scmp.ne.s32.totalorder %s144, %s145
    %p159 = scmp.eq.s32.totalorder %s17, 3
    %p160 = por %p158, %p159
    %p162 = scmp.ne.s32.totalorder %s145, %s161
    %p163 = scmp.eq.s32.totalorder %s17, 0
    %p164 = por %p162, %p163
    %s165 = smul.u32 %s18, 2
    %s166 = sadd.s32 %s165, %s19
    %s167 = smul.u32 %s30, 2
    %s168 = sadd.s32 %s167, %s26
    %s169 = ssub.s32 %s166, %s168
    %p170 = scmp.eq.s32.totalorder %s169, 0
    %s172 = sadd.s32 %s171, 1
    %s173 = scalar_select %p170, %s171, %s172
    %p176 = pneg %p170
    %p177 = scmp.eq.s32.totalorder %s11, 3
    %p178 = por %p176, %p177
    %p179 = scmp.ne.s32.totalorder %s171, %s174
    %p180 = scmp.eq.s32.totalorder %s11, 0
    %p181 = por %p179, %p180
    %p182 = scmp.ne.s32.totalorder %s171, %s174
    %p183 = scmp.eq.s32.totalorder %s16, 3
    %p184 = por %p182, %p183
    %p185 = scmp.ne.s32.totalorder %s174, %s175
    %p186 = scmp.eq.s32.totalorder %s16, 0
    %p187 = por %p185, %p186
    %p188 = scmp.ne.s32.totalorder %s174, %s175
    %p189 = scmp.eq.s32.totalorder %s17, 3
    %p190 = por %p188, %p189
    %p192 = scmp.ne.s32.totalorder %s175, %s191
    %p193 = scmp.eq.s32.totalorder %s17, 0
    %p194 = por %p192, %p193
    %p195 = scmp.le.s32.totalorder 1, %s11
    %p196 = scmp.lt.s32.totalorder %s11, 5
    %p197 = pnand %p195, %p196
    %p198 = pneg %p197
    // Predicated region
    $region9: #{bottleneck_all_lora_m_forward.1} parent=5 // pred_check
      _
    $region10: #{bottleneck_all_lora_m_forward.1} parent=5 // pred_check_branch
      %200 = sbr.rel (%p197) target = $region12
    $region11: #{bottleneck_all_lora_m_forward.1} parent=5 // pred_region
      %s201 = ssub.s32 %s11, 1
    $region12: #{bottleneck_all_lora_m_forward.1} parent=5 // pred_fallthru
      _
    %p202 = scmp.lt.s32.totalorder %s11, 4
    // Predicated region
    $region13: #{bottleneck_all_lora_m_forward.1} parent=5 // pred_check
      %p203 = pneg %p202
    $region14: #{bottleneck_all_lora_m_forward.1} parent=5 // pred_check_branch
      %205 = sbr.rel (%p203) target = $region16
    $region15: #{bottleneck_all_lora_m_forward.1} parent=5 // pred_region
      // Predicated region
      $region17: #{bottleneck_all_lora_m_forward.1} parent=15 // pred_check
        %p206 = pneg %p47
      $region18: #{bottleneck_all_lora_m_forward.1} parent=15 // pred_check_branch
        %208 = sbr.rel (%p206) target = $region20
      $region19: #{bottleneck_all_lora_m_forward.1} parent=15 // pred_region
        %s209 = smul.u32 %s18, 2
        %s210 = sadd.s32 %s209, %s19
        %p211 = scmp.lt.s32.totalorder %s210, 3
        %s212 = scalar_select %p211, %s210, 3
        %s213 = smul.addr %s212, 54
        %s214 = smul.addr %s213, 4
        %s215 = scalar_lea.vmem %s0, %s214
        %s216 = smul.u32 %s18, 2
        %s217 = sadd.s32 %s216, %s19
      $region20: #{bottleneck_all_lora_m_forward.1} parent=15 // pred_fallthru
        _
      // Predicated region
      $region21: #{bottleneck_all_lora_m_forward.1} parent=15 // pred_check
        %p218 = pneg %p73
      $region22: #{bottleneck_all_lora_m_forward.1} parent=15 // pred_check_branch
        %220 = sbr.rel (%p218) target = $region24
      $region23: #{bottleneck_all_lora_m_forward.1} parent=15 // pred_region
        %p221 = scmp.lt.s32.totalorder %s18, 1
        %s222 = scalar_select %p221, %s18, 1
        %s223 = smul.addr %s222, 144
        %s224 = smul.addr %s223, 4
        %s225 = scalar_lea.vmem %s1, %s224
      $region24: #{bottleneck_all_lora_m_forward.1} parent=15 // pred_fallthru
        _
      // Predicated region
      $region25: #{bottleneck_all_lora_m_forward.1} parent=15 // pred_check
        %p226 = pneg %p99
      $region26: #{bottleneck_all_lora_m_forward.1} parent=15 // pred_check_branch
        %228 = sbr.rel (%p226) target = $region28
      $region27: #{bottleneck_all_lora_m_forward.1} parent=15 // pred_region
        %p229 = scmp.lt.s32.totalorder %s18, 1
        %s230 = scalar_select %p229, %s18, 1
        %s231 = scalar_lea.vmem %s2, %s230
      $region28: #{bottleneck_all_lora_m_forward.1} parent=15 // pred_fallthru
        _
      // Predicated region
      $region29: #{bottleneck_all_lora_m_forward.1} parent=15 // pred_check
        %p232 = pneg %p125
      $region30: #{bottleneck_all_lora_m_forward.1} parent=15 // pred_check_branch
        %234 = sbr.rel (%p232) target = $region32
      $region31: #{bottleneck_all_lora_m_forward.1} parent=15 // pred_region
        %p235 = scmp.lt.s32.totalorder %s18, 1
        %s236 = scalar_select %p235, %s18, 1
        %s237 = smul.addr %s236, 144
        %s238 = smul.addr %s237, 4
        %s239 = scalar_lea.vmem %s3, %s238
      $region32: #{bottleneck_all_lora_m_forward.1} parent=15 // pred_fallthru
        _
      // Predicated region
      $region33: #{bottleneck_all_lora_m_forward.1} parent=15 // pred_check
        %p240 = pneg %p151
      $region34: #{bottleneck_all_lora_m_forward.1} parent=15 // pred_check_branch
        %242 = sbr.rel (%p240) target = $region36
      $region35: #{bottleneck_all_lora_m_forward.1} parent=15 // pred_region
        %p243 = scmp.lt.s32.totalorder %s18, 1
        %s244 = scalar_select %p243, %s18, 1
        %s245 = scalar_lea.vmem %s4, %s244
      $region36: #{bottleneck_all_lora_m_forward.1} parent=15 // pred_fallthru
        _
    $region16: #{bottleneck_all_lora_m_forward.1} parent=5 // pred_fallthru
      _
    %p246 = scmp.le.s32.totalorder 1, %s11
    %p247 = scmp.lt.s32.totalorder %s11, 5
    %p248 = pnand %p246, %p247
    %p249 = pneg %p248
    // Predicated region
    $region37: #{bottleneck_all_lora_m_forward.1} parent=5 // pred_check
      _
    $region38: #{bottleneck_all_lora_m_forward.1} parent=5 // pred_check_branch
      %251 = sbr.rel (%p248) target = $region40
    $region39: #{bottleneck_all_lora_m_forward.1} parent=5 // pred_region
      %s252 = ssub.s32 %s11, 1
      %s253 = smul.u32 %s20, 2
      %s254 = sadd.s32 %s253, %s21
      %p255 = scmp.lt.s32.totalorder %s254, 3
      %s256 = scalar_select %p255, %s254, 3
      %s257 = smul.addr %s256, 54
      %s258 = smul.addr %s257, 4
      %s259 = scalar_lea.vmem %s0, %s258
      %p260 = pneg %p53
      %p261 = pneg %p50
      %p262 = scmp.lt.s32.totalorder %s20, 1
      %s263 = scalar_select %p262, %s20, 1
      %s264 = smul.addr %s263, 144
      %s265 = smul.addr %s264, 4
      %s266 = scalar_lea.vmem %s1, %s265
      %p267 = pneg %p79
      %p268 = pneg %p76
      %p269 = scmp.lt.s32.totalorder %s20, 1
      %s270 = scalar_select %p269, %s20, 1
      %s271 = scalar_lea.vmem %s2, %s270
      %p272 = pneg %p105
      %p273 = pneg %p102
      %p274 = scmp.lt.s32.totalorder %s20, 1
      %s275 = scalar_select %p274, %s20, 1
      %s276 = smul.addr %s275, 144
      %s277 = smul.addr %s276, 4
      %s278 = scalar_lea.vmem %s3, %s277
      %p279 = pneg %p131
      %p280 = pneg %p128
      %p281 = scmp.lt.s32.totalorder %s20, 1
      %s282 = scalar_select %p281, %s20, 1
      %s283 = scalar_lea.vmem %s4, %s282
      %p284 = pneg %p157
      %p285 = pneg %p154
      %p286 = pneg %p187
      %p287 = pneg %p184
      %s288 = smul.u32 %s20, 2
      %s289 = sadd.s32 %s288, %s21
      %p290 = scmp.lt.s32.totalorder %s289, 3
      %s291 = scalar_select %p290, %s289, 3
      %s292 = smul.addr %s291, 32
      %s293 = smul.addr %s292, 8
      %s294 = scalar_lea.vmem %s5, %s293
      %s295 = smul.u32 %s20, 2
      %s296 = sadd.s32 %s295, %s21
      %p297 = scmp.lt.s32.totalorder %s296, 3
      %s298 = scalar_select %p297, %s296, 3
      %s299 = smul.addr %s298, 54
      %s300 = smul.addr %s299, 4
      %s301 = scalar_lea.vmem %s0, %s300
      %s302 = smul.u32 %s20, 2
      %s303 = sadd.s32 %s302, %s21
      %p304 = scmp.lt.s32.totalorder %s20, 1
      %s305 = scalar_select %p304, %s20, 1
      %s306 = smul.addr %s305, 144
      %s307 = smul.addr %s306, 4
      %s308 = scalar_lea.vmem %s1, %s307
      %p309 = scmp.lt.s32.totalorder %s20, 1
      %s310 = scalar_select %p309, %s20, 1
      %s311 = scalar_lea.vmem %s2, %s310
      %p312 = scmp.lt.s32.totalorder %s20, 1
      %s313 = scalar_select %p312, %s20, 1
      %s314 = smul.addr %s313, 144
      %s315 = smul.addr %s314, 4
      %s316 = scalar_lea.vmem %s3, %s315
      %p317 = scmp.lt.s32.totalorder %s20, 1
      %s318 = scalar_select %p317, %s20, 1
      %s319 = scalar_lea.vmem %s4, %s318
      %s320 = smul.u32 %s20, 2
      %s321 = sadd.s32 %s320, %s21
      %p322 = scmp.lt.s32.totalorder %s321, 3
      %s323 = scalar_select %p322, %s321, 3
      %s324 = smul.addr %s323, 32
      %s325 = smul.addr %s324, 8
      %s326 = scalar_lea.vmem %s5, %s325
      %s327 = smul.u32 %s20, 2
      %s328 = sadd.s32 %s327, %s21
      %v330 = vld [vmem:[%s301] sm:$0xf]
      %v331 = vld [vmem:[%s301 + $0x4] sm:$0xf]
      %v332 = vld [vmem:[%s301 + $0xc] sm:$0xf]
      %v333 = vld [vmem:[%s301 + $0x10] sm:$0xf]
      %v334 = vld [vmem:[%s301 + $0x18] sm:$0xf]
      %v335 = vld [vmem:[%s301 + $0x1c] sm:$0xf]
      %v336 = vld [vmem:[%s301 + $0x24] sm:$0xf]
      %v337 = vld [vmem:[%s301 + $0x28] sm:$0xf]
      %v338 = vld [vmem:[%s301 + $0x30] sm:$0xf]
      %v339 = vld [vmem:[%s301 + $0x34] sm:$0xf]
      %v340 = vld [vmem:[%s301 + $0x3c] sm:$0xf]
      %v341 = vld [vmem:[%s301 + $0x40] sm:$0xf]
      %v342 = vld [vmem:[%s301 + $0x48] sm:$0xf]
      %v343 = vld [vmem:[%s301 + $0x4c] sm:$0xf]
      %v344 = vld [vmem:[%s301 + $0x54] sm:$0xf]
      %v345 = vld [vmem:[%s301 + $0x58] sm:$0xf]
      %v346 = vld [vmem:[%s301 + $0x60] sm:$0xf]
      %v347 = vld [vmem:[%s301 + $0x64] sm:$0xf]
      %v348 = vld [vmem:[%s301 + $0x6c] sm:$0xf]
      %v349 = vld [vmem:[%s301 + $0x70] sm:$0xf]
      %v350 = vld [vmem:[%s301 + $0x78] sm:$0xf]
      %v351 = vld [vmem:[%s301 + $0x7c] sm:$0xf]
      %v352 = vld [vmem:[%s301 + $0x84] sm:$0xf]
      %v353 = vld [vmem:[%s301 + $0x88] sm:$0xf]
      %v354 = vld [vmem:[%s301 + $0x90] sm:$0xf]
      %v355 = vld [vmem:[%s301 + $0x94] sm:$0xf]
      %v356 = vld [vmem:[%s301 + $0x9c] sm:$0xf]
      %v357 = vld [vmem:[%s301 + $0xa0] sm:$0xf]
      %v358 = vld [vmem:[%s301 + $0xa8] sm:$0xf]
      %v359 = vld [vmem:[%s301 + $0xac] sm:$0xf]
      %v360 = vld [vmem:[%s301 + $0xb4] sm:$0xf]
      %v361 = vld [vmem:[%s301 + $0xb8] sm:$0xf]
      %v362 = vld [vmem:[%s301 + $0xc0] sm:$0xf]
      %v363 = vld [vmem:[%s301 + $0xc4] sm:$0xf]
      %v364 = vld [vmem:[%s301 + $0xcc] sm:$0xf]
      %v365 = vld [vmem:[%s301 + $0xd0] sm:$0xf]
      %v366 = vld [vmem:[%s301 + $0x8] sm:$0x1]
      %v367 = vld [vmem:[%s301 + $0x14] sm:$0x1]
      %v368 = vld [vmem:[%s301 + $0x20] sm:$0x1]
      %v369 = vld [vmem:[%s301 + $0x2c] sm:$0x1]
      %v370 = vld [vmem:[%s301 + $0x38] sm:$0x1]
      %v371 = vld [vmem:[%s301 + $0x44] sm:$0x1]
      %v372 = vld [vmem:[%s301 + $0x50] sm:$0x1]
      %v373 = vld [vmem:[%s301 + $0x5c] sm:$0x1]
      %v374 = vld [vmem:[%s301 + $0x68] sm:$0x1]
      %v375 = vld [vmem:[%s301 + $0x74] sm:$0x1]
      %v376 = vld [vmem:[%s301 + $0x80] sm:$0x1]
      %v377 = vld [vmem:[%s301 + $0x8c] sm:$0x1]
      %v378 = vld [vmem:[%s301 + $0x98] sm:$0x1]
      %v379 = vld [vmem:[%s301 + $0xa4] sm:$0x1]
      %v380 = vld [vmem:[%s301 + $0xb0] sm:$0x1]
      %v381 = vld [vmem:[%s301 + $0xbc] sm:$0x1]
      %v382 = vld [vmem:[%s301 + $0xc8] sm:$0x1]
      %v383 = vld [vmem:[%s301 + $0xd4] sm:$0x1]
      %v384 = vld [vmem:[%s301] sm:$0xe]
      %v385 = vld [vmem:[%s301 + $0xc] sm:$0xe]
      %v386 = vld [vmem:[%s301 + $0x18] sm:$0xe]
      %v387 = vld [vmem:[%s301 + $0x24] sm:$0xe]
      %v388 = vld [vmem:[%s301 + $0x30] sm:$0xe]
      %v389 = vld [vmem:[%s301 + $0x3c] sm:$0xe]
      %v390 = vld [vmem:[%s301 + $0x48] sm:$0xe]
      %v391 = vld [vmem:[%s301 + $0x54] sm:$0xe]
      %v392 = vld [vmem:[%s301 + $0x60] sm:$0xe]
      %v393 = vld [vmem:[%s301 + $0x6c] sm:$0xe]
      %v394 = vld [vmem:[%s301 + $0x78] sm:$0xe]
      %v395 = vld [vmem:[%s301 + $0x84] sm:$0xe]
      %v396 = vld [vmem:[%s301 + $0x90] sm:$0xe]
      %v397 = vld [vmem:[%s301 + $0x9c] sm:$0xe]
      %v398 = vld [vmem:[%s301 + $0xa8] sm:$0xe]
      %v399 = vld [vmem:[%s301 + $0xb4] sm:$0xe]
      %v400 = vld [vmem:[%s301 + $0xc0] sm:$0xe]
      %v401 = vld [vmem:[%s301 + $0xcc] sm:$0xe]
      %v438 = vunpack.c.l.b16 %v330
      %v439 = vunpack.c.l.b16 %v331
      %v440 = vunpack.c.l.b16 %v332
      %v441 = vunpack.c.l.b16 %v333
      %v442 = vunpack.c.l.b16 %v334
      %v443 = vunpack.c.l.b16 %v335
      %v444 = vunpack.c.l.b16 %v336
      %v445 = vunpack.c.l.b16 %v337
      %v446 = vunpack.c.l.b16 %v338
      %v447 = vunpack.c.l.b16 %v339
      %v448 = vunpack.c.l.b16 %v340
      %v449 = vunpack.c.l.b16 %v341
      %v450 = vunpack.c.l.b16 %v342
      %v451 = vunpack.c.l.b16 %v343
      %v452 = vunpack.c.l.b16 %v344
      %v453 = vunpack.c.l.b16 %v345
      %v454 = vunpack.c.l.b16 %v346
      %v455 = vunpack.c.l.b16 %v347
      %v456 = vunpack.c.l.b16 %v348
      %v457 = vunpack.c.l.b16 %v349
      %v458 = vunpack.c.l.b16 %v350
      %v459 = vunpack.c.l.b16 %v351
      %v460 = vunpack.c.l.b16 %v352
      %v461 = vunpack.c.l.b16 %v353
      %v462 = vunpack.c.l.b16 %v354
      %v463 = vunpack.c.l.b16 %v355
      %v464 = vunpack.c.l.b16 %v356
      %v465 = vunpack.c.l.b16 %v357
      %v466 = vunpack.c.l.b16 %v358
      %v467 = vunpack.c.l.b16 %v359
      %v468 = vunpack.c.l.b16 %v360
      %v469 = vunpack.c.l.b16 %v361
      %v470 = vunpack.c.l.b16 %v362
      %v471 = vunpack.c.l.b16 %v363
      %v472 = vunpack.c.l.b16 %v364
      %v473 = vunpack.c.l.b16 %v365
      %v474 = vpack.c.b16 %v439, %v438
      %v475 = vpack.c.b16 %v441, %v440
      %v476 = vpack.c.b16 %v443, %v442
      %v477 = vpack.c.b16 %v445, %v444
      %v478 = vpack.c.b16 %v447, %v446
      %v479 = vpack.c.b16 %v449, %v448
      %v480 = vpack.c.b16 %v451, %v450
      %v481 = vpack.c.b16 %v453, %v452
      %v482 = vpack.c.b16 %v455, %v454
      %v483 = vpack.c.b16 %v457, %v456
      %v484 = vpack.c.b16 %v459, %v458
      %v485 = vpack.c.b16 %v461, %v460
      %v486 = vpack.c.b16 %v463, %v462
      %v487 = vpack.c.b16 %v465, %v464
      %v488 = vpack.c.b16 %v467, %v466
      %v489 = vpack.c.b16 %v469, %v468
      %v490 = vpack.c.b16 %v471, %v470
      %v491 = vpack.c.b16 %v473, %v472
      %v528 = vunpack.c.l.b16 %v366
      %v529 = vunpack.c.l.b16 %v367
      %v530 = vunpack.c.l.b16 %v368
      %v531 = vunpack.c.l.b16 %v369
      %v532 = vunpack.c.l.b16 %v370
      %v533 = vunpack.c.l.b16 %v371
      %v534 = vunpack.c.l.b16 %v372
      %v535 = vunpack.c.l.b16 %v373
      %v536 = vunpack.c.l.b16 %v374
      %v537 = vunpack.c.l.b16 %v375
      %v538 = vunpack.c.l.b16 %v376
      %v539 = vunpack.c.l.b16 %v377
      %v540 = vunpack.c.l.b16 %v378
      %v541 = vunpack.c.l.b16 %v379
      %v542 = vunpack.c.l.b16 %v380
      %v543 = vunpack.c.l.b16 %v381
      %v544 = vunpack.c.l.b16 %v382
      %v545 = vunpack.c.l.b16 %v383
      %v546 = vpack.c.b16 %v528, %v528
      %v547 = vpack.c.b16 %v529, %v529
      %v548 = vpack.c.b16 %v530, %v530
      %v549 = vpack.c.b16 %v531, %v531
      %v550 = vpack.c.b16 %v532, %v532
      %v551 = vpack.c.b16 %v533, %v533
      %v552 = vpack.c.b16 %v534, %v534
      %v553 = vpack.c.b16 %v535, %v535
      %v554 = vpack.c.b16 %v536, %v536
      %v555 = vpack.c.b16 %v537, %v537
      %v556 = vpack.c.b16 %v538, %v538
      %v557 = vpack.c.b16 %v539, %v539
      %v558 = vpack.c.b16 %v540, %v540
      %v559 = vpack.c.b16 %v541, %v541
      %v560 = vpack.c.b16 %v542, %v542
      %v561 = vpack.c.b16 %v543, %v543
      %v562 = vpack.c.b16 %v544, %v544
      %v563 = vpack.c.b16 %v545, %v545
      %vm564 = vsmask.f32 7424
      %v566 = vshrl.u32 %v474, 16
      %v568 = vshll.u32 %v474, 16
      %v570 = vrot.slane %v568, 1
      %v571 = vor.u32 %v566, %v570
      %v573 = vshll.u32 %v546, 16
      %v575 = vrot.slane %v573, 1
      %v576 = vsel %vm564, %v571, %v575
      %v578 = vshrl.u32 %v475, 16
      %v580 = vshll.u32 %v475, 16
      %v582 = vrot.slane %v580, 1
      %v583 = vor.u32 %v578, %v582
      %v585 = vshll.u32 %v547, 16
      %v587 = vrot.slane %v585, 1
      %v588 = vsel %vm564, %v583, %v587
      %v590 = vshrl.u32 %v476, 16
      %v592 = vshll.u32 %v476, 16
      %v594 = vrot.slane %v592, 1
      %v595 = vor.u32 %v590, %v594
      %v597 = vshll.u32 %v548, 16
      %v599 = vrot.slane %v597, 1
      %v600 = vsel %vm564, %v595, %v599
      %v602 = vshrl.u32 %v477, 16
      %v604 = vshll.u32 %v477, 16
      %v606 = vrot.slane %v604, 1
      %v607 = vor.u32 %v602, %v606
      %v609 = vshll.u32 %v549, 16
      %v611 = vrot.slane %v609, 1
      %v612 = vsel %vm564, %v607, %v611
      %v614 = vshrl.u32 %v478, 16
      %v616 = vshll.u32 %v478, 16
      %v618 = vrot.slane %v616, 1
      %v619 = vor.u32 %v614, %v618
      %v621 = vshll.u32 %v550, 16
      %v623 = vrot.slane %v621, 1
      %v624 = vsel %vm564, %v619, %v623
      %v626 = vshrl.u32 %v479, 16
      %v628 = vshll.u32 %v479, 16
      %v630 = vrot.slane %v628, 1
      %v631 = vor.u32 %v626, %v630
      %v633 = vshll.u32 %v551, 16
      %v635 = vrot.slane %v633, 1
      %v636 = vsel %vm564, %v631, %v635
      %v638 = vshrl.u32 %v480, 16
      %v640 = vshll.u32 %v480, 16
      %v642 = vrot.slane %v640, 1
      %v643 = vor.u32 %v638, %v642
      %v645 = vshll.u32 %v552, 16
      %v647 = vrot.slane %v645, 1
      %v648 = vsel %vm564, %v643, %v647
      %v650 = vshrl.u32 %v481, 16
      %v652 = vshll.u32 %v481, 16
      %v654 = vrot.slane %v652, 1
      %v655 = vor.u32 %v650, %v654
      %v657 = vshll.u32 %v553, 16
      %v659 = vrot.slane %v657, 1
      %v660 = vsel %vm564, %v655, %v659
      %v662 = vshrl.u32 %v482, 16
      %v664 = vshll.u32 %v482, 16
      %v666 = vrot.slane %v664, 1
      %v667 = vor.u32 %v662, %v666
      %v669 = vshll.u32 %v554, 16
      %v671 = vrot.slane %v669, 1
      %v672 = vsel %vm564, %v667, %v671
      %v674 = vshrl.u32 %v483, 16
      %v676 = vshll.u32 %v483, 16
      %v678 = vrot.slane %v676, 1
      %v679 = vor.u32 %v674, %v678
      %v681 = vshll.u32 %v555, 16
      %v683 = vrot.slane %v681, 1
      %v684 = vsel %vm564, %v679, %v683
      %v686 = vshrl.u32 %v484, 16
      %v688 = vshll.u32 %v484, 16
      %v690 = vrot.slane %v688, 1
      %v691 = vor.u32 %v686, %v690
      %v693 = vshll.u32 %v556, 16
      %v695 = vrot.slane %v693, 1
      %v696 = vsel %vm564, %v691, %v695
      %v698 = vshrl.u32 %v485, 16
      %v700 = vshll.u32 %v485, 16
      %v702 = vrot.slane %v700, 1
      %v703 = vor.u32 %v698, %v702
      %v705 = vshll.u32 %v557, 16
      %v707 = vrot.slane %v705, 1
      %v708 = vsel %vm564, %v703, %v707
      %v710 = vshrl.u32 %v486, 16
      %v712 = vshll.u32 %v486, 16
      %v714 = vrot.slane %v712, 1
      %v715 = vor.u32 %v710, %v714
      %v717 = vshll.u32 %v558, 16
      %v719 = vrot.slane %v717, 1
      %v720 = vsel %vm564, %v715, %v719
      %v722 = vshrl.u32 %v487, 16
      %v724 = vshll.u32 %v487, 16
      %v726 = vrot.slane %v724, 1
      %v727 = vor.u32 %v722, %v726
      %v729 = vshll.u32 %v559, 16
      %v731 = vrot.slane %v729, 1
      %v732 = vsel %vm564, %v727, %v731
      %v734 = vshrl.u32 %v488, 16
      %v736 = vshll.u32 %v488, 16
      %v738 = vrot.slane %v736, 1
      %v739 = vor.u32 %v734, %v738
      %v741 = vshll.u32 %v560, 16
      %v743 = vrot.slane %v741, 1
      %v744 = vsel %vm564, %v739, %v743
      %v746 = vshrl.u32 %v489, 16
      %v748 = vshll.u32 %v489, 16
      %v750 = vrot.slane %v748, 1
      %v751 = vor.u32 %v746, %v750
      %v753 = vshll.u32 %v561, 16
      %v755 = vrot.slane %v753, 1
      %v756 = vsel %vm564, %v751, %v755
      %v758 = vshrl.u32 %v490, 16
      %v760 = vshll.u32 %v490, 16
      %v762 = vrot.slane %v760, 1
      %v763 = vor.u32 %v758, %v762
      %v765 = vshll.u32 %v562, 16
      %v767 = vrot.slane %v765, 1
      %v768 = vsel %vm564, %v763, %v767
      %v770 = vshrl.u32 %v491, 16
      %v772 = vshll.u32 %v491, 16
      %v774 = vrot.slane %v772, 1
      %v775 = vor.u32 %v770, %v774
      %v777 = vshll.u32 %v563, 16
      %v779 = vrot.slane %v777, 1
      %v780 = vsel %vm564, %v775, %v779
      %v817 = vunpack.c.l.b16 %v384
      %v818 = vunpack.c.l.b16 %v385
      %v819 = vunpack.c.l.b16 %v386
      %v820 = vunpack.c.l.b16 %v387
      %v821 = vunpack.c.l.b16 %v388
      %v822 = vunpack.c.l.b16 %v389
      %v823 = vunpack.c.l.b16 %v390
      %v824 = vunpack.c.l.b16 %v391
      %v825 = vunpack.c.l.b16 %v392
      %v826 = vunpack.c.l.b16 %v393
      %v827 = vunpack.c.l.b16 %v394
      %v828 = vunpack.c.l.b16 %v395
      %v829 = vunpack.c.l.b16 %v396
      %v830 = vunpack.c.l.b16 %v397
      %v831 = vunpack.c.l.b16 %v398
      %v832 = vunpack.c.l.b16 %v399
      %v833 = vunpack.c.l.b16 %v400
      %v834 = vunpack.c.l.b16 %v401
      %v835 = vpack.c.b16 %v439, %v817
      %v836 = vpack.c.b16 %v441, %v818
      %v837 = vpack.c.b16 %v443, %v819
      %v838 = vpack.c.b16 %v445, %v820
      %v839 = vpack.c.b16 %v447, %v821
      %v840 = vpack.c.b16 %v449, %v822
      %v841 = vpack.c.b16 %v451, %v823
      %v842 = vpack.c.b16 %v453, %v824
      %v843 = vpack.c.b16 %v455, %v825
      %v844 = vpack.c.b16 %v457, %v826
      %v845 = vpack.c.b16 %v459, %v827
      %v846 = vpack.c.b16 %v461, %v828
      %v847 = vpack.c.b16 %v463, %v829
      %v848 = vpack.c.b16 %v465, %v830
      %v849 = vpack.c.b16 %v467, %v831
      %v850 = vpack.c.b16 %v469, %v832
      %v851 = vpack.c.b16 %v471, %v833
      %v852 = vpack.c.b16 %v473, %v834
      %vm853 = vcmask 1046528
      %v854 = vrot.slane %v835, 1
      %v855 = vrot.slane %v546, 1
      %v856 = vsel %vm853, %v854, %v855
      %v857 = vrot.slane %v836, 1
      %v858 = vrot.slane %v547, 1
      %v859 = vsel %vm853, %v857, %v858
      %v860 = vrot.slane %v837, 1
      %v861 = vrot.slane %v548, 1
      %v862 = vsel %vm853, %v860, %v861
      %v863 = vrot.slane %v838, 1
      %v864 = vrot.slane %v549, 1
      %v865 = vsel %vm853, %v863, %v864
      %v866 = vrot.slane %v839, 1
      %v867 = vrot.slane %v550, 1
      %v868 = vsel %vm853, %v866, %v867
      %v869 = vrot.slane %v840, 1
      %v870 = vrot.slane %v551, 1
      %v871 = vsel %vm853, %v869, %v870
      %v872 = vrot.slane %v841, 1
      %v873 = vrot.slane %v552, 1
      %v874 = vsel %vm853, %v872, %v873
      %v875 = vrot.slane %v842, 1
      %v876 = vrot.slane %v553, 1
      %v877 = vsel %vm853, %v875, %v876
      %v878 = vrot.slane %v843, 1
      %v879 = vrot.slane %v554, 1
      %v880 = vsel %vm853, %v878, %v879
      %v881 = vrot.slane %v844, 1
      %v882 = vrot.slane %v555, 1
      %v883 = vsel %vm853, %v881, %v882
      %v884 = vrot.slane %v845, 1
      %v885 = vrot.slane %v556, 1
      %v886 = vsel %vm853, %v884, %v885
      %v887 = vrot.slane %v846, 1
      %v888 = vrot.slane %v557, 1
      %v889 = vsel %vm853, %v887, %v888
      %v890 = vrot.slane %v847, 1
      %v891 = vrot.slane %v558, 1
      %v892 = vsel %vm853, %v890, %v891
      %v893 = vrot.slane %v848, 1
      %v894 = vrot.slane %v559, 1
      %v895 = vsel %vm853, %v893, %v894
      %v896 = vrot.slane %v849, 1
      %v897 = vrot.slane %v560, 1
      %v898 = vsel %vm853, %v896, %v897
      %v899 = vrot.slane %v850, 1
      %v900 = vrot.slane %v561, 1
      %v901 = vsel %vm853, %v899, %v900
      %v902 = vrot.slane %v851, 1
      %v903 = vrot.slane %v562, 1
      %v904 = vsel %vm853, %v902, %v903
      %v905 = vrot.slane %v852, 1
      %v906 = vrot.slane %v563, 1
      %v907 = vsel %vm853, %v905, %v906
      %v926 = vld [vmem:[%s308] sm:$0xf]
      %v927 = vld [vmem:[%s308 + $0x4] sm:$0xf]
      %v928 = vld [vmem:[%s308 + $0x8] sm:$0xf]
      %v929 = vld [vmem:[%s308 + $0xc] sm:$0xf]
      %v930 = vld [vmem:[%s308 + $0x10] sm:$0xf]
      %v931 = vld [vmem:[%s308 + $0x14] sm:$0xf]
      %v932 = vld [vmem:[%s308 + $0x18] sm:$0xf]
      %v933 = vld [vmem:[%s308 + $0x1c] sm:$0xf]
      %v934 = vld [vmem:[%s308 + $0x20] sm:$0xf]
      %v935 = vld [vmem:[%s308 + $0x24] sm:$0xf]
      %v936 = vld [vmem:[%s308 + $0x28] sm:$0xf]
      %v937 = vld [vmem:[%s308 + $0x2c] sm:$0xf]
      %v938 = vld [vmem:[%s308 + $0x30] sm:$0xf]
      %v939 = vld [vmem:[%s308 + $0x34] sm:$0xf]
      %v940 = vld [vmem:[%s308 + $0x38] sm:$0xf]
      %v941 = vld [vmem:[%s308 + $0x3c] sm:$0xf]
      %v942 = vld [vmem:[%s308 + $0x40] sm:$0xf]
      %v943 = vld [vmem:[%s308 + $0x44] sm:$0xf]
      %v944 = vld [vmem:[%s308 + $0x48] sm:$0xf]
      %v945 = vld [vmem:[%s308 + $0x4c] sm:$0xf]
      %v946 = vld [vmem:[%s308 + $0x50] sm:$0xf]
      %v947 = vld [vmem:[%s308 + $0x54] sm:$0xf]
      %v948 = vld [vmem:[%s308 + $0x58] sm:$0xf]
      %v949 = vld [vmem:[%s308 + $0x5c] sm:$0xf]
      %v950 = vld [vmem:[%s308 + $0x60] sm:$0xf]
      %v951 = vld [vmem:[%s308 + $0x64] sm:$0xf]
      %v952 = vld [vmem:[%s308 + $0x68] sm:$0xf]
      %v953 = vld [vmem:[%s308 + $0x6c] sm:$0xf]
      %v954 = vld [vmem:[%s308 + $0x70] sm:$0xf]
      %v955 = vld [vmem:[%s308 + $0x74] sm:$0xf]
      %v956 = vld [vmem:[%s308 + $0x78] sm:$0xf]
      %v957 = vld [vmem:[%s308 + $0x7c] sm:$0xf]
      %v958 = vld [vmem:[%s308 + $0x80] sm:$0xf]
      %v959 = vld [vmem:[%s308 + $0x84] sm:$0xf]
      %v960 = vld [vmem:[%s308 + $0x88] sm:$0xf]
      %v961 = vld [vmem:[%s308 + $0x8c] sm:$0xf]
      %v962 = vld [vmem:[%s308 + $0x90] sm:$0xf]
      %v963 = vld [vmem:[%s308 + $0x94] sm:$0xf]
      %v964 = vld [vmem:[%s308 + $0x98] sm:$0xf]
      %v965 = vld [vmem:[%s308 + $0x9c] sm:$0xf]
      %v966 = vld [vmem:[%s308 + $0xa0] sm:$0xf]
      %v967 = vld [vmem:[%s308 + $0xa4] sm:$0xf]
      %v968 = vld [vmem:[%s308 + $0xa8] sm:$0xf]
      %v969 = vld [vmem:[%s308 + $0xac] sm:$0xf]
      %v970 = vld [vmem:[%s308 + $0xb0] sm:$0xf]
      %v971 = vld [vmem:[%s308 + $0xb4] sm:$0xf]
      %v972 = vld [vmem:[%s308 + $0xb8] sm:$0xf]
      %v973 = vld [vmem:[%s308 + $0xbc] sm:$0xf]
      %s974 = scalar_lea.vmem %s308, 192
      %v975 = vld [vmem:[%s974] sm:$0xf]
      %v976 = vld [vmem:[%s974 + $0x4] sm:$0xf]
      %v977 = vld [vmem:[%s974 + $0x8] sm:$0xf]
      %v978 = vld [vmem:[%s974 + $0xc] sm:$0xf]
      %v979 = vld [vmem:[%s974 + $0x10] sm:$0xf]
      %v980 = vld [vmem:[%s974 + $0x14] sm:$0xf]
      %v981 = vld [vmem:[%s974 + $0x18] sm:$0xf]
      %v982 = vld [vmem:[%s974 + $0x1c] sm:$0xf]
      %v983 = vld [vmem:[%s974 + $0x20] sm:$0xf]
      %v984 = vld [vmem:[%s974 + $0x24] sm:$0xf]
      %v985 = vld [vmem:[%s974 + $0x28] sm:$0xf]
      %v986 = vld [vmem:[%s974 + $0x2c] sm:$0xf]
      %v987 = vld [vmem:[%s974 + $0x30] sm:$0xf]
      %v988 = vld [vmem:[%s974 + $0x34] sm:$0xf]
      %v989 = vld [vmem:[%s974 + $0x38] sm:$0xf]
      %v990 = vld [vmem:[%s974 + $0x3c] sm:$0xf]
      %v991 = vld [vmem:[%s974 + $0x40] sm:$0xf]
      %v992 = vld [vmem:[%s974 + $0x44] sm:$0xf]
      %v993 = vld [vmem:[%s974 + $0x48] sm:$0xf]
      %v994 = vld [vmem:[%s974 + $0x4c] sm:$0xf]
      %v995 = vld [vmem:[%s974 + $0x50] sm:$0xf]
      %v996 = vld [vmem:[%s974 + $0x54] sm:$0xf]
      %v997 = vld [vmem:[%s974 + $0x58] sm:$0xf]
      %v998 = vld [vmem:[%s974 + $0x5c] sm:$0xf]
      %v999 = vld [vmem:[%s974 + $0x60] sm:$0xf]
      %v1000 = vld [vmem:[%s974 + $0x64] sm:$0xf]
      %v1001 = vld [vmem:[%s974 + $0x68] sm:$0xf]
      %v1002 = vld [vmem:[%s974 + $0x6c] sm:$0xf]
      %v1003 = vld [vmem:[%s974 + $0x70] sm:$0xf]
      %v1004 = vld [vmem:[%s974 + $0x74] sm:$0xf]
      %v1005 = vld [vmem:[%s974 + $0x78] sm:$0xf]
      %v1006 = vld [vmem:[%s974 + $0x7c] sm:$0xf]
      %v1007 = vld [vmem:[%s974 + $0x80] sm:$0xf]
      %v1008 = vld [vmem:[%s974 + $0x84] sm:$0xf]
      %v1009 = vld [vmem:[%s974 + $0x88] sm:$0xf]
      %v1010 = vld [vmem:[%s974 + $0x8c] sm:$0xf]
      %v1011 = vld [vmem:[%s974 + $0x90] sm:$0xf]
      %v1012 = vld [vmem:[%s974 + $0x94] sm:$0xf]
      %v1013 = vld [vmem:[%s974 + $0x98] sm:$0xf]
      %v1014 = vld [vmem:[%s974 + $0x9c] sm:$0xf]
      %v1015 = vld [vmem:[%s974 + $0xa0] sm:$0xf]
      %v1016 = vld [vmem:[%s974 + $0xa4] sm:$0xf]
      %v1017 = vld [vmem:[%s974 + $0xa8] sm:$0xf]
      %v1018 = vld [vmem:[%s974 + $0xac] sm:$0xf]
      %v1019 = vld [vmem:[%s974 + $0xb0] sm:$0xf]
      %v1020 = vld [vmem:[%s974 + $0xb4] sm:$0xf]
      %v1021 = vld [vmem:[%s974 + $0xb8] sm:$0xf]
      %v1022 = vld [vmem:[%s974 + $0xbc] sm:$0xf]
      %v1071 = vunpack.c.l.b16 %v975
      %v1072 = vunpack.c.l.b16 %v976
      %v1073 = vunpack.c.l.b16 %v977
      %v1074 = vunpack.c.l.b16 %v978
      %v1075 = vunpack.c.l.b16 %v979
      %v1076 = vunpack.c.l.b16 %v980
      %v1077 = vunpack.c.l.b16 %v981
      %v1078 = vunpack.c.l.b16 %v982
      %v1079 = vunpack.c.l.b16 %v983
      %v1080 = vunpack.c.l.b16 %v984
      %v1081 = vunpack.c.l.b16 %v985
      %v1082 = vunpack.c.l.b16 %v986
      %v1083 = vunpack.c.l.b16 %v987
      %v1084 = vunpack.c.l.b16 %v988
      %v1085 = vunpack.c.l.b16 %v989
      %v1086 = vunpack.c.l.b16 %v990
      %v1087 = vunpack.c.l.b16 %v991
      %v1088 = vunpack.c.l.b16 %v992
      %v1089 = vunpack.c.l.b16 %v993
      %v1090 = vunpack.c.l.b16 %v994
      %v1091 = vunpack.c.l.b16 %v995
      %v1092 = vunpack.c.l.b16 %v996
      %v1093 = vunpack.c.l.b16 %v997
      %v1094 = vunpack.c.l.b16 %v998
      %v1095 = vunpack.c.l.b16 %v999
      %v1096 = vunpack.c.l.b16 %v1000
      %v1097 = vunpack.c.l.b16 %v1001
      %v1098 = vunpack.c.l.b16 %v1002
      %v1099 = vunpack.c.l.b16 %v1003
      %v1100 = vunpack.c.l.b16 %v1004
      %v1101 = vunpack.c.l.b16 %v1005
      %v1102 = vunpack.c.l.b16 %v1006
      %v1103 = vunpack.c.l.b16 %v1007
      %v1104 = vunpack.c.l.b16 %v1008
      %v1105 = vunpack.c.l.b16 %v1009
      %v1106 = vunpack.c.l.b16 %v1010
      %v1107 = vunpack.c.l.b16 %v1011
      %v1108 = vunpack.c.l.b16 %v1012
      %v1109 = vunpack.c.l.b16 %v1013
      %v1110 = vunpack.c.l.b16 %v1014
      %v1111 = vunpack.c.l.b16 %v1015
      %v1112 = vunpack.c.l.b16 %v1016
      %v1113 = vunpack.c.l.b16 %v1017
      %v1114 = vunpack.c.l.b16 %v1018
      %v1115 = vunpack.c.l.b16 %v1019
      %v1116 = vunpack.c.l.b16 %v1020
      %v1117 = vunpack.c.l.b16 %v1021
      %v1118 = vunpack.c.l.b16 %v1022
      %v1119 = vpack.c.b16 %v1072, %v1071
      %v1120 = vpack.c.b16 %v1074, %v1073
      %v1121 = vpack.c.b16 %v1076, %v1075
      %v1122 = vpack.c.b16 %v1078, %v1077
      %v1123 = vpack.c.b16 %v1080, %v1079
      %v1124 = vpack.c.b16 %v1082, %v1081
      %v1125 = vpack.c.b16 %v1084, %v1083
      %v1126 = vpack.c.b16 %v1086, %v1085
      %v1127 = vpack.c.b16 %v1088, %v1087
      %v1128 = vpack.c.b16 %v1090, %v1089
      %v1129 = vpack.c.b16 %v1092, %v1091
      %v1130 = vpack.c.b16 %v1094, %v1093
      %v1131 = vpack.c.b16 %v1096, %v1095
      %v1132 = vpack.c.b16 %v1098, %v1097
      %v1133 = vpack.c.b16 %v1100, %v1099
      %v1134 = vpack.c.b16 %v1102, %v1101
      %v1135 = vpack.c.b16 %v1104, %v1103
      %v1136 = vpack.c.b16 %v1106, %v1105
      %v1137 = vpack.c.b16 %v1108, %v1107
      %v1138 = vpack.c.b16 %v1110, %v1109
      %v1139 = vpack.c.b16 %v1112, %v1111
      %v1140 = vpack.c.b16 %v1114, %v1113
      %v1141 = vpack.c.b16 %v1116, %v1115
      %v1142 = vpack.c.b16 %v1118, %v1117
      %1167 = vmatprep.subr.bf16.mxu0 0
      %1168 = vmatpush1.bf16.msra.mxu0 %v1119
      %1169 = vmatprep.subr.bf16.mxu0 0
      %1170 = vmatpush1.bf16.msra.mxu0 %v1120
      %1171 = vmatprep.subr.bf16.mxu0 0
      %1172 = vmatpush1.bf16.msra.mxu0 %v1121
      %1173 = vmatprep.subr.bf16.mxu0 0
      %1174 = vmatpush1.bf16.msra.mxu0 %v1122
      %1175 = vmatprep.subr.bf16.mxu0 0
      %1176 = vmatpush1.bf16.msra.mxu0 %v1123
      %1177 = vmatprep.subr.bf16.mxu0 0
      %1178 = vmatpush1.bf16.msra.mxu0 %v1124
      %1179 = vmatprep.subr.bf16.mxu0 0
      %1180 = vmatpush1.bf16.msra.mxu0 %v1125
      %1181 = vmatprep.subr.bf16.mxu0 0
      %1182 = vmatpush1.bf16.msra.mxu0 %v1126
      %1183 = vmatprep.subr.bf16.mxu0 0
      %1184 = vmatpush1.bf16.msra.mxu0 %v1127
      %1185 = vmatprep.subr.bf16.mxu0 0
      %1186 = vmatpush1.bf16.msra.mxu0 %v1128
      %1187 = vmatprep.subr.bf16.mxu0 0
      %1188 = vmatpush1.bf16.msra.mxu0 %v1129
      %1189 = vmatprep.subr.bf16.mxu0 0
      %1190 = vmatpush1.bf16.msra.mxu0 %v1130
      %1191 = vmatprep.subr.bf16.mxu0 0
      %1192 = vmatpush1.bf16.msra.mxu0 %v1131
      %1193 = vmatprep.subr.bf16.mxu0 0
      %1194 = vmatpush1.bf16.msra.mxu0 %v1132
      %1195 = vmatprep.subr.bf16.mxu0 0
      %1196 = vmatpush1.bf16.msra.mxu0 %v1133
      %1197 = vmatprep.subr.bf16.mxu0 0
      %1198 = vmatpush1.bf16.msra.mxu0 %v1134
      %1199 = vmatprep.mubr.bf16.mxu0 %v588
      %1200 = vmatmul.mubr.bf16.gmra.mrb[0].mxu0 %v475
      %v1201 = vpop.f32.mrb[0].mxu0
      %v1202 = vadd.f32 0.0, %v1201
      %v1203 = vpop.f32.mrb[0].mxu0
      %v1204 = vpop.f32.mrb[0].mxu0
      %v1205 = vadd.f32 0.0, %v1204
      %v1206 = vpop.f32.mrb[0].mxu0
      %1207 = vmatprep.mubr.bf16.mxu0 %v600
      %1208 = vmatmul.mubr.bf16.gmra.mrb[0].mxu0 %v476
      %v1209 = vpop.f32.mrb[0].mxu0
      %v1210 = vadd.f32 0.0, %v1209
      %v1211 = vpop.f32.mrb[0].mxu0
      %v1212 = vpop.f32.mrb[0].mxu0
      %v1213 = vadd.f32 0.0, %v1212
      %v1214 = vpop.f32.mrb[0].mxu0
      %1215 = vmatprep.mubr.bf16.mxu0 %v612
      %1216 = vmatmul.mubr.bf16.gmra.mrb[0].mxu0 %v477
      %v1217 = vpop.f32.mrb[0].mxu0
      %v1218 = vadd.f32 0.0, %v1217
      %v1219 = vpop.f32.mrb[0].mxu0
      %v1220 = vpop.f32.mrb[0].mxu0
      %v1221 = vadd.f32 0.0, %v1220
      %v1222 = vpop.f32.mrb[0].mxu0
      %1223 = vmatprep.mubr.bf16.mxu0 %v624
      %1224 = vmatmul.mubr.bf16.gmra.mrb[0].mxu0 %v478
      %v1225 = vpop.f32.mrb[0].mxu0
      %v1226 = vadd.f32 0.0, %v1225
      %v1227 = vpop.f32.mrb[0].mxu0
      %v1228 = vpop.f32.mrb[0].mxu0
      %v1229 = vadd.f32 0.0, %v1228
      %v1230 = vpop.f32.mrb[0].mxu0
      %1231 = vmatprep.mubr.bf16.mxu0 %v636
      %1232 = vmatmul.mubr.bf16.gmra.mrb[0].mxu0 %v479
      %v1233 = vpop.f32.mrb[0].mxu0
      %v1234 = vadd.f32 0.0, %v1233
      %v1235 = vpop.f32.mrb[0].mxu0
      %v1236 = vpop.f32.mrb[0].mxu0
      %v1237 = vadd.f32 0.0, %v1236
      %v1238 = vpop.f32.mrb[0].mxu0
      %1239 = vmatprep.mubr.bf16.mxu0 %v648
      %1240 = vmatmul.mubr.bf16.gmra.mrb[0].mxu0 %v480
      %v1241 = vpop.f32.mrb[0].mxu0
      %v1242 = vadd.f32 0.0, %v1241
      %v1243 = vpop.f32.mrb[0].mxu0
      %v1244 = vpop.f32.mrb[0].mxu0
      %v1245 = vadd.f32 0.0, %v1244
      %v1246 = vpop.f32.mrb[0].mxu0
      %1247 = vmatprep.mubr.bf16.mxu0 %v660
      %1248 = vmatmul.mubr.bf16.gmra.mrb[0].mxu0 %v481
      %v1249 = vpop.f32.mrb[0].mxu0
      %v1250 = vadd.f32 0.0, %v1249
      %v1251 = vpop.f32.mrb[0].mxu0
      %v1252 = vpop.f32.mrb[0].mxu0
      %v1253 = vadd.f32 0.0, %v1252
      %v1254 = vpop.f32.mrb[0].mxu0
      %1255 = vmatprep.mubr.bf16.mxu0 %v672
      %1256 = vmatmul.mubr.bf16.gmra.mrb[0].mxu0 %v482
      %v1257 = vpop.f32.mrb[0].mxu0
      %v1258 = vadd.f32 0.0, %v1257
      %v1259 = vpop.f32.mrb[0].mxu0
      %v1260 = vpop.f32.mrb[0].mxu0
      %v1261 = vadd.f32 0.0, %v1260
      %v1262 = vpop.f32.mrb[0].mxu0
      %1263 = vmatprep.mubr.bf16.mxu0 %v684
      %1264 = vmatmul.mubr.bf16.gmra.mrb[0].mxu0 %v483
      %v1265 = vpop.f32.mrb[0].mxu0
      %v1266 = vadd.f32 0.0, %v1265
      %v1267 = vpop.f32.mrb[0].mxu0
      %v1268 = vpop.f32.mrb[0].mxu0
      %v1269 = vadd.f32 0.0, %v1268
      %v1270 = vpop.f32.mrb[0].mxu0
      %1271 = vmatprep.mubr.bf16.mxu0 %v696
      %1272 = vmatmul.mubr.bf16.gmra.mrb[0].mxu0 %v484
      %v1273 = vpop.f32.mrb[0].mxu0
      %v1274 = vadd.f32 0.0, %v1273
      %v1275 = vpop.f32.mrb[0].mxu0
      %v1276 = vpop.f32.mrb[0].mxu0
      %v1277 = vadd.f32 0.0, %v1276
      %v1278 = vpop.f32.mrb[0].mxu0
      %1279 = vmatprep.mubr.bf16.mxu0 %v708
      %1280 = vmatmul.mubr.bf16.gmra.mrb[0].mxu0 %v485
      %v1281 = vpop.f32.mrb[0].mxu0
      %v1282 = vadd.f32 0.0, %v1281
      %v1283 = vpop.f32.mrb[0].mxu0
      %v1284 = vpop.f32.mrb[0].mxu0
      %v1285 = vadd.f32 0.0, %v1284
      %v1286 = vpop.f32.mrb[0].mxu0
      %1287 = vmatprep.mubr.bf16.mxu0 %v720
      %1288 = vmatmul.mubr.bf16.gmra.mrb[0].mxu0 %v486
      %v1289 = vpop.f32.mrb[0].mxu0
      %v1290 = vadd.f32 0.0, %v1289
      %v1291 = vpop.f32.mrb[0].mxu0
      %v1292 = vpop.f32.mrb[0].mxu0
      %v1293 = vadd.f32 0.0, %v1292
      %v1294 = vpop.f32.mrb[0].mxu0
      %1295 = vmatprep.mubr.bf16.mxu0 %v732
      %1296 = vmatmul.mubr.bf16.gmra.mrb[0].mxu0 %v487
      %v1297 = vpop.f32.mrb[0].mxu0
      %v1298 = vadd.f32 0.0, %v1297
      %v1299 = vpop.f32.mrb[0].mxu0
      %v1300 = vpop.f32.mrb[0].mxu0
      %v1301 = vadd.f32 0.0, %v1300
      %v1302 = vpop.f32.mrb[0].mxu0
      %1303 = vmatprep.mubr.bf16.mxu0 %v744
      %1304 = vmatmul.mubr.bf16.gmra.mrb[0].mxu0 %v488
      %v1305 = vpop.f32.mrb[0].mxu0
      %v1306 = vadd.f32 0.0, %v1305
      %v1307 = vpop.f32.mrb[0].mxu0
      %v1308 = vpop.f32.mrb[0].mxu0
      %v1309 = vadd.f32 0.0, %v1308
      %v1310 = vpop.f32.mrb[0].mxu0
      %1311 = vmatprep.mubr.bf16.mxu0 %v756
      %1312 = vmatmul.mubr.bf16.gmra.mrb[0].mxu0 %v489
      %v1313 = vpop.f32.mrb[0].mxu0
      %v1314 = vadd.f32 0.0, %v1313
      %v1315 = vpop.f32.mrb[0].mxu0
      %v1316 = vpop.f32.mrb[0].mxu0
      %v1317 = vadd.f32 0.0, %v1316
      %v1318 = vpop.f32.mrb[0].mxu0
      %1319 = vmatprep.mubr.bf16.mxu0 %v768
      %1320 = vmatmul.mubr.bf16.gmra.mrb[0].mxu0 %v490
      %v1321 = vpop.f32.mrb[0].mxu0
      %v1322 = vadd.f32 0.0, %v1321
      %v1323 = vpop.f32.mrb[0].mxu0
      %v1324 = vpop.f32.mrb[0].mxu0
      %v1325 = vadd.f32 0.0, %v1324
      %v1326 = vpop.f32.mrb[0].mxu0
      %1327 = vdwg.mxu0
      %1328 = vmatprep.subr.bf16.mxu0 0
      %1329 = vmatpush1.bf16.msra.mxu0 %v1135
      %1330 = vmatprep.subr.bf16.mxu0 0
      %1331 = vmatpush1.bf16.msra.mxu0 %v1136
      %1332 = vmatprep.subr.bf16.mxu0 0
      %1333 = vmatpush1.bf16.msra.mxu0 %v1137
      %1334 = vmatprep.subr.bf16.mxu0 0
      %1335 = vmatpush1.bf16.msra.mxu0 %v1138
      %1336 = vmatprep.subr.bf16.mxu0 0
      %1337 = vmatpush1.bf16.msra.mxu0 %v1139
      %1338 = vmatprep.subr.bf16.mxu0 0
      %1339 = vmatpush1.bf16.msra.mxu0 %v1140
      %1340 = vmatprep.subr.bf16.mxu0 0
      %1341 = vmatpush1.bf16.msra.mxu0 %v1141
      %1342 = vmatprep.subr.bf16.mxu0 0
      %1343 = vmatpush1.bf16.msra.mxu0 %v1142
      %1344 = vmatprep.subr.bf16.mxu0 0
      %1345 = vmatpush1.bf16.msra.mxu0 0
      %1346 = vmatprep.subr.bf16.mxu0 0
      %1347 = vmatpush1.bf16.msra.mxu0 0
      %1348 = vmatprep.subr.bf16.mxu0 0
      %1349 = vmatpush1.bf16.msra.mxu0 0
      %1350 = vmatprep.subr.bf16.mxu0 0
      %1351 = vmatpush1.bf16.msra.mxu0 0
      %1352 = vmatprep.subr.bf16.mxu0 0
      %1353 = vmatpush1.bf16.msra.mxu0 0
      %1354 = vmatprep.subr.bf16.mxu0 0
      %1355 = vmatpush1.bf16.msra.mxu0 0
      %1356 = vmatprep.subr.bf16.mxu0 0
      %1357 = vmatpush1.bf16.msra.mxu0 0
      %1358 = vmatprep.subr.bf16.mxu0 0
      %1359 = vmatpush1.bf16.msra.mxu0 0
      %1360 = vmatprep.mubr.bf16.mxu0 0
      %1361 = vmatmul.mubr.bf16.gmra.mrb[0].mxu0 %v859
      %v1362 = vpop.f32.mrb[0].mxu0
      %v1363 = vadd.f32 %v1202, %v1362
      %v1364 = vpop.f32.mrb[0].mxu0
      %v1365 = vpop.f32.mrb[0].mxu0
      %v1366 = vadd.f32 %v1205, %v1365
      %v1367 = vpop.f32.mrb[0].mxu0
      %1368 = vmatprep.mubr.bf16.mxu0 0
      %1369 = vmatmul.mubr.bf16.gmra.mrb[0].mxu0 %v862
      %v1370 = vpop.f32.mrb[0].mxu0
      %v1371 = vadd.f32 %v1210, %v1370
      %v1372 = vpop.f32.mrb[0].mxu0
      %v1373 = vpop.f32.mrb[0].mxu0
      %v1374 = vadd.f32 %v1213, %v1373
      %v1375 = vpop.f32.mrb[0].mxu0
      %1376 = vmatprep.mubr.bf16.mxu0 0
      %1377 = vmatmul.mubr.bf16.gmra.mrb[0].mxu0 %v865
      %v1378 = vpop.f32.mrb[0].mxu0
      %v1379 = vadd.f32 %v1218, %v1378
      %v1380 = vpop.f32.mrb[0].mxu0
      %v1381 = vpop.f32.mrb[0].mxu0
      %v1382 = vadd.f32 %v1221, %v1381
      %v1383 = vpop.f32.mrb[0].mxu0
      %1384 = vmatprep.mubr.bf16.mxu0 0
      %1385 = vmatmul.mubr.bf16.gmra.mrb[0].mxu0 %v868
      %v1386 = vpop.f32.mrb[0].mxu0
      %v1387 = vadd.f32 %v1226, %v1386
      %v1388 = vpop.f32.mrb[0].mxu0
      %v1389 = vpop.f32.mrb[0].mxu0
      %v1390 = vadd.f32 %v1229, %v1389
      %v1391 = vpop.f32.mrb[0].mxu0
      %1392 = vmatprep.mubr.bf16.mxu0 0
      %1393 = vmatmul.mubr.bf16.gmra.mrb[0].mxu0 %v871
      %v1394 = vpop.f32.mrb[0].mxu0
      %v1395 = vadd.f32 %v1234, %v1394
      %v1396 = vpop.f32.mrb[0].mxu0
      %v1397 = vpop.f32.mrb[0].mxu0
      %v1398 = vadd.f32 %v1237, %v1397
      %v1399 = vpop.f32.mrb[0].mxu0
      %1400 = vmatprep.mubr.bf16.mxu0 0
      %1401 = vmatmul.mubr.bf16.gmra.mrb[0].mxu0 %v874
      %v1402 = vpop.f32.mrb[0].mxu0
      %v1403 = vadd.f32 %v1242, %v1402
      %v1404 = vpop.f32.mrb[0].mxu0
      %v1405 = vpop.f32.mrb[0].mxu0
      %v1406 = vadd.f32 %v1245, %v1405
      %v1407 = vpop.f32.mrb[0].mxu0
      %1408 = vmatprep.mubr.bf16.mxu0 0
      %1409 = vmatmul.mubr.bf16.gmra.mrb[0].mxu0 %v877
      %v1410 = vpop.f32.mrb[0].mxu0
      %v1411 = vadd.f32 %v1250, %v1410
      %v1412 = vpop.f32.mrb[0].mxu0
      %v1413 = vpop.f32.mrb[0].mxu0
      %v1414 = vadd.f32 %v1253, %v1413
      %v1415 = vpop.f32.mrb[0].mxu0
      %1416 = vmatprep.mubr.bf16.mxu0 0
      %1417 = vmatmul.mubr.bf16.gmra.mrb[0].mxu0 %v880
      %v1418 = vpop.f32.mrb[0].mxu0
      %v1419 = vadd.f32 %v1258, %v1418
      %v1420 = vpop.f32.mrb[0].mxu0
      %v1421 = vpop.f32.mrb[0].mxu0
      %v1422 = vadd.f32 %v1261, %v1421
      %v1423 = vpop.f32.mrb[0].mxu0
      %1424 = vmatprep.mubr.bf16.mxu0 0
      %1425 = vmatmul.mubr.bf16.gmra.mrb[0].mxu0 %v883
      %v1426 = vpop.f32.mrb[0].mxu0
      %v1427 = vadd.f32 %v1266, %v1426
      %v1428 = vpop.f32.mrb[0].mxu0
      %v1429 = vpop.f32.mrb[0].mxu0
      %v1430 = vadd.f32 %v1269, %v1429
      %v1431 = vpop.f32.mrb[0].mxu0
      %1432 = vmatprep.mubr.bf16.mxu0 0
      %1433 = vmatmul.mubr.bf16.gmra.mrb[0].mxu0 %v886
      %v1434 = vpop.f32.mrb[0].mxu0
      %v1435 = vadd.f32 %v1274, %v1434
      %v1436 = vpop.f32.mrb[0].mxu0
      %v1437 = vpop.f32.mrb[0].mxu0
      %v1438 = vadd.f32 %v1277, %v1437
      %v1439 = vpop.f32.mrb[0].mxu0
      %1440 = vmatprep.mubr.bf16.mxu0 0
      %1441 = vmatmul.mubr.bf16.gmra.mrb[0].mxu0 %v889
      %v1442 = vpop.f32.mrb[0].mxu0
      %v1443 = vadd.f32 %v1282, %v1442
      %v1444 = vpop.f32.mrb[0].mxu0
      %v1445 = vpop.f32.mrb[0].mxu0
      %v1446 = vadd.f32 %v1285, %v1445
      %v1447 = vpop.f32.mrb[0].mxu0
      %1448 = vmatprep.mubr.bf16.mxu0 0
      %1449 = vmatmul.mubr.bf16.gmra.mrb[0].mxu0 %v892
      %v1450 = vpop.f32.mrb[0].mxu0
      %v1451 = vadd.f32 %v1290, %v1450
      %v1452 = vpop.f32.mrb[0].mxu0
      %v1453 = vpop.f32.mrb[0].mxu0
      %v1454 = vadd.f32 %v1293, %v1453
      %v1455 = vpop.f32.mrb[0].mxu0
      %1456 = vmatprep.mubr.bf16.mxu0 0
      %1457 = vmatmul.mubr.bf16.gmra.mrb[0].mxu0 %v895
      %v1458 = vpop.f32.mrb[0].mxu0
      %v1459 = vadd.f32 %v1298, %v1458
      %v1460 = vpop.f32.mrb[0].mxu0
      %v1461 = vpop.f32.mrb[0].mxu0
      %v1462 = vadd.f32 %v1301, %v1461
      %v1463 = vpop.f32.mrb[0].mxu0
      %1464 = vmatprep.mubr.bf16.mxu0 0
      %1465 = vmatmul.mubr.bf16.gmra.mrb[0].mxu0 %v898
      %v1466 = vpop.f32.mrb[0].mxu0
      %v1467 = vadd.f32 %v1306, %v1466
      %v1468 = vpop.f32.mrb[0].mxu0
      %v1469 = vpop.f32.mrb[0].mxu0
      %v1470 = vadd.f32 %v1309, %v1469
      %v1471 = vpop.f32.mrb[0].mxu0
      %1472 = vmatprep.mubr.bf16.mxu0 0
      %1473 = vmatmul.mubr.bf16.gmra.mrb[0].mxu0 %v901
      %v1474 = vpop.f32.mrb[0].mxu0
      %v1475 = vadd.f32 %v1314, %v1474
      %v1476 = vpop.f32.mrb[0].mxu0
      %v1477 = vpop.f32.mrb[0].mxu0
      %v1478 = vadd.f32 %v1317, %v1477
      %v1479 = vpop.f32.mrb[0].mxu0
      %1480 = vmatprep.mubr.bf16.mxu0 0
      %1481 = vmatmul.mubr.bf16.gmra.mrb[0].mxu0 %v904
      %v1482 = vpop.f32.mrb[0].mxu0
      %v1483 = vadd.f32 %v1322, %v1482
      %v1484 = vpop.f32.mrb[0].mxu0
      %v1485 = vpop.f32.mrb[0].mxu0
      %v1486 = vadd.f32 %v1325, %v1485
      %v1487 = vpop.f32.mrb[0].mxu0
      %1488 = vdwg.mxu0
      %v1537 = vunpack.c.l.b16 %v926
      %v1538 = vunpack.c.l.b16 %v927
      %v1539 = vunpack.c.l.b16 %v928
      %v1540 = vunpack.c.l.b16 %v929
      %v1541 = vunpack.c.l.b16 %v930
      %v1542 = vunpack.c.l.b16 %v931
      %v1543 = vunpack.c.l.b16 %v932
      %v1544 = vunpack.c.l.b16 %v933
      %v1545 = vunpack.c.l.b16 %v934
      %v1546 = vunpack.c.l.b16 %v935
      %v1547 = vunpack.c.l.b16 %v936
      %v1548 = vunpack.c.l.b16 %v937
      %v1549 = vunpack.c.l.b16 %v938
      %v1550 = vunpack.c.l.b16 %v939
      %v1551 = vunpack.c.l.b16 %v940
      %v1552 = vunpack.c.l.b16 %v941
      %v1553 = vunpack.c.l.b16 %v942
      %v1554 = vunpack.c.l.b16 %v943
      %v1555 = vunpack.c.l.b16 %v944
      %v1556 = vunpack.c.l.b16 %v945
      %v1557 = vunpack.c.l.b16 %v946
      %v1558 = vunpack.c.l.b16 %v947
      %v1559 = vunpack.c.l.b16 %v948
      %v1560 = vunpack.c.l.b16 %v949
      %v1561 = vunpack.c.l.b16 %v950
      %v1562 = vunpack.c.l.b16 %v951
      %v1563 = vunpack.c.l.b16 %v952
      %v1564 = vunpack.c.l.b16 %v953
      %v1565 = vunpack.c.l.b16 %v954
      %v1566 = vunpack.c.l.b16 %v955
      %v1567 = vunpack.c.l.b16 %v956
      %v1568 = vunpack.c.l.b16 %v957
      %v1569 = vunpack.c.l.b16 %v958
      %v1570 = vunpack.c.l.b16 %v959
      %v1571 = vunpack.c.l.b16 %v960
      %v1572 = vunpack.c.l.b16 %v961
      %v1573 = vunpack.c.l.b16 %v962
      %v1574 = vunpack.c.l.b16 %v963
      %v1575 = vunpack.c.l.b16 %v964
      %v1576 = vunpack.c.l.b16 %v965
      %v1577 = vunpack.c.l.b16 %v966
      %v1578 = vunpack.c.l.b16 %v967
      %v1579 = vunpack.c.l.b16 %v968
      %v1580 = vunpack.c.l.b16 %v969
      %v1581 = vunpack.c.l.b16 %v970
      %v1582 = vunpack.c.l.b16 %v971
      %v1583 = vunpack.c.l.b16 %v972
      %v1584 = vunpack.c.l.b16 %v973
      %v1585 = vpack.c.b16 %v1538, %v1537
      %v1586 = vpack.c.b16 %v1540, %v1539
      %v1587 = vpack.c.b16 %v1542, %v1541
      %v1588 = vpack.c.b16 %v1544, %v1543
      %v1589 = vpack.c.b16 %v1546, %v1545
      %v1590 = vpack.c.b16 %v1548, %v1547
      %v1591 = vpack.c.b16 %v1550, %v1549
      %v1592 = vpack.c.b16 %v1552, %v1551
      %v1593 = vpack.c.b16 %v1554, %v1553
      %v1594 = vpack.c.b16 %v1556, %v1555
      %v1595 = vpack.c.b16 %v1558, %v1557
      %v1596 = vpack.c.b16 %v1560, %v1559
      %v1597 = vpack.c.b16 %v1562, %v1561
      %v1598 = vpack.c.b16 %v1564, %v1563
      %v1599 = vpack.c.b16 %v1566, %v1565
      %v1600 = vpack.c.b16 %v1568, %v1567
      %v1601 = vpack.c.b16 %v1570, %v1569
      %v1602 = vpack.c.b16 %v1572, %v1571
      %v1603 = vpack.c.b16 %v1574, %v1573
      %v1604 = vpack.c.b16 %v1576, %v1575
      %v1605 = vpack.c.b16 %v1578, %v1577
      %v1606 = vpack.c.b16 %v1580, %v1579
      %v1607 = vpack.c.b16 %v1582, %v1581
      %v1608 = vpack.c.b16 %v1584, %v1583
      %1633 = vmatprep.subr.bf16.mxu0 0
      %1634 = vmatpush1.bf16.msra.mxu0 %v1585
      %1635 = vmatprep.subr.bf16.mxu0 0
      %1636 = vmatpush1.bf16.msra.mxu0 %v1586
      %1637 = vmatprep.subr.bf16.mxu0 0
      %1638 = vmatpush1.bf16.msra.mxu0 %v1587
      %1639 = vmatprep.subr.bf16.mxu0 0
      %1640 = vmatpush1.bf16.msra.mxu0 %v1588
      %1641 = vmatprep.subr.bf16.mxu0 0
      %1642 = vmatpush1.bf16.msra.mxu0 %v1589
      %1643 = vmatprep.subr.bf16.mxu0 0
      %1644 = vmatpush1.bf16.msra.mxu0 %v1590
      %1645 = vmatprep.subr.bf16.mxu0 0
      %1646 = vmatpush1.bf16.msra.mxu0 %v1591
      %1647 = vmatprep.subr.bf16.mxu0 0
      %1648 = vmatpush1.bf16.msra.mxu0 %v1592
      %1649 = vmatprep.subr.bf16.mxu0 0
      %1650 = vmatpush1.bf16.msra.mxu0 %v1593
      %1651 = vmatprep.subr.bf16.mxu0 0
      %1652 = vmatpush1.bf16.msra.mxu0 %v1594
      %1653 = vmatprep.subr.bf16.mxu0 0
      %1654 = vmatpush1.bf16.msra.mxu0 %v1595
      %1655 = vmatprep.subr.bf16.mxu0 0
      %1656 = vmatpush1.bf16.msra.mxu0 %v1596
      %1657 = vmatprep.subr.bf16.mxu0 0
      %1658 = vmatpush1.bf16.msra.mxu0 %v1597
      %1659 = vmatprep.subr.bf16.mxu0 0
      %1660 = vmatpush1.bf16.msra.mxu0 %v1598
      %1661 = vmatprep.subr.bf16.mxu0 0
      %1662 = vmatpush1.bf16.msra.mxu0 %v1599
      %1663 = vmatprep.subr.bf16.mxu0 0
      %1664 = vmatpush1.bf16.msra.mxu0 %v1600
      %1665 = vmatprep.mubr.bf16.mxu0 %v576
      %1666 = vmatmul.mubr.bf16.gmra.mrb[0].mxu0 %v474
      %v1667 = vpop.f32.mrb[0].mxu0
      %v1668 = vadd.f32 %v1363, %v1667
      %v1669 = vpop.f32.mrb[0].mxu0
      %v1670 = vpop.f32.mrb[0].mxu0
      %v1671 = vadd.f32 %v1366, %v1670
      %v1672 = vpop.f32.mrb[0].mxu0
      %1673 = vmatprep.mubr.bf16.mxu0 %v588
      %1674 = vmatmul.mubr.bf16.gmra.mrb[0].mxu0 %v475
      %v1675 = vpop.f32.mrb[0].mxu0
      %v1676 = vadd.f32 %v1371, %v1675
      %v1677 = vpop.f32.mrb[0].mxu0
      %v1678 = vpop.f32.mrb[0].mxu0
      %v1679 = vadd.f32 %v1374, %v1678
      %v1680 = vpop.f32.mrb[0].mxu0
      %1681 = vmatprep.mubr.bf16.mxu0 %v600
      %1682 = vmatmul.mubr.bf16.gmra.mrb[0].mxu0 %v476
      %v1683 = vpop.f32.mrb[0].mxu0
      %v1684 = vadd.f32 %v1379, %v1683
      %v1685 = vpop.f32.mrb[0].mxu0
      %v1686 = vpop.f32.mrb[0].mxu0
      %v1687 = vadd.f32 %v1382, %v1686
      %v1688 = vpop.f32.mrb[0].mxu0
      %1689 = vmatprep.mubr.bf16.mxu0 %v612
      %1690 = vmatmul.mubr.bf16.gmra.mrb[0].mxu0 %v477
      %v1691 = vpop.f32.mrb[0].mxu0
      %v1692 = vadd.f32 %v1387, %v1691
      %v1693 = vpop.f32.mrb[0].mxu0
      %v1694 = vpop.f32.mrb[0].mxu0
      %v1695 = vadd.f32 %v1390, %v1694
      %v1696 = vpop.f32.mrb[0].mxu0
      %1697 = vmatprep.mubr.bf16.mxu0 %v624
      %1698 = vmatmul.mubr.bf16.gmra.mrb[0].mxu0 %v478
      %v1699 = vpop.f32.mrb[0].mxu0
      %v1700 = vadd.f32 %v1395, %v1699
      %v1701 = vpop.f32.mrb[0].mxu0
      %v1702 = vpop.f32.mrb[0].mxu0
      %v1703 = vadd.f32 %v1398, %v1702
      %v1704 = vpop.f32.mrb[0].mxu0
      %1705 = vmatprep.mubr.bf16.mxu0 %v636
      %1706 = vmatmul.mubr.bf16.gmra.mrb[0].mxu0 %v479
      %v1707 = vpop.f32.mrb[0].mxu0
      %v1708 = vadd.f32 %v1403, %v1707
      %v1709 = vpop.f32.mrb[0].mxu0
      %v1710 = vpop.f32.mrb[0].mxu0
      %v1711 = vadd.f32 %v1406, %v1710
      %v1712 = vpop.f32.mrb[0].mxu0
      %1713 = vmatprep.mubr.bf16.mxu0 %v648
      %1714 = vmatmul.mubr.bf16.gmra.mrb[0].mxu0 %v480
      %v1715 = vpop.f32.mrb[0].mxu0
      %v1716 = vadd.f32 %v1411, %v1715
      %v1717 = vpop.f32.mrb[0].mxu0
      %v1718 = vpop.f32.mrb[0].mxu0
      %v1719 = vadd.f32 %v1414, %v1718
      %v1720 = vpop.f32.mrb[0].mxu0
      %1721 = vmatprep.mubr.bf16.mxu0 %v660
      %1722 = vmatmul.mubr.bf16.gmra.mrb[0].mxu0 %v481
      %v1723 = vpop.f32.mrb[0].mxu0
      %v1724 = vadd.f32 %v1419, %v1723
      %v1725 = vpop.f32.mrb[0].mxu0
      %v1726 = vpop.f32.mrb[0].mxu0
      %v1727 = vadd.f32 %v1422, %v1726
      %v1728 = vpop.f32.mrb[0].mxu0
      %1729 = vmatprep.mubr.bf16.mxu0 %v672
      %1730 = vmatmul.mubr.bf16.gmra.mrb[0].mxu0 %v482
      %v1731 = vpop.f32.mrb[0].mxu0
      %v1732 = vadd.f32 %v1427, %v1731
      %v1733 = vpop.f32.mrb[0].mxu0
      %v1734 = vpop.f32.mrb[0].mxu0
      %v1735 = vadd.f32 %v1430, %v1734
      %v1736 = vpop.f32.mrb[0].mxu0
      %1737 = vmatprep.mubr.bf16.mxu0 %v684
      %1738 = vmatmul.mubr.bf16.gmra.mrb[0].mxu0 %v483
      %v1739 = vpop.f32.mrb[0].mxu0
      %v1740 = vadd.f32 %v1435, %v1739
      %v1741 = vpop.f32.mrb[0].mxu0
      %v1742 = vpop.f32.mrb[0].mxu0
      %v1743 = vadd.f32 %v1438, %v1742
      %v1744 = vpop.f32.mrb[0].mxu0
      %1745 = vmatprep.mubr.bf16.mxu0 %v696
      %1746 = vmatmul.mubr.bf16.gmra.mrb[0].mxu0 %v484
      %v1747 = vpop.f32.mrb[0].mxu0
      %v1748 = vadd.f32 %v1443, %v1747
      %v1749 = vpop.f32.mrb[0].mxu0
      %v1750 = vpop.f32.mrb[0].mxu0
      %v1751 = vadd.f32 %v1446, %v1750
      %v1752 = vpop.f32.mrb[0].mxu0
      %1753 = vmatprep.mubr.bf16.mxu0 %v708
      %1754 = vmatmul.mubr.bf16.gmra.mrb[0].mxu0 %v485
      %v1755 = vpop.f32.mrb[0].mxu0
      %v1756 = vadd.f32 %v1451, %v1755
      %v1757 = vpop.f32.mrb[0].mxu0
      %v1758 = vpop.f32.mrb[0].mxu0
      %v1759 = vadd.f32 %v1454, %v1758
      %v1760 = vpop.f32.mrb[0].mxu0
      %1761 = vmatprep.mubr.bf16.mxu0 %v720
      %1762 = vmatmul.mubr.bf16.gmra.mrb[0].mxu0 %v486
      %v1763 = vpop.f32.mrb[0].mxu0
      %v1764 = vadd.f32 %v1459, %v1763
      %v1765 = vpop.f32.mrb[0].mxu0
      %v1766 = vpop.f32.mrb[0].mxu0
      %v1767 = vadd.f32 %v1462, %v1766
      %v1768 = vpop.f32.mrb[0].mxu0
      %1769 = vmatprep.mubr.bf16.mxu0 %v732
      %1770 = vmatmul.mubr.bf16.gmra.mrb[0].mxu0 %v487
      %v1771 = vpop.f32.mrb[0].mxu0
      %v1772 = vadd.f32 %v1467, %v1771
      %v1773 = vpop.f32.mrb[0].mxu0
      %v1774 = vpop.f32.mrb[0].mxu0
      %v1775 = vadd.f32 %v1470, %v1774
      %v1776 = vpop.f32.mrb[0].mxu0
      %1777 = vmatprep.mubr.bf16.mxu0 %v744
      %1778 = vmatmul.mubr.bf16.gmra.mrb[0].mxu0 %v488
      %v1779 = vpop.f32.mrb[0].mxu0
      %v1780 = vadd.f32 %v1475, %v1779
      %v1781 = vpop.f32.mrb[0].mxu0
      %v1782 = vpop.f32.mrb[0].mxu0
      %v1783 = vadd.f32 %v1478, %v1782
      %v1784 = vpop.f32.mrb[0].mxu0
      %1785 = vmatprep.mubr.bf16.mxu0 %v756
      %1786 = vmatmul.mubr.bf16.gmra.mrb[0].mxu0 %v489
      %v1787 = vpop.f32.mrb[0].mxu0
      %v1788 = vadd.f32 %v1483, %v1787
      %v1789 = vpop.f32.mrb[0].mxu0
      %v1790 = vpop.f32.mrb[0].mxu0
      %v1791 = vadd.f32 %v1486, %v1790
      %v1792 = vpop.f32.mrb[0].mxu0
      %1793 = vdwg.mxu0
      %1794 = vmatprep.subr.bf16.mxu0 0
      %1795 = vmatpush1.bf16.msra.mxu0 %v1601
      %1796 = vmatprep.subr.bf16.mxu0 0
      %1797 = vmatpush1.bf16.msra.mxu0 %v1602
      %1798 = vmatprep.subr.bf16.mxu0 0
      %1799 = vmatpush1.bf16.msra.mxu0 %v1603
      %1800 = vmatprep.subr.bf16.mxu0 0
      %1801 = vmatpush1.bf16.msra.mxu0 %v1604
      %1802 = vmatprep.subr.bf16.mxu0 0
      %1803 = vmatpush1.bf16.msra.mxu0 %v1605
      %1804 = vmatprep.subr.bf16.mxu0 0
      %1805 = vmatpush1.bf16.msra.mxu0 %v1606
      %1806 = vmatprep.subr.bf16.mxu0 0
      %1807 = vmatpush1.bf16.msra.mxu0 %v1607
      %1808 = vmatprep.subr.bf16.mxu0 0
      %1809 = vmatpush1.bf16.msra.mxu0 %v1608
      %1810 = vmatprep.subr.bf16.mxu0 0
      %1811 = vmatpush1.bf16.msra.mxu0 0
      %1812 = vmatprep.subr.bf16.mxu0 0
      %1813 = vmatpush1.bf16.msra.mxu0 0
      %1814 = vmatprep.subr.bf16.mxu0 0
      %1815 = vmatpush1.bf16.msra.mxu0 0
      %1816 = vmatprep.subr.bf16.mxu0 0
      %1817 = vmatpush1.bf16.msra.mxu0 0
      %1818 = vmatprep.subr.bf16.mxu0 0
      %1819 = vmatpush1.bf16.msra.mxu0 0
      %1820 = vmatprep.subr.bf16.mxu0 0
      %1821 = vmatpush1.bf16.msra.mxu0 0
      %1822 = vmatprep.subr.bf16.mxu0 0
      %1823 = vmatpush1.bf16.msra.mxu0 0
      %1824 = vmatprep.subr.bf16.mxu0 0
      %1825 = vmatpush1.bf16.msra.mxu0 0
      %1826 = vmatprep.mubr.bf16.mxu0 0
      %1827 = vmatmul.mubr.bf16.gmra.mrb[0].mxu0 %v856
      %v1828 = vpop.f32.mrb[0].mxu0
      %v1829 = vadd.f32 %v1668, %v1828
      %v1830 = vpop.f32.mrb[0].mxu0
      %v1831 = vpop.f32.mrb[0].mxu0
      %v1832 = vadd.f32 %v1671, %v1831
      %v1833 = vpop.f32.mrb[0].mxu0
      %1834 = vmatprep.mubr.bf16.mxu0 0
      %1835 = vmatmul.mubr.bf16.gmra.mrb[0].mxu0 %v859
      %v1836 = vpop.f32.mrb[0].mxu0
      %v1837 = vadd.f32 %v1676, %v1836
      %v1838 = vpop.f32.mrb[0].mxu0
      %v1839 = vpop.f32.mrb[0].mxu0
      %v1840 = vadd.f32 %v1679, %v1839
      %v1841 = vpop.f32.mrb[0].mxu0
      %1842 = vmatprep.mubr.bf16.mxu0 0
      %1843 = vmatmul.mubr.bf16.gmra.mrb[0].mxu0 %v862
      %v1844 = vpop.f32.mrb[0].mxu0
      %v1845 = vadd.f32 %v1684, %v1844
      %v1846 = vpop.f32.mrb[0].mxu0
      %v1847 = vpop.f32.mrb[0].mxu0
      %v1848 = vadd.f32 %v1687, %v1847
      %v1849 = vpop.f32.mrb[0].mxu0
      %1850 = vmatprep.mubr.bf16.mxu0 0
      %1851 = vmatmul.mubr.bf16.gmra.mrb[0].mxu0 %v865
      %v1852 = vpop.f32.mrb[0].mxu0
      %v1853 = vadd.f32 %v1692, %v1852
      %v1854 = vpop.f32.mrb[0].mxu0
      %v1855 = vpop.f32.mrb[0].mxu0
      %v1856 = vadd.f32 %v1695, %v1855
      %v1857 = vpop.f32.mrb[0].mxu0
      %1858 = vmatprep.mubr.bf16.mxu0 0
      %1859 = vmatmul.mubr.bf16.gmra.mrb[0].mxu0 %v868
      %v1860 = vpop.f32.mrb[0].mxu0
      %v1861 = vadd.f32 %v1700, %v1860
      %v1862 = vpop.f32.mrb[0].mxu0
      %v1863 = vpop.f32.mrb[0].mxu0
      %v1864 = vadd.f32 %v1703, %v1863
      %v1865 = vpop.f32.mrb[0].mxu0
      %1866 = vmatprep.mubr.bf16.mxu0 0
      %1867 = vmatmul.mubr.bf16.gmra.mrb[0].mxu0 %v871
      %v1868 = vpop.f32.mrb[0].mxu0
      %v1869 = vadd.f32 %v1708, %v1868
      %v1870 = vpop.f32.mrb[0].mxu0
      %v1871 = vpop.f32.mrb[0].mxu0
      %v1872 = vadd.f32 %v1711, %v1871
      %v1873 = vpop.f32.mrb[0].mxu0
      %1874 = vmatprep.mubr.bf16.mxu0 0
      %1875 = vmatmul.mubr.bf16.gmra.mrb[0].mxu0 %v874
      %v1876 = vpop.f32.mrb[0].mxu0
      %v1877 = vadd.f32 %v1716, %v1876
      %v1878 = vpop.f32.mrb[0].mxu0
      %v1879 = vpop.f32.mrb[0].mxu0
      %v1880 = vadd.f32 %v1719, %v1879
      %v1881 = vpop.f32.mrb[0].mxu0
      %1882 = vmatprep.mubr.bf16.mxu0 0
      %1883 = vmatmul.mubr.bf16.gmra.mrb[0].mxu0 %v877
      %v1884 = vpop.f32.mrb[0].mxu0
      %v1885 = vadd.f32 %v1724, %v1884
      %v1886 = vpop.f32.mrb[0].mxu0
      %v1887 = vpop.f32.mrb[0].mxu0
      %v1888 = vadd.f32 %v1727, %v1887
      %v1889 = vpop.f32.mrb[0].mxu0
      %1890 = vmatprep.mubr.bf16.mxu0 0
      %1891 = vmatmul.mubr.bf16.gmra.mrb[0].mxu0 %v880
      %v1892 = vpop.f32.mrb[0].mxu0
      %v1893 = vadd.f32 %v1732, %v1892
      %v1894 = vpop.f32.mrb[0].mxu0
      %v1895 = vpop.f32.mrb[0].mxu0
      %v1896 = vadd.f32 %v1735, %v1895
      %v1897 = vpop.f32.mrb[0].mxu0
      %1898 = vmatprep.mubr.bf16.mxu0 0
      %1899 = vmatmul.mubr.bf16.gmra.mrb[0].mxu0 %v883
      %v1900 = vpop.f32.mrb[0].mxu0
      %v1901 = vadd.f32 %v1740, %v1900
      %v1902 = vpop.f32.mrb[0].mxu0
      %v1903 = vpop.f32.mrb[0].mxu0
      %v1904 = vadd.f32 %v1743, %v1903
      %v1905 = vpop.f32.mrb[0].mxu0
      %1906 = vmatprep.mubr.bf16.mxu0 0
      %1907 = vmatmul.mubr.bf16.gmra.mrb[0].mxu0 %v886
      %v1908 = vpop.f32.mrb[0].mxu0
      %v1909 = vadd.f32 %v1748, %v1908
      %v1910 = vpop.f32.mrb[0].mxu0
      %v1911 = vpop.f32.mrb[0].mxu0
      %v1912 = vadd.f32 %v1751, %v1911
      %v1913 = vpop.f32.mrb[0].mxu0
      %1914 = vmatprep.mubr.bf16.mxu0 0
      %1915 = vmatmul.mubr.bf16.gmra.mrb[0].mxu0 %v889
      %v1916 = vpop.f32.mrb[0].mxu0
      %v1917 = vadd.f32 %v1756, %v1916
      %v1918 = vpop.f32.mrb[0].mxu0
      %v1919 = vpop.f32.mrb[0].mxu0
      %v1920 = vadd.f32 %v1759, %v1919
      %v1921 = vpop.f32.mrb[0].mxu0
      %1922 = vmatprep.mubr.bf16.mxu0 0
      %1923 = vmatmul.mubr.bf16.gmra.mrb[0].mxu0 %v892
      %v1924 = vpop.f32.mrb[0].mxu0
      %v1925 = vadd.f32 %v1764, %v1924
      %v1926 = vpop.f32.mrb[0].mxu0
      %v1927 = vpop.f32.mrb[0].mxu0
      %v1928 = vadd.f32 %v1767, %v1927
      %v1929 = vpop.f32.mrb[0].mxu0
      %1930 = vmatprep.mubr.bf16.mxu0 0
      %1931 = vmatmul.mubr.bf16.gmra.mrb[0].mxu0 %v895
      %v1932 = vpop.f32.mrb[0].mxu0
      %v1933 = vadd.f32 %v1772, %v1932
      %v1934 = vpop.f32.mrb[0].mxu0
      %v1935 = vpop.f32.mrb[0].mxu0
      %v1936 = vadd.f32 %v1775, %v1935
      %v1937 = vpop.f32.mrb[0].mxu0
      %1938 = vmatprep.mubr.bf16.mxu0 0
      %1939 = vmatmul.mubr.bf16.gmra.mrb[0].mxu0 %v898
      %v1940 = vpop.f32.mrb[0].mxu0
      %v1941 = vadd.f32 %v1780, %v1940
      %v1942 = vpop.f32.mrb[0].mxu0
      %v1943 = vpop.f32.mrb[0].mxu0
      %v1944 = vadd.f32 %v1783, %v1943
      %v1945 = vpop.f32.mrb[0].mxu0
      %1946 = vmatprep.mubr.bf16.mxu0 0
      %1947 = vmatmul.mubr.bf16.gmra.mrb[0].mxu0 %v901
      %v1948 = vpop.f32.mrb[0].mxu0
      %v1949 = vadd.f32 %v1788, %v1948
      %v1950 = vpop.f32.mrb[0].mxu0
      %v1951 = vpop.f32.mrb[0].mxu0
      %v1952 = vadd.f32 %v1791, %v1951
      %v1953 = vpop.f32.mrb[0].mxu0
      %1954 = vdwg.mxu0
      %s1955 = scalar_lea.vmem %s308, 384
      %v1956 = vld [vmem:[%s1955] sm:$0xf]
      %v1957 = vld [vmem:[%s1955 + $0x4] sm:$0xf]
      %v1958 = vld [vmem:[%s1955 + $0x8] sm:$0xf]
      %v1959 = vld [vmem:[%s1955 + $0xc] sm:$0xf]
      %v1960 = vld [vmem:[%s1955 + $0x10] sm:$0xf]
      %v1961 = vld [vmem:[%s1955 + $0x14] sm:$0xf]
      %v1962 = vld [vmem:[%s1955 + $0x18] sm:$0xf]
      %v1963 = vld [vmem:[%s1955 + $0x1c] sm:$0xf]
      %v1964 = vld [vmem:[%s1955 + $0x20] sm:$0xf]
      %v1965 = vld [vmem:[%s1955 + $0x24] sm:$0xf]
      %v1966 = vld [vmem:[%s1955 + $0x28] sm:$0xf]
      %v1967 = vld [vmem:[%s1955 + $0x2c] sm:$0xf]
      %v1968 = vld [vmem:[%s1955 + $0x30] sm:$0xf]
      %v1969 = vld [vmem:[%s1955 + $0x34] sm:$0xf]
      %v1970 = vld [vmem:[%s1955 + $0x38] sm:$0xf]
      %v1971 = vld [vmem:[%s1955 + $0x3c] sm:$0xf]
      %v1972 = vld [vmem:[%s1955 + $0x40] sm:$0xf]
      %v1973 = vld [vmem:[%s1955 + $0x44] sm:$0xf]
      %v1974 = vld [vmem:[%s1955 + $0x48] sm:$0xf]
      %v1975 = vld [vmem:[%s1955 + $0x4c] sm:$0xf]
      %v1976 = vld [vmem:[%s1955 + $0x50] sm:$0xf]
      %v1977 = vld [vmem:[%s1955 + $0x54] sm:$0xf]
      %v1978 = vld [vmem:[%s1955 + $0x58] sm:$0xf]
      %v1979 = vld [vmem:[%s1955 + $0x5c] sm:$0xf]
      %v1980 = vld [vmem:[%s1955 + $0x60] sm:$0xf]
      %v1981 = vld [vmem:[%s1955 + $0x64] sm:$0xf]
      %v1982 = vld [vmem:[%s1955 + $0x68] sm:$0xf]
      %v1983 = vld [vmem:[%s1955 + $0x6c] sm:$0xf]
      %v1984 = vld [vmem:[%s1955 + $0x70] sm:$0xf]
      %v1985 = vld [vmem:[%s1955 + $0x74] sm:$0xf]
      %v1986 = vld [vmem:[%s1955 + $0x78] sm:$0xf]
      %v1987 = vld [vmem:[%s1955 + $0x7c] sm:$0xf]
      %v1988 = vld [vmem:[%s1955 + $0x80] sm:$0xf]
      %v1989 = vld [vmem:[%s1955 + $0x84] sm:$0xf]
      %v1990 = vld [vmem:[%s1955 + $0x88] sm:$0xf]
      %v1991 = vld [vmem:[%s1955 + $0x8c] sm:$0xf]
      %v1992 = vld [vmem:[%s1955 + $0x90] sm:$0xf]
      %v1993 = vld [vmem:[%s1955 + $0x94] sm:$0xf]
      %v1994 = vld [vmem:[%s1955 + $0x98] sm:$0xf]
      %v1995 = vld [vmem:[%s1955 + $0x9c] sm:$0xf]
      %v1996 = vld [vmem:[%s1955 + $0xa0] sm:$0xf]
      %v1997 = vld [vmem:[%s1955 + $0xa4] sm:$0xf]
      %v1998 = vld [vmem:[%s1955 + $0xa8] sm:$0xf]
      %v1999 = vld [vmem:[%s1955 + $0xac] sm:$0xf]
      %v2000 = vld [vmem:[%s1955 + $0xb0] sm:$0xf]
      %v2001 = vld [vmem:[%s1955 + $0xb4] sm:$0xf]
      %v2002 = vld [vmem:[%s1955 + $0xb8] sm:$0xf]
      %v2003 = vld [vmem:[%s1955 + $0xbc] sm:$0xf]
      %v2052 = vunpack.c.l.b16 %v1956
      %v2053 = vunpack.c.l.b16 %v1957
      %v2054 = vunpack.c.l.b16 %v1958
      %v2055 = vunpack.c.l.b16 %v1959
      %v2056 = vunpack.c.l.b16 %v1960
      %v2057 = vunpack.c.l.b16 %v1961
      %v2058 = vunpack.c.l.b16 %v1962
      %v2059 = vunpack.c.l.b16 %v1963
      %v2060 = vunpack.c.l.b16 %v1964
      %v2061 = vunpack.c.l.b16 %v1965
      %v2062 = vunpack.c.l.b16 %v1966
      %v2063 = vunpack.c.l.b16 %v1967
      %v2064 = vunpack.c.l.b16 %v1968
      %v2065 = vunpack.c.l.b16 %v1969
      %v2066 = vunpack.c.l.b16 %v1970
      %v2067 = vunpack.c.l.b16 %v1971
      %v2068 = vunpack.c.l.b16 %v1972
      %v2069 = vunpack.c.l.b16 %v1973
      %v2070 = vunpack.c.l.b16 %v1974
      %v2071 = vunpack.c.l.b16 %v1975
      %v2072 = vunpack.c.l.b16 %v1976
      %v2073 = vunpack.c.l.b16 %v1977
      %v2074 = vunpack.c.l.b16 %v1978
      %v2075 = vunpack.c.l.b16 %v1979
      %v2076 = vunpack.c.l.b16 %v1980
      %v2077 = vunpack.c.l.b16 %v1981
      %v2078 = vunpack.c.l.b16 %v1982
      %v2079 = vunpack.c.l.b16 %v1983
      %v2080 = vunpack.c.l.b16 %v1984
      %v2081 = vunpack.c.l.b16 %v1985
      %v2082 = vunpack.c.l.b16 %v1986
      %v2083 = vunpack.c.l.b16 %v1987
      %v2084 = vunpack.c.l.b16 %v1988
      %v2085 = vunpack.c.l.b16 %v1989
      %v2086 = vunpack.c.l.b16 %v1990
      %v2087 = vunpack.c.l.b16 %v1991
      %v2088 = vunpack.c.l.b16 %v1992
      %v2089 = vunpack.c.l.b16 %v1993
      %v2090 = vunpack.c.l.b16 %v1994
      %v2091 = vunpack.c.l.b16 %v1995
      %v2092 = vunpack.c.l.b16 %v1996
      %v2093 = vunpack.c.l.b16 %v1997
      %v2094 = vunpack.c.l.b16 %v1998
      %v2095 = vunpack.c.l.b16 %v1999
      %v2096 = vunpack.c.l.b16 %v2000
      %v2097 = vunpack.c.l.b16 %v2001
      %v2098 = vunpack.c.l.b16 %v2002
      %v2099 = vunpack.c.l.b16 %v2003
      %v2100 = vpack.c.b16 %v2053, %v2052
      %v2101 = vpack.c.b16 %v2055, %v2054
      %v2102 = vpack.c.b16 %v2057, %v2056
      %v2103 = vpack.c.b16 %v2059, %v2058
      %v2104 = vpack.c.b16 %v2061, %v2060
      %v2105 = vpack.c.b16 %v2063, %v2062
      %v2106 = vpack.c.b16 %v2065, %v2064
      %v2107 = vpack.c.b16 %v2067, %v2066
      %v2108 = vpack.c.b16 %v2069, %v2068
      %v2109 = vpack.c.b16 %v2071, %v2070
      %v2110 = vpack.c.b16 %v2073, %v2072
      %v2111 = vpack.c.b16 %v2075, %v2074
      %v2112 = vpack.c.b16 %v2077, %v2076
      %v2113 = vpack.c.b16 %v2079, %v2078
      %v2114 = vpack.c.b16 %v2081, %v2080
      %v2115 = vpack.c.b16 %v2083, %v2082
      %v2116 = vpack.c.b16 %v2085, %v2084
      %v2117 = vpack.c.b16 %v2087, %v2086
      %v2118 = vpack.c.b16 %v2089, %v2088
      %v2119 = vpack.c.b16 %v2091, %v2090
      %v2120 = vpack.c.b16 %v2093, %v2092
      %v2121 = vpack.c.b16 %v2095, %v2094
      %v2122 = vpack.c.b16 %v2097, %v2096
      %v2123 = vpack.c.b16 %v2099, %v2098
      %2148 = vmatprep.subr.bf16.mxu0 0
      %2149 = vmatpush1.bf16.msra.mxu0 %v2100
      %2150 = vmatprep.subr.bf16.mxu0 0
      %2151 = vmatpush1.bf16.msra.mxu0 %v2101
      %2152 = vmatprep.subr.bf16.mxu0 0
      %2153 = vmatpush1.bf16.msra.mxu0 %v2102
      %2154 = vmatprep.subr.bf16.mxu0 0
      %2155 = vmatpush1.bf16.msra.mxu0 %v2103
      %2156 = vmatprep.subr.bf16.mxu0 0
      %2157 = vmatpush1.bf16.msra.mxu0 %v2104
      %2158 = vmatprep.subr.bf16.mxu0 0
      %2159 = vmatpush1.bf16.msra.mxu0 %v2105
      %2160 = vmatprep.subr.bf16.mxu0 0
      %2161 = vmatpush1.bf16.msra.mxu0 %v2106
      %2162 = vmatprep.subr.bf16.mxu0 0
      %2163 = vmatpush1.bf16.msra.mxu0 %v2107
      %2164 = vmatprep.subr.bf16.mxu0 0
      %2165 = vmatpush1.bf16.msra.mxu0 %v2108
      %2166 = vmatprep.subr.bf16.mxu0 0
      %2167 = vmatpush1.bf16.msra.mxu0 %v2109
      %2168 = vmatprep.subr.bf16.mxu0 0
      %2169 = vmatpush1.bf16.msra.mxu0 %v2110
      %2170 = vmatprep.subr.bf16.mxu0 0
      %2171 = vmatpush1.bf16.msra.mxu0 %v2111
      %2172 = vmatprep.subr.bf16.mxu0 0
      %2173 = vmatpush1.bf16.msra.mxu0 %v2112
      %2174 = vmatprep.subr.bf16.mxu0 0
      %2175 = vmatpush1.bf16.msra.mxu0 %v2113
      %2176 = vmatprep.subr.bf16.mxu0 0
      %2177 = vmatpush1.bf16.msra.mxu0 %v2114
      %2178 = vmatprep.subr.bf16.mxu0 0
      %2179 = vmatpush1.bf16.msra.mxu0 %v2115
      %2180 = vmatprep.mubr.bf16.mxu0 %v600
      %2181 = vmatmul.mubr.bf16.gmra.mrb[0].mxu0 %v476
      %v2182 = vpop.f32.mrb[0].mxu0
      %v2183 = vadd.f32 0.0, %v2182
      %v2184 = vpop.f32.mrb[0].mxu0
      %v2185 = vpop.f32.mrb[0].mxu0
      %v2186 = vadd.f32 0.0, %v2185
      %v2187 = vpop.f32.mrb[0].mxu0
      %2188 = vmatprep.mubr.bf16.mxu0 %v612
      %2189 = vmatmul.mubr.bf16.gmra.mrb[0].mxu0 %v477
      %v2190 = vpop.f32.mrb[0].mxu0
      %v2191 = vadd.f32 0.0, %v2190
      %v2192 = vpop.f32.mrb[0].mxu0
      %v2193 = vpop.f32.mrb[0].mxu0
      %v2194 = vadd.f32 0.0, %v2193
      %v2195 = vpop.f32.mrb[0].mxu0
      %2196 = vmatprep.mubr.bf16.mxu0 %v624
      %2197 = vmatmul.mubr.bf16.gmra.mrb[0].mxu0 %v478
      %v2198 = vpop.f32.mrb[0].mxu0
      %v2199 = vadd.f32 0.0, %v2198
      %v2200 = vpop.f32.mrb[0].mxu0
      %v2201 = vpop.f32.mrb[0].mxu0
      %v2202 = vadd.f32 0.0, %v2201
      %v2203 = vpop.f32.mrb[0].mxu0
      %2204 = vmatprep.mubr.bf16.mxu0 %v636
      %2205 = vmatmul.mubr.bf16.gmra.mrb[0].mxu0 %v479
      %v2206 = vpop.f32.mrb[0].mxu0
      %v2207 = vadd.f32 0.0, %v2206
      %v2208 = vpop.f32.mrb[0].mxu0
      %v2209 = vpop.f32.mrb[0].mxu0
      %v2210 = vadd.f32 0.0, %v2209
      %v2211 = vpop.f32.mrb[0].mxu0
      %2212 = vmatprep.mubr.bf16.mxu0 %v648
      %2213 = vmatmul.mubr.bf16.gmra.mrb[0].mxu0 %v480
      %v2214 = vpop.f32.mrb[0].mxu0
      %v2215 = vadd.f32 0.0, %v2214
      %v2216 = vpop.f32.mrb[0].mxu0
      %v2217 = vpop.f32.mrb[0].mxu0
      %v2218 = vadd.f32 0.0, %v2217
      %v2219 = vpop.f32.mrb[0].mxu0
      %2220 = vmatprep.mubr.bf16.mxu0 %v660
      %2221 = vmatmul.mubr.bf16.gmra.mrb[0].mxu0 %v481
      %v2222 = vpop.f32.mrb[0].mxu0
      %v2223 = vadd.f32 0.0, %v2222
      %v2224 = vpop.f32.mrb[0].mxu0
      %v2225 = vpop.f32.mrb[0].mxu0
      %v2226 = vadd.f32 0.0, %v2225
      %v2227 = vpop.f32.mrb[0].mxu0
      %2228 = vmatprep.mubr.bf16.mxu0 %v672
      %2229 = vmatmul.mubr.bf16.gmra.mrb[0].mxu0 %v482
      %v2230 = vpop.f32.mrb[0].mxu0
      %v2231 = vadd.f32 0.0, %v2230
      %v2232 = vpop.f32.mrb[0].mxu0
      %v2233 = vpop.f32.mrb[0].mxu0
      %v2234 = vadd.f32 0.0, %v2233
      %v2235 = vpop.f32.mrb[0].mxu0
      %2236 = vmatprep.mubr.bf16.mxu0 %v684
      %2237 = vmatmul.mubr.bf16.gmra.mrb[0].mxu0 %v483
      %v2238 = vpop.f32.mrb[0].mxu0
      %v2239 = vadd.f32 0.0, %v2238
      %v2240 = vpop.f32.mrb[0].mxu0
      %v2241 = vpop.f32.mrb[0].mxu0
      %v2242 = vadd.f32 0.0, %v2241
      %v2243 = vpop.f32.mrb[0].mxu0
      %2244 = vmatprep.mubr.bf16.mxu0 %v696
      %2245 = vmatmul.mubr.bf16.gmra.mrb[0].mxu0 %v484
      %v2246 = vpop.f32.mrb[0].mxu0
      %v2247 = vadd.f32 0.0, %v2246
      %v2248 = vpop.f32.mrb[0].mxu0
      %v2249 = vpop.f32.mrb[0].mxu0
      %v2250 = vadd.f32 0.0, %v2249
      %v2251 = vpop.f32.mrb[0].mxu0
      %2252 = vmatprep.mubr.bf16.mxu0 %v708
      %2253 = vmatmul.mubr.bf16.gmra.mrb[0].mxu0 %v485
      %v2254 = vpop.f32.mrb[0].mxu0
      %v2255 = vadd.f32 0.0, %v2254
      %v2256 = vpop.f32.mrb[0].mxu0
      %v2257 = vpop.f32.mrb[0].mxu0
      %v2258 = vadd.f32 0.0, %v2257
      %v2259 = vpop.f32.mrb[0].mxu0
      %2260 = vmatprep.mubr.bf16.mxu0 %v720
      %2261 = vmatmul.mubr.bf16.gmra.mrb[0].mxu0 %v486
      %v2262 = vpop.f32.mrb[0].mxu0
      %v2263 = vadd.f32 0.0, %v2262
      %v2264 = vpop.f32.mrb[0].mxu0
      %v2265 = vpop.f32.mrb[0].mxu0
      %v2266 = vadd.f32 0.0, %v2265
      %v2267 = vpop.f32.mrb[0].mxu0
      %2268 = vmatprep.mubr.bf16.mxu0 %v732
      %2269 = vmatmul.mubr.bf16.gmra.mrb[0].mxu0 %v487
      %v2270 = vpop.f32.mrb[0].mxu0
      %v2271 = vadd.f32 0.0, %v2270
      %v2272 = vpop.f32.mrb[0].mxu0
      %v2273 = vpop.f32.mrb[0].mxu0
      %v2274 = vadd.f32 0.0, %v2273
      %v2275 = vpop.f32.mrb[0].mxu0
      %2276 = vmatprep.mubr.bf16.mxu0 %v744
      %2277 = vmatmul.mubr.bf16.gmra.mrb[0].mxu0 %v488
      %v2278 = vpop.f32.mrb[0].mxu0
      %v2279 = vadd.f32 0.0, %v2278
      %v2280 = vpop.f32.mrb[0].mxu0
      %v2281 = vpop.f32.mrb[0].mxu0
      %v2282 = vadd.f32 0.0, %v2281
      %v2283 = vpop.f32.mrb[0].mxu0
      %2284 = vmatprep.mubr.bf16.mxu0 %v756
      %2285 = vmatmul.mubr.bf16.gmra.mrb[0].mxu0 %v489
      %v2286 = vpop.f32.mrb[0].mxu0
      %v2287 = vadd.f32 0.0, %v2286
      %v2288 = vpop.f32.mrb[0].mxu0
      %v2289 = vpop.f32.mrb[0].mxu0
      %v2290 = vadd.f32 0.0, %v2289
      %v2291 = vpop.f32.mrb[0].mxu0
      %2292 = vmatprep.mubr.bf16.mxu0 %v768
      %2293 = vmatmul.mubr.bf16.gmra.mrb[0].mxu0 %v490
      %v2294 = vpop.f32.mrb[0].mxu0
      %v2295 = vadd.f32 0.0, %v2294
      %v2296 = vpop.f32.mrb[0].mxu0
      %v2297 = vpop.f32.mrb[0].mxu0
      %v2298 = vadd.f32 0.0, %v2297
      %v2299 = vpop.f32.mrb[0].mxu0
      %2300 = vmatprep.mubr.bf16.mxu0 %v780
      %2301 = vmatmul.mubr.bf16.gmra.mrb[0].mxu0 %v491
      %v2302 = vpop.f32.mrb[0].mxu0
      %v2303 = vadd.f32 0.0, %v2302
      %v2304 = vpop.f32.mrb[0].mxu0
      %v2305 = vpop.f32.mrb[0].mxu0
      %v2306 = vadd.f32 0.0, %v2305
      %v2307 = vpop.f32.mrb[0].mxu0
      %2308 = vdwg.mxu0
      %2309 = vmatprep.subr.bf16.mxu0 0
      %2310 = vmatpush1.bf16.msra.mxu0 %v2116
      %2311 = vmatprep.subr.bf16.mxu0 0
      %2312 = vmatpush1.bf16.msra.mxu0 %v2117
      %2313 = vmatprep.subr.bf16.mxu0 0
      %2314 = vmatpush1.bf16.msra.mxu0 %v2118
      %2315 = vmatprep.subr.bf16.mxu0 0
      %2316 = vmatpush1.bf16.msra.mxu0 %v2119
      %2317 = vmatprep.subr.bf16.mxu0 0
      %2318 = vmatpush1.bf16.msra.mxu0 %v2120
      %2319 = vmatprep.subr.bf16.mxu0 0
      %2320 = vmatpush1.bf16.msra.mxu0 %v2121
      %2321 = vmatprep.subr.bf16.mxu0 0
      %2322 = vmatpush1.bf16.msra.mxu0 %v2122
      %2323 = vmatprep.subr.bf16.mxu0 0
      %2324 = vmatpush1.bf16.msra.mxu0 %v2123
      %2325 = vmatprep.subr.bf16.mxu0 0
      %2326 = vmatpush1.bf16.msra.mxu0 0
      %2327 = vmatprep.subr.bf16.mxu0 0
      %2328 = vmatpush1.bf16.msra.mxu0 0
      %2329 = vmatprep.subr.bf16.mxu0 0
      %2330 = vmatpush1.bf16.msra.mxu0 0
      %2331 = vmatprep.subr.bf16.mxu0 0
      %2332 = vmatpush1.bf16.msra.mxu0 0
      %2333 = vmatprep.subr.bf16.mxu0 0
      %2334 = vmatpush1.bf16.msra.mxu0 0
      %2335 = vmatprep.subr.bf16.mxu0 0
      %2336 = vmatpush1.bf16.msra.mxu0 0
      %2337 = vmatprep.subr.bf16.mxu0 0
      %2338 = vmatpush1.bf16.msra.mxu0 0
      %2339 = vmatprep.subr.bf16.mxu0 0
      %2340 = vmatpush1.bf16.msra.mxu0 0
      %2341 = vmatprep.mubr.bf16.mxu0 0
      %2342 = vmatmul.mubr.bf16.gmra.mrb[0].mxu0 %v862
      %v2343 = vpop.f32.mrb[0].mxu0
      %v2344 = vadd.f32 %v2183, %v2343
      %v2345 = vpop.f32.mrb[0].mxu0
      %v2346 = vpop.f32.mrb[0].mxu0
      %v2347 = vadd.f32 %v2186, %v2346
      %v2348 = vpop.f32.mrb[0].mxu0
      %2349 = vmatprep.mubr.bf16.mxu0 0
      %2350 = vmatmul.mubr.bf16.gmra.mrb[0].mxu0 %v865
      %v2351 = vpop.f32.mrb[0].mxu0
      %v2352 = vadd.f32 %v2191, %v2351
      %v2353 = vpop.f32.mrb[0].mxu0
      %v2354 = vpop.f32.mrb[0].mxu0
      %v2355 = vadd.f32 %v2194, %v2354
      %v2356 = vpop.f32.mrb[0].mxu0
      %2357 = vmatprep.mubr.bf16.mxu0 0
      %2358 = vmatmul.mubr.bf16.gmra.mrb[0].mxu0 %v868
      %v2359 = vpop.f32.mrb[0].mxu0
      %v2360 = vadd.f32 %v2199, %v2359
      %v2361 = vpop.f32.mrb[0].mxu0
      %v2362 = vpop.f32.mrb[0].mxu0
      %v2363 = vadd.f32 %v2202, %v2362
      %v2364 = vpop.f32.mrb[0].mxu0
      %2365 = vmatprep.mubr.bf16.mxu0 0
      %2366 = vmatmul.mubr.bf16.gmra.mrb[0].mxu0 %v871
      %v2367 = vpop.f32.mrb[0].mxu0
      %v2368 = vadd.f32 %v2207, %v2367
      %v2369 = vpop.f32.mrb[0].mxu0
      %v2370 = vpop.f32.mrb[0].mxu0
      %v2371 = vadd.f32 %v2210, %v2370
      %v2372 = vpop.f32.mrb[0].mxu0
      %2373 = vmatprep.mubr.bf16.mxu0 0
      %2374 = vmatmul.mubr.bf16.gmra.mrb[0].mxu0 %v874
      %v2375 = vpop.f32.mrb[0].mxu0
      %v2376 = vadd.f32 %v2215, %v2375
      %v2377 = vpop.f32.mrb[0].mxu0
      %v2378 = vpop.f32.mrb[0].mxu0
      %v2379 = vadd.f32 %v2218, %v2378
      %v2380 = vpop.f32.mrb[0].mxu0
      %2381 = vmatprep.mubr.bf16.mxu0 0
      %2382 = vmatmul.mubr.bf16.gmra.mrb[0].mxu0 %v877
      %v2383 = vpop.f32.mrb[0].mxu0
      %v2384 = vadd.f32 %v2223, %v2383
      %v2385 = vpop.f32.mrb[0].mxu0
      %v2386 = vpop.f32.mrb[0].mxu0
      %v2387 = vadd.f32 %v2226, %v2386
      %v2388 = vpop.f32.mrb[0].mxu0
      %2389 = vmatprep.mubr.bf16.mxu0 0
      %2390 = vmatmul.mubr.bf16.gmra.mrb[0].mxu0 %v880
      %v2391 = vpop.f32.mrb[0].mxu0
      %v2392 = vadd.f32 %v2231, %v2391
      %v2393 = vpop.f32.mrb[0].mxu0
      %v2394 = vpop.f32.mrb[0].mxu0
      %v2395 = vadd.f32 %v2234, %v2394
      %v2396 = vpop.f32.mrb[0].mxu0
      %2397 = vmatprep.mubr.bf16.mxu0 0
      %2398 = vmatmul.mubr.bf16.gmra.mrb[0].mxu0 %v883
      %v2399 = vpop.f32.mrb[0].mxu0
      %v2400 = vadd.f32 %v2239, %v2399
      %v2401 = vpop.f32.mrb[0].mxu0
      %v2402 = vpop.f32.mrb[0].mxu0
      %v2403 = vadd.f32 %v2242, %v2402
      %v2404 = vpop.f32.mrb[0].mxu0
      %2405 = vmatprep.mubr.bf16.mxu0 0
      %2406 = vmatmul.mubr.bf16.gmra.mrb[0].mxu0 %v886
      %v2407 = vpop.f32.mrb[0].mxu0
      %v2408 = vadd.f32 %v2247, %v2407
      %v2409 = vpop.f32.mrb[0].mxu0
      %v2410 = vpop.f32.mrb[0].mxu0
      %v2411 = vadd.f32 %v2250, %v2410
      %v2412 = vpop.f32.mrb[0].mxu0
      %2413 = vmatprep.mubr.bf16.mxu0 0
      %2414 = vmatmul.mubr.bf16.gmra.mrb[0].mxu0 %v889
      %v2415 = vpop.f32.mrb[0].mxu0
      %v2416 = vadd.f32 %v2255, %v2415
      %v2417 = vpop.f32.mrb[0].mxu0
      %v2418 = vpop.f32.mrb[0].mxu0
      %v2419 = vadd.f32 %v2258, %v2418
      %v2420 = vpop.f32.mrb[0].mxu0
      %2421 = vmatprep.mubr.bf16.mxu0 0
      %2422 = vmatmul.mubr.bf16.gmra.mrb[0].mxu0 %v892
      %v2423 = vpop.f32.mrb[0].mxu0
      %v2424 = vadd.f32 %v2263, %v2423
      %v2425 = vpop.f32.mrb[0].mxu0
      %v2426 = vpop.f32.mrb[0].mxu0
      %v2427 = vadd.f32 %v2266, %v2426
      %v2428 = vpop.f32.mrb[0].mxu0
      %2429 = vmatprep.mubr.bf16.mxu0 0
      %2430 = vmatmul.mubr.bf16.gmra.mrb[0].mxu0 %v895
      %v2431 = vpop.f32.mrb[0].mxu0
      %v2432 = vadd.f32 %v2271, %v2431
      %v2433 = vpop.f32.mrb[0].mxu0
      %v2434 = vpop.f32.mrb[0].mxu0
      %v2435 = vadd.f32 %v2274, %v2434
      %v2436 = vpop.f32.mrb[0].mxu0
      %2437 = vmatprep.mubr.bf16.mxu0 0
      %2438 = vmatmul.mubr.bf16.gmra.mrb[0].mxu0 %v898
      %v2439 = vpop.f32.mrb[0].mxu0
      %v2440 = vadd.f32 %v2279, %v2439
      %v2441 = vpop.f32.mrb[0].mxu0
      %v2442 = vpop.f32.mrb[0].mxu0
      %v2443 = vadd.f32 %v2282, %v2442
      %v2444 = vpop.f32.mrb[0].mxu0
      %2445 = vmatprep.mubr.bf16.mxu0 0
      %2446 = vmatmul.mubr.bf16.gmra.mrb[0].mxu0 %v901
      %v2447 = vpop.f32.mrb[0].mxu0
      %v2448 = vadd.f32 %v2287, %v2447
      %v2449 = vpop.f32.mrb[0].mxu0
      %v2450 = vpop.f32.mrb[0].mxu0
      %v2451 = vadd.f32 %v2290, %v2450
      %v2452 = vpop.f32.mrb[0].mxu0
      %2453 = vmatprep.mubr.bf16.mxu0 0
      %2454 = vmatmul.mubr.bf16.gmra.mrb[0].mxu0 %v904
      %v2455 = vpop.f32.mrb[0].mxu0
      %v2456 = vadd.f32 %v2295, %v2455
      %v2457 = vpop.f32.mrb[0].mxu0
      %v2458 = vpop.f32.mrb[0].mxu0
      %v2459 = vadd.f32 %v2298, %v2458
      %v2460 = vpop.f32.mrb[0].mxu0
      %2461 = vmatprep.mubr.bf16.mxu0 0
      %2462 = vmatmul.mubr.bf16.gmra.mrb[0].mxu0 %v907
      %v2463 = vpop.f32.mrb[0].mxu0
      %v2464 = vadd.f32 %v2303, %v2463
      %v2465 = vpop.f32.mrb[0].mxu0
      %v2466 = vpop.f32.mrb[0].mxu0
      %v2467 = vadd.f32 %v2306, %v2466
      %v2468 = vpop.f32.mrb[0].mxu0
      %2469 = vdwg.mxu0
      %v2470 = vadd.f32 %v1829, %v2344
      %v2471 = vadd.f32 %v1832, %v2347
      %v2472 = vadd.f32 %v1837, %v2352
      %v2473 = vadd.f32 %v1840, %v2355
      %v2474 = vadd.f32 %v1845, %v2360
      %v2475 = vadd.f32 %v1848, %v2363
      %v2476 = vadd.f32 %v1853, %v2368
      %v2477 = vadd.f32 %v1856, %v2371
      %v2478 = vadd.f32 %v1861, %v2376
      %v2479 = vadd.f32 %v1864, %v2379
      %v2480 = vadd.f32 %v1869, %v2384
      %v2481 = vadd.f32 %v1872, %v2387
      %v2482 = vadd.f32 %v1877, %v2392
      %v2483 = vadd.f32 %v1880, %v2395
      %v2484 = vadd.f32 %v1885, %v2400
      %v2485 = vadd.f32 %v1888, %v2403
      %v2486 = vadd.f32 %v1893, %v2408
      %v2487 = vadd.f32 %v1896, %v2411
      %v2488 = vadd.f32 %v1901, %v2416
      %v2489 = vadd.f32 %v1904, %v2419
      %v2490 = vadd.f32 %v1909, %v2424
      %v2491 = vadd.f32 %v1912, %v2427
      %v2492 = vadd.f32 %v1917, %v2432
      %v2493 = vadd.f32 %v1920, %v2435
      %v2494 = vadd.f32 %v1925, %v2440
      %v2495 = vadd.f32 %v1928, %v2443
      %v2496 = vadd.f32 %v1933, %v2448
      %v2497 = vadd.f32 %v1936, %v2451
      %v2498 = vadd.f32 %v1941, %v2456
      %v2499 = vadd.f32 %v1944, %v2459
      %v2500 = vadd.f32 %v1949, %v2464
      %v2501 = vadd.f32 %v1952, %v2467
      %v2502 = vld [vmem:[%s311] sm:$0x1]
      %v2504 = vlaneseq
      %v2505 = vshrl.u32 %v2504, 7
      %v2506 = vsub.s32 0, %v2505
      %v2507 = vrot.slane %v2502, %v2506
      %v2509 = vadd.f32 %v2470, %v2507
      %v2510 = vadd.f32 %v2471, %v2507
      %v2511 = vadd.f32 %v2472, %v2507
      %v2512 = vadd.f32 %v2473, %v2507
      %v2513 = vadd.f32 %v2474, %v2507
      %v2514 = vadd.f32 %v2475, %v2507
      %v2515 = vadd.f32 %v2476, %v2507
      %v2516 = vadd.f32 %v2477, %v2507
      %v2517 = vadd.f32 %v2478, %v2507
      %v2518 = vadd.f32 %v2479, %v2507
      %v2519 = vadd.f32 %v2480, %v2507
      %v2520 = vadd.f32 %v2481, %v2507
      %v2521 = vadd.f32 %v2482, %v2507
      %v2522 = vadd.f32 %v2483, %v2507
      %v2523 = vadd.f32 %v2484, %v2507
      %v2524 = vadd.f32 %v2485, %v2507
      %v2525 = vadd.f32 %v2486, %v2507
      %v2526 = vadd.f32 %v2487, %v2507
      %v2527 = vadd.f32 %v2488, %v2507
      %v2528 = vadd.f32 %v2489, %v2507
      %v2529 = vadd.f32 %v2490, %v2507
      %v2530 = vadd.f32 %v2491, %v2507
      %v2531 = vadd.f32 %v2492, %v2507
      %v2532 = vadd.f32 %v2493, %v2507
      %v2533 = vadd.f32 %v2494, %v2507
      %v2534 = vadd.f32 %v2495, %v2507
      %v2535 = vadd.f32 %v2496, %v2507
      %v2536 = vadd.f32 %v2497, %v2507
      %v2537 = vadd.f32 %v2498, %v2507
      %v2538 = vadd.f32 %v2499, %v2507
      %v2539 = vadd.f32 %v2500, %v2507
      %v2540 = vadd.f32 %v2501, %v2507
      %v2541 = vxor.u32 %v2509, 2147483648
      %v2542 = vxor.u32 %v2510, 2147483648
      %v2543 = vxor.u32 %v2511, 2147483648
      %v2544 = vxor.u32 %v2512, 2147483648
      %v2545 = vxor.u32 %v2513, 2147483648
      %v2546 = vxor.u32 %v2514, 2147483648
      %v2547 = vxor.u32 %v2515, 2147483648
      %v2548 = vxor.u32 %v2516, 2147483648
      %v2549 = vxor.u32 %v2517, 2147483648
      %v2550 = vxor.u32 %v2518, 2147483648
      %v2551 = vxor.u32 %v2519, 2147483648
      %v2552 = vxor.u32 %v2520, 2147483648
      %v2553 = vxor.u32 %v2521, 2147483648
      %v2554 = vxor.u32 %v2522, 2147483648
      %v2555 = vxor.u32 %v2523, 2147483648
      %v2556 = vxor.u32 %v2524, 2147483648
      %v2557 = vxor.u32 %v2525, 2147483648
      %v2558 = vxor.u32 %v2526, 2147483648
      %v2559 = vxor.u32 %v2527, 2147483648
      %v2560 = vxor.u32 %v2528, 2147483648
      %v2561 = vxor.u32 %v2529, 2147483648
      %v2562 = vxor.u32 %v2530, 2147483648
      %v2563 = vxor.u32 %v2531, 2147483648
      %v2564 = vxor.u32 %v2532, 2147483648
      %v2565 = vxor.u32 %v2533, 2147483648
      %v2566 = vxor.u32 %v2534, 2147483648
      %v2567 = vxor.u32 %v2535, 2147483648
      %v2568 = vxor.u32 %v2536, 2147483648
      %v2569 = vxor.u32 %v2537, 2147483648
      %v2570 = vxor.u32 %v2538, 2147483648
      %v2571 = vxor.u32 %v2539, 2147483648
      %v2572 = vxor.u32 %v2540, 2147483648
      %v2573 = vmul.f32 %v2541, 1.442695
      %v2574 = vpow.pop %v2573
      %v2575 = vmul.f32 %v2542, 1.442695
      %v2576 = vpow.pop %v2575
      %v2577 = vmul.f32 %v2543, 1.442695
      %v2578 = vpow.pop %v2577
      %v2579 = vmul.f32 %v2544, 1.442695
      %v2580 = vpow.pop %v2579
      %v2581 = vmul.f32 %v2545, 1.442695
      %v2582 = vpow.pop %v2581
      %v2583 = vmul.f32 %v2546, 1.442695
      %v2584 = vpow.pop %v2583
      %v2585 = vmul.f32 %v2547, 1.442695
      %v2586 = vpow.pop %v2585
      %v2587 = vmul.f32 %v2548, 1.442695
      %v2588 = vpow.pop %v2587
      %v2589 = vmul.f32 %v2549, 1.442695
      %v2590 = vpow.pop %v2589
      %v2591 = vmul.f32 %v2550, 1.442695
      %v2592 = vpow.pop %v2591
      %v2593 = vmul.f32 %v2551, 1.442695
      %v2594 = vpow.pop %v2593
      %v2595 = vmul.f32 %v2552, 1.442695
      %v2596 = vpow.pop %v2595
      %v2597 = vmul.f32 %v2553, 1.442695
      %v2598 = vpow.pop %v2597
      %v2599 = vmul.f32 %v2554, 1.442695
      %v2600 = vpow.pop %v2599
      %v2601 = vmul.f32 %v2555, 1.442695
      %v2602 = vpow.pop %v2601
      %v2603 = vmul.f32 %v2556, 1.442695
      %v2604 = vpow.pop %v2603
      %v2605 = vmul.f32 %v2557, 1.442695
      %v2606 = vpow.pop %v2605
      %v2607 = vmul.f32 %v2558, 1.442695
      %v2608 = vpow.pop %v2607
      %v2609 = vmul.f32 %v2559, 1.442695
      %v2610 = vpow.pop %v2609
      %v2611 = vmul.f32 %v2560, 1.442695
      %v2612 = vpow.pop %v2611
      %v2613 = vmul.f32 %v2561, 1.442695
      %v2614 = vpow.pop %v2613
      %v2615 = vmul.f32 %v2562, 1.442695
      %v2616 = vpow.pop %v2615
      %v2617 = vmul.f32 %v2563, 1.442695
      %v2618 = vpow.pop %v2617
      %v2619 = vmul.f32 %v2564, 1.442695
      %v2620 = vpow.pop %v2619
      %v2621 = vmul.f32 %v2565, 1.442695
      %v2622 = vpow.pop %v2621
      %v2623 = vmul.f32 %v2566, 1.442695
      %v2624 = vpow.pop %v2623
      %v2625 = vmul.f32 %v2567, 1.442695
      %v2626 = vpow.pop %v2625
      %v2627 = vmul.f32 %v2568, 1.442695
      %v2628 = vpow.pop %v2627
      %v2629 = vmul.f32 %v2569, 1.442695
      %v2630 = vpow.pop %v2629
      %v2631 = vmul.f32 %v2570, 1.442695
      %v2632 = vpow.pop %v2631
      %v2633 = vmul.f32 %v2571, 1.442695
      %v2634 = vpow.pop %v2633
      %v2635 = vmul.f32 %v2572, 1.442695
      %v2636 = vpow.pop %v2635
      %v2637 = vadd.f32 %v2574, 1.0
      %v2638 = vadd.f32 %v2576, 1.0
      %v2639 = vadd.f32 %v2578, 1.0
      %v2640 = vadd.f32 %v2580, 1.0
      %v2641 = vadd.f32 %v2582, 1.0
      %v2642 = vadd.f32 %v2584, 1.0
      %v2643 = vadd.f32 %v2586, 1.0
      %v2644 = vadd.f32 %v2588, 1.0
      %v2645 = vadd.f32 %v2590, 1.0
      %v2646 = vadd.f32 %v2592, 1.0
      %v2647 = vadd.f32 %v2594, 1.0
      %v2648 = vadd.f32 %v2596, 1.0
      %v2649 = vadd.f32 %v2598, 1.0
      %v2650 = vadd.f32 %v2600, 1.0
      %v2651 = vadd.f32 %v2602, 1.0
      %v2652 = vadd.f32 %v2604, 1.0
      %v2653 = vadd.f32 %v2606, 1.0
      %v2654 = vadd.f32 %v2608, 1.0
      %v2655 = vadd.f32 %v2610, 1.0
      %v2656 = vadd.f32 %v2612, 1.0
      %v2657 = vadd.f32 %v2614, 1.0
      %v2658 = vadd.f32 %v2616, 1.0
      %v2659 = vadd.f32 %v2618, 1.0
      %v2660 = vadd.f32 %v2620, 1.0
      %v2661 = vadd.f32 %v2622, 1.0
      %v2662 = vadd.f32 %v2624, 1.0
      %v2663 = vadd.f32 %v2626, 1.0
      %v2664 = vadd.f32 %v2628, 1.0
      %v2665 = vadd.f32 %v2630, 1.0
      %v2666 = vadd.f32 %v2632, 1.0
      %v2667 = vadd.f32 %v2634, 1.0
      %v2668 = vadd.f32 %v2636, 1.0
      %v2669 = vrcp.pop %v2637
      %v2670 = vmul.f32 1.0, %v2669
      %v2671 = vrcp.pop %v2638
      %v2672 = vmul.f32 1.0, %v2671
      %v2673 = vrcp.pop %v2639
      %v2674 = vmul.f32 1.0, %v2673
      %v2675 = vrcp.pop %v2640
      %v2676 = vmul.f32 1.0, %v2675
      %v2677 = vrcp.pop %v2641
      %v2678 = vmul.f32 1.0, %v2677
      %v2679 = vrcp.pop %v2642
      %v2680 = vmul.f32 1.0, %v2679
      %v2681 = vrcp.pop %v2643
      %v2682 = vmul.f32 1.0, %v2681
      %v2683 = vrcp.pop %v2644
      %v2684 = vmul.f32 1.0, %v2683
      %v2685 = vrcp.pop %v2645
      %v2686 = vmul.f32 1.0, %v2685
      %v2687 = vrcp.pop %v2646
      %v2688 = vmul.f32 1.0, %v2687
      %v2689 = vrcp.pop %v2647
      %v2690 = vmul.f32 1.0, %v2689
      %v2691 = vrcp.pop %v2648
      %v2692 = vmul.f32 1.0, %v2691
      %v2693 = vrcp.pop %v2649
      %v2694 = vmul.f32 1.0, %v2693
      %v2695 = vrcp.pop %v2650
      %v2696 = vmul.f32 1.0, %v2695
      %v2697 = vrcp.pop %v2651
      %v2698 = vmul.f32 1.0, %v2697
      %v2699 = vrcp.pop %v2652
      %v2700 = vmul.f32 1.0, %v2699
      %v2701 = vrcp.pop %v2653
      %v2702 = vmul.f32 1.0, %v2701
      %v2703 = vrcp.pop %v2654
      %v2704 = vmul.f32 1.0, %v2703
      %v2705 = vrcp.pop %v2655
      %v2706 = vmul.f32 1.0, %v2705
      %v2707 = vrcp.pop %v2656
      %v2708 = vmul.f32 1.0, %v2707
      %v2709 = vrcp.pop %v2657
      %v2710 = vmul.f32 1.0, %v2709
      %v2711 = vrcp.pop %v2658
      %v2712 = vmul.f32 1.0, %v2711
      %v2713 = vrcp.pop %v2659
      %v2714 = vmul.f32 1.0, %v2713
      %v2715 = vrcp.pop %v2660
      %v2716 = vmul.f32 1.0, %v2715
      %v2717 = vrcp.pop %v2661
      %v2718 = vmul.f32 1.0, %v2717
      %v2719 = vrcp.pop %v2662
      %v2720 = vmul.f32 1.0, %v2719
      %v2721 = vrcp.pop %v2663
      %v2722 = vmul.f32 1.0, %v2721
      %v2723 = vrcp.pop %v2664
      %v2724 = vmul.f32 1.0, %v2723
      %v2725 = vrcp.pop %v2665
      %v2726 = vmul.f32 1.0, %v2725
      %v2727 = vrcp.pop %v2666
      %v2728 = vmul.f32 1.0, %v2727
      %v2729 = vrcp.pop %v2667
      %v2730 = vmul.f32 1.0, %v2729
      %v2731 = vrcp.pop %v2668
      %v2732 = vmul.f32 1.0, %v2731
      %v2733 = vmul.f32 %v2509, %v2670
      %v2734 = vmul.f32 %v2510, %v2672
      %v2735 = vmul.f32 %v2511, %v2674
      %v2736 = vmul.f32 %v2512, %v2676
      %v2737 = vmul.f32 %v2513, %v2678
      %v2738 = vmul.f32 %v2514, %v2680
      %v2739 = vmul.f32 %v2515, %v2682
      %v2740 = vmul.f32 %v2516, %v2684
      %v2741 = vmul.f32 %v2517, %v2686
      %v2742 = vmul.f32 %v2518, %v2688
      %v2743 = vmul.f32 %v2519, %v2690
      %v2744 = vmul.f32 %v2520, %v2692
      %v2745 = vmul.f32 %v2521, %v2694
      %v2746 = vmul.f32 %v2522, %v2696
      %v2747 = vmul.f32 %v2523, %v2698
      %v2748 = vmul.f32 %v2524, %v2700
      %v2749 = vmul.f32 %v2525, %v2702
      %v2750 = vmul.f32 %v2526, %v2704
      %v2751 = vmul.f32 %v2527, %v2706
      %v2752 = vmul.f32 %v2528, %v2708
      %v2753 = vmul.f32 %v2529, %v2710
      %v2754 = vmul.f32 %v2530, %v2712
      %v2755 = vmul.f32 %v2531, %v2714
      %v2756 = vmul.f32 %v2532, %v2716
      %v2757 = vmul.f32 %v2533, %v2718
      %v2758 = vmul.f32 %v2534, %v2720
      %v2759 = vmul.f32 %v2535, %v2722
      %v2760 = vmul.f32 %v2536, %v2724
      %v2761 = vmul.f32 %v2537, %v2726
      %v2762 = vmul.f32 %v2538, %v2728
      %v2763 = vmul.f32 %v2539, %v2730
      %v2764 = vmul.f32 %v2540, %v2732
      %2765 = vst [vmem:[#allocation2] sm:$0xf] 0
      %2766 = vst [vmem:[#allocation2 + $0x4] sm:$0xf] 0
      %2767 = vst [vmem:[#allocation2 + $0x8] sm:$0x1] 0
      %2768 = vst [vmem:[#allocation2 + $0xc] sm:$0xf] 0
      %2769 = vst [vmem:[#allocation2 + $0x10] sm:$0xf] 0
      %2770 = vst [vmem:[#allocation2 + $0x14] sm:$0x1] 0
      %2771 = vst [vmem:[#allocation2 + $0x18] sm:$0xf] 0
      %2772 = vst [vmem:[#allocation2 + $0x1c] sm:$0xf] 0
      %2773 = vst [vmem:[#allocation2 + $0x20] sm:$0x1] 0
      %2774 = vst [vmem:[#allocation2 + $0x24] sm:$0xf] 0
      %2775 = vst [vmem:[#allocation2 + $0x28] sm:$0xf] 0
      %2776 = vst [vmem:[#allocation2 + $0x2c] sm:$0x1] 0
      %2777 = vst [vmem:[#allocation2 + $0x30] sm:$0xf] 0
      %2778 = vst [vmem:[#allocation2 + $0x34] sm:$0xf] 0
      %2779 = vst [vmem:[#allocation2 + $0x38] sm:$0x1] 0
      %2780 = vst [vmem:[#allocation2 + $0x3c] sm:$0xf] 0
      %2781 = vst [vmem:[#allocation2 + $0x40] sm:$0xf] 0
      %2782 = vst [vmem:[#allocation2 + $0x44] sm:$0x1] 0
      %2783 = vst [vmem:[#allocation2 + $0x48] sm:$0xf] 0
      %2784 = vst [vmem:[#allocation2 + $0x4c] sm:$0xf] 0
      %2785 = vst [vmem:[#allocation2 + $0x50] sm:$0x1] 0
      %2786 = vst [vmem:[#allocation2 + $0x54] sm:$0xf] 0
      %2787 = vst [vmem:[#allocation2 + $0x58] sm:$0xf] 0
      %2788 = vst [vmem:[#allocation2 + $0x5c] sm:$0x1] 0
      %2789 = vst [vmem:[#allocation2 + $0x60] sm:$0xf] 0
      %2790 = vst [vmem:[#allocation2 + $0x64] sm:$0xf] 0
      %2791 = vst [vmem:[#allocation2 + $0x68] sm:$0x1] 0
      %2792 = vst [vmem:[#allocation2 + $0x6c] sm:$0xf] 0
      %2793 = vst [vmem:[#allocation2 + $0x70] sm:$0xf] 0
      %2794 = vst [vmem:[#allocation2 + $0x74] sm:$0x1] 0
      %2795 = vst [vmem:[#allocation2 + $0x78] sm:$0xf] 0
      %2796 = vst [vmem:[#allocation2 + $0x7c] sm:$0xf] 0
      %2797 = vst [vmem:[#allocation2 + $0x80] sm:$0x1] 0
      %2798 = vst [vmem:[#allocation2 + $0x84] sm:$0xf] 0
      %2799 = vst [vmem:[#allocation2 + $0x88] sm:$0xf] 0
      %2800 = vst [vmem:[#allocation2 + $0x8c] sm:$0x1] 0
      %2801 = vst [vmem:[#allocation2 + $0x90] sm:$0xf] 0
      %2802 = vst [vmem:[#allocation2 + $0x94] sm:$0xf] 0
      %2803 = vst [vmem:[#allocation2 + $0x98] sm:$0x1] 0
      %2804 = vst [vmem:[#allocation2 + $0x9c] sm:$0xf] 0
      %2805 = vst [vmem:[#allocation2 + $0xa0] sm:$0xf] 0
      %2806 = vst [vmem:[#allocation2 + $0xa4] sm:$0x1] 0
      %2807 = vst [vmem:[#allocation2 + $0xa8] sm:$0xf] 0
      %2808 = vst [vmem:[#allocation2 + $0xac] sm:$0xf] 0
      %2809 = vst [vmem:[#allocation2 + $0xb0] sm:$0x1] 0
      %2810 = vst [vmem:[#allocation2 + $0xb4] sm:$0xf] 0
      %2811 = vst [vmem:[#allocation2 + $0xb8] sm:$0xf] 0
      %2812 = vst [vmem:[#allocation2 + $0xbc] sm:$0x1] 0
      %2813 = vst [vmem:[#allocation2 + $0xc0] sm:$0xf] 0
      %2814 = vst [vmem:[#allocation2 + $0xc4] sm:$0xf] 0
      %2815 = vst [vmem:[#allocation2 + $0xc8] sm:$0x1] 0
      %2816 = vst [vmem:[#allocation2 + $0xcc] sm:$0xf] 0
      %2817 = vst [vmem:[#allocation2 + $0xd0] sm:$0xf] 0
      %2818 = vst [vmem:[#allocation2 + $0xd4] sm:$0x1] 0
      %v2819 = vpack.c.bf16 %v2734, %v2733
      %v2820 = vpack.c.bf16 %v2736, %v2735
      %v2821 = vpack.c.bf16 %v2738, %v2737
      %v2822 = vpack.c.bf16 %v2740, %v2739
      %v2823 = vpack.c.bf16 %v2742, %v2741
      %v2824 = vpack.c.bf16 %v2744, %v2743
      %v2825 = vpack.c.bf16 %v2746, %v2745
      %v2826 = vpack.c.bf16 %v2748, %v2747
      %v2827 = vpack.c.bf16 %v2750, %v2749
      %v2828 = vpack.c.bf16 %v2752, %v2751
      %v2829 = vpack.c.bf16 %v2754, %v2753
      %v2830 = vpack.c.bf16 %v2756, %v2755
      %v2831 = vpack.c.bf16 %v2758, %v2757
      %v2832 = vpack.c.bf16 %v2760, %v2759
      %v2833 = vpack.c.bf16 %v2762, %v2761
      %v2834 = vpack.c.bf16 %v2764, %v2763
      %v2851 = vunpack.c.l.b16 %v2819
      %v2852 = vunpack.c.h.b16 %v2819
      %v2853 = vunpack.c.l.b16 %v2820
      %v2854 = vunpack.c.h.b16 %v2820
      %v2855 = vunpack.c.l.b16 %v2821
      %v2856 = vunpack.c.h.b16 %v2821
      %v2857 = vunpack.c.l.b16 %v2822
      %v2858 = vunpack.c.h.b16 %v2822
      %v2859 = vunpack.c.l.b16 %v2823
      %v2860 = vunpack.c.h.b16 %v2823
      %v2861 = vunpack.c.l.b16 %v2824
      %v2862 = vunpack.c.h.b16 %v2824
      %v2863 = vunpack.c.l.b16 %v2825
      %v2864 = vunpack.c.h.b16 %v2825
      %v2865 = vunpack.c.l.b16 %v2826
      %v2866 = vunpack.c.h.b16 %v2826
      %v2867 = vunpack.c.l.b16 %v2827
      %v2868 = vunpack.c.h.b16 %v2827
      %v2869 = vunpack.c.l.b16 %v2828
      %v2870 = vunpack.c.h.b16 %v2828
      %v2871 = vunpack.c.l.b16 %v2829
      %v2872 = vunpack.c.h.b16 %v2829
      %v2873 = vunpack.c.l.b16 %v2830
      %v2874 = vunpack.c.h.b16 %v2830
      %v2875 = vunpack.c.l.b16 %v2831
      %v2876 = vunpack.c.h.b16 %v2831
      %v2877 = vunpack.c.l.b16 %v2832
      %v2878 = vunpack.c.h.b16 %v2832
      %v2879 = vunpack.c.l.b16 %v2833
      %v2880 = vunpack.c.h.b16 %v2833
      %v2881 = vunpack.c.l.b16 %v2834
      %v2882 = vunpack.c.h.b16 %v2834
      %v2883 = vpack.c.b16 %v2851, %v2851
      %v2884 = vpack.c.b16 %v2852, %v2852
      %v2885 = vpack.c.b16 %v2853, %v2853
      %v2886 = vpack.c.b16 %v2854, %v2854
      %v2887 = vpack.c.b16 %v2855, %v2855
      %v2888 = vpack.c.b16 %v2856, %v2856
      %v2889 = vpack.c.b16 %v2857, %v2857
      %v2890 = vpack.c.b16 %v2858, %v2858
      %v2891 = vpack.c.b16 %v2859, %v2859
      %v2892 = vpack.c.b16 %v2860, %v2860
      %v2893 = vpack.c.b16 %v2861, %v2861
      %v2894 = vpack.c.b16 %v2862, %v2862
      %v2895 = vpack.c.b16 %v2863, %v2863
      %v2896 = vpack.c.b16 %v2864, %v2864
      %v2897 = vpack.c.b16 %v2865, %v2865
      %v2898 = vpack.c.b16 %v2866, %v2866
      %v2899 = vpack.c.b16 %v2867, %v2867
      %v2900 = vpack.c.b16 %v2868, %v2868
      %v2901 = vpack.c.b16 %v2869, %v2869
      %v2902 = vpack.c.b16 %v2870, %v2870
      %v2903 = vpack.c.b16 %v2871, %v2871
      %v2904 = vpack.c.b16 %v2872, %v2872
      %v2905 = vpack.c.b16 %v2873, %v2873
      %v2906 = vpack.c.b16 %v2874, %v2874
      %v2907 = vpack.c.b16 %v2875, %v2875
      %v2908 = vpack.c.b16 %v2876, %v2876
      %v2909 = vpack.c.b16 %v2877, %v2877
      %v2910 = vpack.c.b16 %v2878, %v2878
      %v2911 = vpack.c.b16 %v2879, %v2879
      %v2912 = vpack.c.b16 %v2880, %v2880
      %v2913 = vpack.c.b16 %v2881, %v2881
      %v2914 = vpack.c.b16 %v2882, %v2882
      %vm2915 = vsmask.f32 256
      %vm2916 = vsmask.f32 4368
      %vm2917 = vmor %vm2915, %vm2916
      %v2919 = vshrl.u32 %v2883, 16
      %v2921 = vrot.slane %v2919, 7
      %v2922 = vshll.u32 %v2883, 16
      %v2924 = vor.u32 %v2921, %v2922
      %v2925 = vrot.slane %v2921, 4
      %v2927 = vshrl.u32 %v2884, 16
      %v2929 = vrot.slane %v2927, 7
      %v2930 = vshll.u32 %v2884, 16
      %v2932 = vor.u32 %v2929, %v2930
      %v2933 = vsel %vm2917, %v2925, %v2932
      %v2934 = vrot.slane %v2929, 4
      %v2936 = vshrl.u32 %v2885, 16
      %v2938 = vrot.slane %v2936, 7
      %v2939 = vshll.u32 %v2885, 16
      %v2941 = vor.u32 %v2938, %v2939
      %v2942 = vrot.slane %v2938, 4
      %v2944 = vshrl.u32 %v2886, 16
      %v2946 = vrot.slane %v2944, 7
      %v2947 = vshll.u32 %v2886, 16
      %v2949 = vor.u32 %v2946, %v2947
      %v2950 = vsel %vm2917, %v2942, %v2949
      %v2951 = vrot.slane %v2946, 4
      %v2953 = vshrl.u32 %v2887, 16
      %v2955 = vrot.slane %v2953, 7
      %v2956 = vshll.u32 %v2887, 16
      %v2958 = vor.u32 %v2955, %v2956
      %v2959 = vrot.slane %v2955, 4
      %v2961 = vshrl.u32 %v2888, 16
      %v2963 = vrot.slane %v2961, 7
      %v2964 = vshll.u32 %v2888, 16
      %v2966 = vor.u32 %v2963, %v2964
      %v2967 = vsel %vm2917, %v2959, %v2966
      %v2968 = vrot.slane %v2963, 4
      %v2970 = vshrl.u32 %v2889, 16
      %v2972 = vrot.slane %v2970, 7
      %v2973 = vshll.u32 %v2889, 16
      %v2975 = vor.u32 %v2972, %v2973
      %v2976 = vrot.slane %v2972, 4
      %v2978 = vshrl.u32 %v2890, 16
      %v2980 = vrot.slane %v2978, 7
      %v2981 = vshll.u32 %v2890, 16
      %v2983 = vor.u32 %v2980, %v2981
      %v2984 = vsel %vm2917, %v2976, %v2983
      %v2985 = vrot.slane %v2980, 4
      %v2987 = vshrl.u32 %v2891, 16
      %v2989 = vrot.slane %v2987, 7
      %v2990 = vshll.u32 %v2891, 16
      %v2992 = vor.u32 %v2989, %v2990
      %v2993 = vrot.slane %v2989, 4
      %v2995 = vshrl.u32 %v2892, 16
      %v2997 = vrot.slane %v2995, 7
      %v2998 = vshll.u32 %v2892, 16
      %v3000 = vor.u32 %v2997, %v2998
      %v3001 = vsel %vm2917, %v2993, %v3000
      %v3002 = vrot.slane %v2997, 4
      %v3004 = vshrl.u32 %v2893, 16
      %v3006 = vrot.slane %v3004, 7
      %v3007 = vshll.u32 %v2893, 16
      %v3009 = vor.u32 %v3006, %v3007
      %v3010 = vrot.slane %v3006, 4
      %v3012 = vshrl.u32 %v2894, 16
      %v3014 = vrot.slane %v3012, 7
      %v3015 = vshll.u32 %v2894, 16
      %v3017 = vor.u32 %v3014, %v3015
      %v3018 = vsel %vm2917, %v3010, %v3017
      %v3019 = vrot.slane %v3014, 4
      %v3021 = vshrl.u32 %v2895, 16
      %v3023 = vrot.slane %v3021, 7
      %v3024 = vshll.u32 %v2895, 16
      %v3026 = vor.u32 %v3023, %v3024
      %v3027 = vrot.slane %v3023, 4
      %v3029 = vshrl.u32 %v2896, 16
      %v3031 = vrot.slane %v3029, 7
      %v3032 = vshll.u32 %v2896, 16
      %v3034 = vor.u32 %v3031, %v3032
      %v3035 = vsel %vm2917, %v3027, %v3034
      %v3036 = vrot.slane %v3031, 4
      %v3038 = vshrl.u32 %v2897, 16
      %v3040 = vrot.slane %v3038, 7
      %v3041 = vshll.u32 %v2897, 16
      %v3043 = vor.u32 %v3040, %v3041
      %v3044 = vrot.slane %v3040, 4
      %v3046 = vshrl.u32 %v2898, 16
      %v3048 = vrot.slane %v3046, 7
      %v3049 = vshll.u32 %v2898, 16
      %v3051 = vor.u32 %v3048, %v3049
      %v3052 = vsel %vm2917, %v3044, %v3051
      %v3053 = vrot.slane %v3048, 4
      %v3055 = vshrl.u32 %v2899, 16
      %v3057 = vrot.slane %v3055, 7
      %v3058 = vshll.u32 %v2899, 16
      %v3060 = vor.u32 %v3057, %v3058
      %v3061 = vrot.slane %v3057, 4
      %v3063 = vshrl.u32 %v2900, 16
      %v3065 = vrot.slane %v3063, 7
      %v3066 = vshll.u32 %v2900, 16
      %v3068 = vor.u32 %v3065, %v3066
      %v3069 = vsel %vm2917, %v3061, %v3068
      %v3070 = vrot.slane %v3065, 4
      %v3072 = vshrl.u32 %v2901, 16
      %v3074 = vrot.slane %v3072, 7
      %v3075 = vshll.u32 %v2901, 16
      %v3077 = vor.u32 %v3074, %v3075
      %v3078 = vrot.slane %v3074, 4
      %v3080 = vshrl.u32 %v2902, 16
      %v3082 = vrot.slane %v3080, 7
      %v3083 = vshll.u32 %v2902, 16
      %v3085 = vor.u32 %v3082, %v3083
      %v3086 = vsel %vm2917, %v3078, %v3085
      %v3087 = vrot.slane %v3082, 4
      %v3089 = vshrl.u32 %v2903, 16
      %v3091 = vrot.slane %v3089, 7
      %v3092 = vshll.u32 %v2903, 16
      %v3094 = vor.u32 %v3091, %v3092
      %v3095 = vrot.slane %v3091, 4
      %v3097 = vshrl.u32 %v2904, 16
      %v3099 = vrot.slane %v3097, 7
      %v3100 = vshll.u32 %v2904, 16
      %v3102 = vor.u32 %v3099, %v3100
      %v3103 = vsel %vm2917, %v3095, %v3102
      %v3104 = vrot.slane %v3099, 4
      %v3106 = vshrl.u32 %v2905, 16
      %v3108 = vrot.slane %v3106, 7
      %v3109 = vshll.u32 %v2905, 16
      %v3111 = vor.u32 %v3108, %v3109
      %v3112 = vrot.slane %v3108, 4
      %v3114 = vshrl.u32 %v2906, 16
      %v3116 = vrot.slane %v3114, 7
      %v3117 = vshll.u32 %v2906, 16
      %v3119 = vor.u32 %v3116, %v3117
      %v3120 = vsel %vm2917, %v3112, %v3119
      %v3121 = vrot.slane %v3116, 4
      %v3123 = vshrl.u32 %v2907, 16
      %v3125 = vrot.slane %v3123, 7
      %v3126 = vshll.u32 %v2907, 16
      %v3128 = vor.u32 %v3125, %v3126
      %v3129 = vrot.slane %v3125, 4
      %v3131 = vshrl.u32 %v2908, 16
      %v3133 = vrot.slane %v3131, 7
      %v3134 = vshll.u32 %v2908, 16
      %v3136 = vor.u32 %v3133, %v3134
      %v3137 = vsel %vm2917, %v3129, %v3136
      %v3138 = vrot.slane %v3133, 4
      %v3140 = vshrl.u32 %v2909, 16
      %v3142 = vrot.slane %v3140, 7
      %v3143 = vshll.u32 %v2909, 16
      %v3145 = vor.u32 %v3142, %v3143
      %v3146 = vrot.slane %v3142, 4
      %v3148 = vshrl.u32 %v2910, 16
      %v3150 = vrot.slane %v3148, 7
      %v3151 = vshll.u32 %v2910, 16
      %v3153 = vor.u32 %v3150, %v3151
      %v3154 = vsel %vm2917, %v3146, %v3153
      %v3155 = vrot.slane %v3150, 4
      %v3157 = vshrl.u32 %v2911, 16
      %v3159 = vrot.slane %v3157, 7
      %v3160 = vshll.u32 %v2911, 16
      %v3162 = vor.u32 %v3159, %v3160
      %v3163 = vrot.slane %v3159, 4
      %v3165 = vshrl.u32 %v2912, 16
      %v3167 = vrot.slane %v3165, 7
      %v3168 = vshll.u32 %v2912, 16
      %v3170 = vor.u32 %v3167, %v3168
      %v3171 = vsel %vm2917, %v3163, %v3170
      %v3172 = vrot.slane %v3167, 4
      %v3174 = vshrl.u32 %v2913, 16
      %v3176 = vrot.slane %v3174, 7
      %v3177 = vshll.u32 %v2913, 16
      %v3179 = vor.u32 %v3176, %v3177
      %v3180 = vrot.slane %v3176, 4
      %v3182 = vshrl.u32 %v2914, 16
      %v3184 = vrot.slane %v3182, 7
      %v3185 = vshll.u32 %v2914, 16
      %v3187 = vor.u32 %v3184, %v3185
      %v3188 = vsel %vm2917, %v3180, %v3187
      %v3189 = vrot.slane %v3184, 4
      %s3238 = scalar_lea.vmem [#allocation2], 12
      %vm3239 = vcmask 1043456
      %vm3240 = vsmask.f32 7938
      %vm3241 = vmand %vm3239, %vm3240
      %v3242 = vld [vmem:[%s3238] sm:$0xf]
      %v3243 = vsel %vm3241, %v2924, %v3242
      %3244 = vst [vmem:[%s3238] sm:$0xf] %v3243
      %3245 = vst [vmem:[%s3238 + $0x4] sm:$0xf] %v2933
      %vm3246 = vcmask 1040384
      %vm3247 = vmand %vm3246, %vm2915
      %v3248 = vld [vmem:[%s3238 + $0x8] sm:$0x1]
      %v3249 = vsel %vm3247, %v2934, %v3248
      %3250 = vst [vmem:[%s3238 + $0x8] sm:$0x1] %v3249
      %v3251 = vld [vmem:[%s3238 + $0xc] sm:$0xf]
      %v3252 = vsel %vm3241, %v2941, %v3251
      %3253 = vst [vmem:[%s3238 + $0xc] sm:$0xf] %v3252
      %3254 = vst [vmem:[%s3238 + $0x10] sm:$0xf] %v2950
      %v3255 = vld [vmem:[%s3238 + $0x14] sm:$0x1]
      %v3256 = vsel %vm3247, %v2951, %v3255
      %3257 = vst [vmem:[%s3238 + $0x14] sm:$0x1] %v3256
      %v3258 = vld [vmem:[%s3238 + $0x18] sm:$0xf]
      %v3259 = vsel %vm3241, %v2958, %v3258
      %3260 = vst [vmem:[%s3238 + $0x18] sm:$0xf] %v3259
      %3261 = vst [vmem:[%s3238 + $0x1c] sm:$0xf] %v2967
      %v3262 = vld [vmem:[%s3238 + $0x20] sm:$0x1]
      %v3263 = vsel %vm3247, %v2968, %v3262
      %3264 = vst [vmem:[%s3238 + $0x20] sm:$0x1] %v3263
      %v3265 = vld [vmem:[%s3238 + $0x24] sm:$0xf]
      %v3266 = vsel %vm3241, %v2975, %v3265
      %3267 = vst [vmem:[%s3238 + $0x24] sm:$0xf] %v3266
      %3268 = vst [vmem:[%s3238 + $0x28] sm:$0xf] %v2984
      %v3269 = vld [vmem:[%s3238 + $0x2c] sm:$0x1]
      %v3270 = vsel %vm3247, %v2985, %v3269
      %3271 = vst [vmem:[%s3238 + $0x2c] sm:$0x1] %v3270
      %v3272 = vld [vmem:[%s3238 + $0x30] sm:$0xf]
      %v3273 = vsel %vm3241, %v2992, %v3272
      %3274 = vst [vmem:[%s3238 + $0x30] sm:$0xf] %v3273
      %3275 = vst [vmem:[%s3238 + $0x34] sm:$0xf] %v3001
      %v3276 = vld [vmem:[%s3238 + $0x38] sm:$0x1]
      %v3277 = vsel %vm3247, %v3002, %v3276
      %3278 = vst [vmem:[%s3238 + $0x38] sm:$0x1] %v3277
      %v3279 = vld [vmem:[%s3238 + $0x3c] sm:$0xf]
      %v3280 = vsel %vm3241, %v3009, %v3279
      %3281 = vst [vmem:[%s3238 + $0x3c] sm:$0xf] %v3280
      %3282 = vst [vmem:[%s3238 + $0x40] sm:$0xf] %v3018
      %v3283 = vld [vmem:[%s3238 + $0x44] sm:$0x1]
      %v3284 = vsel %vm3247, %v3019, %v3283
      %3285 = vst [vmem:[%s3238 + $0x44] sm:$0x1] %v3284
      %v3286 = vld [vmem:[%s3238 + $0x48] sm:$0xf]
      %v3287 = vsel %vm3241, %v3026, %v3286
      %3288 = vst [vmem:[%s3238 + $0x48] sm:$0xf] %v3287
      %3289 = vst [vmem:[%s3238 + $0x4c] sm:$0xf] %v3035
      %v3290 = vld [vmem:[%s3238 + $0x50] sm:$0x1]
      %v3291 = vsel %vm3247, %v3036, %v3290
      %3292 = vst [vmem:[%s3238 + $0x50] sm:$0x1] %v3291
      %v3293 = vld [vmem:[%s3238 + $0x54] sm:$0xf]
      %v3294 = vsel %vm3241, %v3043, %v3293
      %3295 = vst [vmem:[%s3238 + $0x54] sm:$0xf] %v3294
      %3296 = vst [vmem:[%s3238 + $0x58] sm:$0xf] %v3052
      %v3297 = vld [vmem:[%s3238 + $0x5c] sm:$0x1]
      %v3298 = vsel %vm3247, %v3053, %v3297
      %3299 = vst [vmem:[%s3238 + $0x5c] sm:$0x1] %v3298
      %v3300 = vld [vmem:[%s3238 + $0x60] sm:$0xf]
      %v3301 = vsel %vm3241, %v3060, %v3300
      %3302 = vst [vmem:[%s3238 + $0x60] sm:$0xf] %v3301
      %3303 = vst [vmem:[%s3238 + $0x64] sm:$0xf] %v3069
      %v3304 = vld [vmem:[%s3238 + $0x68] sm:$0x1]
      %v3305 = vsel %vm3247, %v3070, %v3304
      %3306 = vst [vmem:[%s3238 + $0x68] sm:$0x1] %v3305
      %v3307 = vld [vmem:[%s3238 + $0x6c] sm:$0xf]
      %v3308 = vsel %vm3241, %v3077, %v3307
      %3309 = vst [vmem:[%s3238 + $0x6c] sm:$0xf] %v3308
      %3310 = vst [vmem:[%s3238 + $0x70] sm:$0xf] %v3086
      %v3311 = vld [vmem:[%s3238 + $0x74] sm:$0x1]
      %v3312 = vsel %vm3247, %v3087, %v3311
      %3313 = vst [vmem:[%s3238 + $0x74] sm:$0x1] %v3312
      %v3314 = vld [vmem:[%s3238 + $0x78] sm:$0xf]
      %v3315 = vsel %vm3241, %v3094, %v3314
      %3316 = vst [vmem:[%s3238 + $0x78] sm:$0xf] %v3315
      %3317 = vst [vmem:[%s3238 + $0x7c] sm:$0xf] %v3103
      %v3318 = vld [vmem:[%s3238 + $0x80] sm:$0x1]
      %v3319 = vsel %vm3247, %v3104, %v3318
      %3320 = vst [vmem:[%s3238 + $0x80] sm:$0x1] %v3319
      %v3321 = vld [vmem:[%s3238 + $0x84] sm:$0xf]
      %v3322 = vsel %vm3241, %v3111, %v3321
      %3323 = vst [vmem:[%s3238 + $0x84] sm:$0xf] %v3322
      %3324 = vst [vmem:[%s3238 + $0x88] sm:$0xf] %v3120
      %v3325 = vld [vmem:[%s3238 + $0x8c] sm:$0x1]
      %v3326 = vsel %vm3247, %v3121, %v3325
      %3327 = vst [vmem:[%s3238 + $0x8c] sm:$0x1] %v3326
      %v3328 = vld [vmem:[%s3238 + $0x90] sm:$0xf]
      %v3329 = vsel %vm3241, %v3128, %v3328
      %3330 = vst [vmem:[%s3238 + $0x90] sm:$0xf] %v3329
      %3331 = vst [vmem:[%s3238 + $0x94] sm:$0xf] %v3137
      %v3332 = vld [vmem:[%s3238 + $0x98] sm:$0x1]
      %v3333 = vsel %vm3247, %v3138, %v3332
      %3334 = vst [vmem:[%s3238 + $0x98] sm:$0x1] %v3333
      %v3335 = vld [vmem:[%s3238 + $0x9c] sm:$0xf]
      %v3336 = vsel %vm3241, %v3145, %v3335
      %3337 = vst [vmem:[%s3238 + $0x9c] sm:$0xf] %v3336
      %3338 = vst [vmem:[%s3238 + $0xa0] sm:$0xf] %v3154
      %v3339 = vld [vmem:[%s3238 + $0xa4] sm:$0x1]
      %v3340 = vsel %vm3247, %v3155, %v3339
      %3341 = vst [vmem:[%s3238 + $0xa4] sm:$0x1] %v3340
      %v3342 = vld [vmem:[%s3238 + $0xa8] sm:$0xf]
      %v3343 = vsel %vm3241, %v3162, %v3342
      %3344 = vst [vmem:[%s3238 + $0xa8] sm:$0xf] %v3343
      %3345 = vst [vmem:[%s3238 + $0xac] sm:$0xf] %v3171
      %v3346 = vld [vmem:[%s3238 + $0xb0] sm:$0x1]
      %v3347 = vsel %vm3247, %v3172, %v3346
      %3348 = vst [vmem:[%s3238 + $0xb0] sm:$0x1] %v3347
      %v3349 = vld [vmem:[%s3238 + $0xb4] sm:$0xf]
      %v3350 = vsel %vm3241, %v3179, %v3349
      %3351 = vst [vmem:[%s3238 + $0xb4] sm:$0xf] %v3350
      %3352 = vst [vmem:[%s3238 + $0xb8] sm:$0xf] %v3188
      %v3353 = vld [vmem:[%s3238 + $0xbc] sm:$0x1]
      %v3354 = vsel %vm3247, %v3189, %v3353
      %3355 = vst [vmem:[%s3238 + $0xbc] sm:$0x1] %v3354
      %v3356 = vld [vmem:[#allocation2] sm:$0xf]
      %v3357 = vld [vmem:[#allocation2 + $0x4] sm:$0xf]
      %v3358 = vld [vmem:[#allocation2 + $0xc] sm:$0xf]
      %v3359 = vld [vmem:[#allocation2 + $0x10] sm:$0xf]
      %v3360 = vld [vmem:[#allocation2 + $0x18] sm:$0xf]
      %v3361 = vld [vmem:[#allocation2 + $0x1c] sm:$0xf]
      %v3362 = vld [vmem:[#allocation2 + $0x24] sm:$0xf]
      %v3363 = vld [vmem:[#allocation2 + $0x28] sm:$0xf]
      %v3364 = vld [vmem:[#allocation2 + $0x30] sm:$0xf]
      %v3365 = vld [vmem:[#allocation2 + $0x34] sm:$0xf]
      %v3366 = vld [vmem:[#allocation2 + $0x3c] sm:$0xf]
      %v3367 = vld [vmem:[#allocation2 + $0x40] sm:$0xf]
      %v3368 = vld [vmem:[#allocation2 + $0x48] sm:$0xf]
      %v3369 = vld [vmem:[#allocation2 + $0x4c] sm:$0xf]
      %v3370 = vld [vmem:[#allocation2 + $0x54] sm:$0xf]
      %v3371 = vld [vmem:[#allocation2 + $0x58] sm:$0xf]
      %v3372 = vld [vmem:[#allocation2 + $0x60] sm:$0xf]
      %v3373 = vld [vmem:[#allocation2 + $0x64] sm:$0xf]
      %v3374 = vld [vmem:[#allocation2 + $0x6c] sm:$0xf]
      %v3375 = vld [vmem:[#allocation2 + $0x70] sm:$0xf]
      %v3376 = vld [vmem:[#allocation2 + $0x78] sm:$0xf]
      %v3377 = vld [vmem:[#allocation2 + $0x7c] sm:$0xf]
      %v3378 = vld [vmem:[#allocation2 + $0x84] sm:$0xf]
      %v3379 = vld [vmem:[#allocation2 + $0x88] sm:$0xf]
      %v3380 = vld [vmem:[#allocation2 + $0x90] sm:$0xf]
      %v3381 = vld [vmem:[#allocation2 + $0x94] sm:$0xf]
      %v3382 = vld [vmem:[#allocation2 + $0x9c] sm:$0xf]
      %v3383 = vld [vmem:[#allocation2 + $0xa0] sm:$0xf]
      %v3384 = vld [vmem:[#allocation2 + $0xa8] sm:$0xf]
      %v3385 = vld [vmem:[#allocation2 + $0xac] sm:$0xf]
      %v3386 = vld [vmem:[#allocation2 + $0xb4] sm:$0xf]
      %v3387 = vld [vmem:[#allocation2 + $0xb8] sm:$0xf]
      %v3388 = vld [vmem:[#allocation2 + $0xc0] sm:$0xf]
      %v3389 = vld [vmem:[#allocation2 + $0xc4] sm:$0xf]
      %v3390 = vld [vmem:[#allocation2 + $0xcc] sm:$0xf]
      %v3391 = vld [vmem:[#allocation2 + $0xd0] sm:$0xf]
      %v3392 = vld [vmem:[#allocation2 + $0x8] sm:$0x1]
      %v3393 = vld [vmem:[#allocation2 + $0x14] sm:$0x1]
      %v3394 = vld [vmem:[#allocation2 + $0x20] sm:$0x1]
      %v3395 = vld [vmem:[#allocation2 + $0x2c] sm:$0x1]
      %v3396 = vld [vmem:[#allocation2 + $0x38] sm:$0x1]
      %v3397 = vld [vmem:[#allocation2 + $0x44] sm:$0x1]
      %v3398 = vld [vmem:[#allocation2 + $0x50] sm:$0x1]
      %v3399 = vld [vmem:[#allocation2 + $0x5c] sm:$0x1]
      %v3400 = vld [vmem:[#allocation2 + $0x68] sm:$0x1]
      %v3401 = vld [vmem:[#allocation2 + $0x74] sm:$0x1]
      %v3402 = vld [vmem:[#allocation2 + $0x80] sm:$0x1]
      %v3403 = vld [vmem:[#allocation2 + $0x8c] sm:$0x1]
      %v3404 = vld [vmem:[#allocation2 + $0x98] sm:$0x1]
      %v3405 = vld [vmem:[#allocation2 + $0xa4] sm:$0x1]
      %v3406 = vld [vmem:[#allocation2 + $0xb0] sm:$0x1]
      %v3407 = vld [vmem:[#allocation2 + $0xbc] sm:$0x1]
      %v3408 = vld [vmem:[#allocation2 + $0xc8] sm:$0x1]
      %v3409 = vld [vmem:[#allocation2 + $0xd4] sm:$0x1]
      %v3410 = vld [vmem:[#allocation2] sm:$0xe]
      %v3411 = vld [vmem:[#allocation2 + $0xc] sm:$0xe]
      %v3412 = vld [vmem:[#allocation2 + $0x18] sm:$0xe]
      %v3413 = vld [vmem:[#allocation2 + $0x24] sm:$0xe]
      %v3414 = vld [vmem:[#allocation2 + $0x30] sm:$0xe]
      %v3415 = vld [vmem:[#allocation2 + $0x3c] sm:$0xe]
      %v3416 = vld [vmem:[#allocation2 + $0x48] sm:$0xe]
      %v3417 = vld [vmem:[#allocation2 + $0x54] sm:$0xe]
      %v3418 = vld [vmem:[#allocation2 + $0x60] sm:$0xe]
      %v3419 = vld [vmem:[#allocation2 + $0x6c] sm:$0xe]
      %v3420 = vld [vmem:[#allocation2 + $0x78] sm:$0xe]
      %v3421 = vld [vmem:[#allocation2 + $0x84] sm:$0xe]
      %v3422 = vld [vmem:[#allocation2 + $0x90] sm:$0xe]
      %v3423 = vld [vmem:[#allocation2 + $0x9c] sm:$0xe]
      %v3424 = vld [vmem:[#allocation2 + $0xa8] sm:$0xe]
      %v3425 = vld [vmem:[#allocation2 + $0xb4] sm:$0xe]
      %v3426 = vld [vmem:[#allocation2 + $0xc0] sm:$0xe]
      %v3427 = vld [vmem:[#allocation2 + $0xcc] sm:$0xe]
      %v3464 = vunpack.c.l.b16 %v3356
      %v3465 = vunpack.c.l.b16 %v3357
      %v3466 = vunpack.c.l.b16 %v3358
      %v3467 = vunpack.c.l.b16 %v3359
      %v3468 = vunpack.c.l.b16 %v3360
      %v3469 = vunpack.c.l.b16 %v3361
      %v3470 = vunpack.c.l.b16 %v3362
      %v3471 = vunpack.c.l.b16 %v3363
      %v3472 = vunpack.c.l.b16 %v3364
      %v3473 = vunpack.c.l.b16 %v3365
      %v3474 = vunpack.c.l.b16 %v3366
      %v3475 = vunpack.c.l.b16 %v3367
      %v3476 = vunpack.c.l.b16 %v3368
      %v3477 = vunpack.c.l.b16 %v3369
      %v3478 = vunpack.c.l.b16 %v3370
      %v3479 = vunpack.c.l.b16 %v3371
      %v3480 = vunpack.c.l.b16 %v3372
      %v3481 = vunpack.c.l.b16 %v3373
      %v3482 = vunpack.c.l.b16 %v3374
      %v3483 = vunpack.c.l.b16 %v3375
      %v3484 = vunpack.c.l.b16 %v3376
      %v3485 = vunpack.c.l.b16 %v3377
      %v3486 = vunpack.c.l.b16 %v3378
      %v3487 = vunpack.c.l.b16 %v3379
      %v3488 = vunpack.c.l.b16 %v3380
      %v3489 = vunpack.c.l.b16 %v3381
      %v3490 = vunpack.c.l.b16 %v3382
      %v3491 = vunpack.c.l.b16 %v3383
      %v3492 = vunpack.c.l.b16 %v3384
      %v3493 = vunpack.c.l.b16 %v3385
      %v3494 = vunpack.c.l.b16 %v3386
      %v3495 = vunpack.c.l.b16 %v3387
      %v3496 = vunpack.c.l.b16 %v3388
      %v3497 = vunpack.c.l.b16 %v3389
      %v3498 = vunpack.c.l.b16 %v3390
      %v3499 = vunpack.c.l.b16 %v3391
      %v3500 = vpack.c.b16 %v3465, %v3464
      %v3501 = vpack.c.b16 %v3467, %v3466
      %v3502 = vpack.c.b16 %v3469, %v3468
      %v3503 = vpack.c.b16 %v3471, %v3470
      %v3504 = vpack.c.b16 %v3473, %v3472
      %v3505 = vpack.c.b16 %v3475, %v3474
      %v3506 = vpack.c.b16 %v3477, %v3476
      %v3507 = vpack.c.b16 %v3479, %v3478
      %v3508 = vpack.c.b16 %v3481, %v3480
      %v3509 = vpack.c.b16 %v3483, %v3482
      %v3510 = vpack.c.b16 %v3485, %v3484
      %v3511 = vpack.c.b16 %v3487, %v3486
      %v3512 = vpack.c.b16 %v3489, %v3488
      %v3513 = vpack.c.b16 %v3491, %v3490
      %v3514 = vpack.c.b16 %v3493, %v3492
      %v3515 = vpack.c.b16 %v3495, %v3494
      %v3516 = vpack.c.b16 %v3497, %v3496
      %v3517 = vpack.c.b16 %v3499, %v3498
      %v3554 = vunpack.c.l.b16 %v3392
      %v3555 = vunpack.c.l.b16 %v3393
      %v3556 = vunpack.c.l.b16 %v3394
      %v3557 = vunpack.c.l.b16 %v3395
      %v3558 = vunpack.c.l.b16 %v3396
      %v3559 = vunpack.c.l.b16 %v3397
      %v3560 = vunpack.c.l.b16 %v3398
      %v3561 = vunpack.c.l.b16 %v3399
      %v3562 = vunpack.c.l.b16 %v3400
      %v3563 = vunpack.c.l.b16 %v3401
      %v3564 = vunpack.c.l.b16 %v3402
      %v3565 = vunpack.c.l.b16 %v3403
      %v3566 = vunpack.c.l.b16 %v3404
      %v3567 = vunpack.c.l.b16 %v3405
      %v3568 = vunpack.c.l.b16 %v3406
      %v3569 = vunpack.c.l.b16 %v3407
      %v3570 = vunpack.c.l.b16 %v3408
      %v3571 = vunpack.c.l.b16 %v3409
      %v3572 = vpack.c.b16 %v3554, %v3554
      %v3573 = vpack.c.b16 %v3555, %v3555
      %v3574 = vpack.c.b16 %v3556, %v3556
      %v3575 = vpack.c.b16 %v3557, %v3557
      %v3576 = vpack.c.b16 %v3558, %v3558
      %v3577 = vpack.c.b16 %v3559, %v3559
      %v3578 = vpack.c.b16 %v3560, %v3560
      %v3579 = vpack.c.b16 %v3561, %v3561
      %v3580 = vpack.c.b16 %v3562, %v3562
      %v3581 = vpack.c.b16 %v3563, %v3563
      %v3582 = vpack.c.b16 %v3564, %v3564
      %v3583 = vpack.c.b16 %v3565, %v3565
      %v3584 = vpack.c.b16 %v3566, %v3566
      %v3585 = vpack.c.b16 %v3567, %v3567
      %v3586 = vpack.c.b16 %v3568, %v3568
      %v3587 = vpack.c.b16 %v3569, %v3569
      %v3588 = vpack.c.b16 %v3570, %v3570
      %v3589 = vpack.c.b16 %v3571, %v3571
      %v3591 = vshrl.u32 %v3500, 16
      %v3593 = vshll.u32 %v3500, 16
      %v3595 = vrot.slane %v3593, 1
      %v3596 = vor.u32 %v3591, %v3595
      %v3598 = vshll.u32 %v3572, 16
      %v3600 = vrot.slane %v3598, 1
      %v3601 = vsel %vm564, %v3596, %v3600
      %v3603 = vshrl.u32 %v3501, 16
      %v3605 = vshll.u32 %v3501, 16
      %v3607 = vrot.slane %v3605, 1
      %v3608 = vor.u32 %v3603, %v3607
      %v3610 = vshll.u32 %v3573, 16
      %v3612 = vrot.slane %v3610, 1
      %v3613 = vsel %vm564, %v3608, %v3612
      %v3615 = vshrl.u32 %v3502, 16
      %v3617 = vshll.u32 %v3502, 16
      %v3619 = vrot.slane %v3617, 1
      %v3620 = vor.u32 %v3615, %v3619
      %v3622 = vshll.u32 %v3574, 16
      %v3624 = vrot.slane %v3622, 1
      %v3625 = vsel %vm564, %v3620, %v3624
      %v3627 = vshrl.u32 %v3503, 16
      %v3629 = vshll.u32 %v3503, 16
      %v3631 = vrot.slane %v3629, 1
      %v3632 = vor.u32 %v3627, %v3631
      %v3634 = vshll.u32 %v3575, 16
      %v3636 = vrot.slane %v3634, 1
      %v3637 = vsel %vm564, %v3632, %v3636
      %v3639 = vshrl.u32 %v3504, 16
      %v3641 = vshll.u32 %v3504, 16
      %v3643 = vrot.slane %v3641, 1
      %v3644 = vor.u32 %v3639, %v3643
      %v3646 = vshll.u32 %v3576, 16
      %v3648 = vrot.slane %v3646, 1
      %v3649 = vsel %vm564, %v3644, %v3648
      %v3651 = vshrl.u32 %v3505, 16
      %v3653 = vshll.u32 %v3505, 16
      %v3655 = vrot.slane %v3653, 1
      %v3656 = vor.u32 %v3651, %v3655
      %v3658 = vshll.u32 %v3577, 16
      %v3660 = vrot.slane %v3658, 1
      %v3661 = vsel %vm564, %v3656, %v3660
      %v3663 = vshrl.u32 %v3506, 16
      %v3665 = vshll.u32 %v3506, 16
      %v3667 = vrot.slane %v3665, 1
      %v3668 = vor.u32 %v3663, %v3667
      %v3670 = vshll.u32 %v3578, 16
      %v3672 = vrot.slane %v3670, 1
      %v3673 = vsel %vm564, %v3668, %v3672
      %v3675 = vshrl.u32 %v3507, 16
      %v3677 = vshll.u32 %v3507, 16
      %v3679 = vrot.slane %v3677, 1
      %v3680 = vor.u32 %v3675, %v3679
      %v3682 = vshll.u32 %v3579, 16
      %v3684 = vrot.slane %v3682, 1
      %v3685 = vsel %vm564, %v3680, %v3684
      %v3687 = vshrl.u32 %v3508, 16
      %v3689 = vshll.u32 %v3508, 16
      %v3691 = vrot.slane %v3689, 1
      %v3692 = vor.u32 %v3687, %v3691
      %v3694 = vshll.u32 %v3580, 16
      %v3696 = vrot.slane %v3694, 1
      %v3697 = vsel %vm564, %v3692, %v3696
      %v3699 = vshrl.u32 %v3509, 16
      %v3701 = vshll.u32 %v3509, 16
      %v3703 = vrot.slane %v3701, 1
      %v3704 = vor.u32 %v3699, %v3703
      %v3706 = vshll.u32 %v3581, 16
      %v3708 = vrot.slane %v3706, 1
      %v3709 = vsel %vm564, %v3704, %v3708
      %v3711 = vshrl.u32 %v3510, 16
      %v3713 = vshll.u32 %v3510, 16
      %v3715 = vrot.slane %v3713, 1
      %v3716 = vor.u32 %v3711, %v3715
      %v3718 = vshll.u32 %v3582, 16
      %v3720 = vrot.slane %v3718, 1
      %v3721 = vsel %vm564, %v3716, %v3720
      %v3723 = vshrl.u32 %v3511, 16
      %v3725 = vshll.u32 %v3511, 16
      %v3727 = vrot.slane %v3725, 1
      %v3728 = vor.u32 %v3723, %v3727
      %v3730 = vshll.u32 %v3583, 16
      %v3732 = vrot.slane %v3730, 1
      %v3733 = vsel %vm564, %v3728, %v3732
      %v3735 = vshrl.u32 %v3512, 16
      %v3737 = vshll.u32 %v3512, 16
      %v3739 = vrot.slane %v3737, 1
      %v3740 = vor.u32 %v3735, %v3739
      %v3742 = vshll.u32 %v3584, 16
      %v3744 = vrot.slane %v3742, 1
      %v3745 = vsel %vm564, %v3740, %v3744
      %v3747 = vshrl.u32 %v3513, 16
      %v3749 = vshll.u32 %v3513, 16
      %v3751 = vrot.slane %v3749, 1
      %v3752 = vor.u32 %v3747, %v3751
      %v3754 = vshll.u32 %v3585, 16
      %v3756 = vrot.slane %v3754, 1
      %v3757 = vsel %vm564, %v3752, %v3756
      %v3759 = vshrl.u32 %v3514, 16
      %v3761 = vshll.u32 %v3514, 16
      %v3763 = vrot.slane %v3761, 1
      %v3764 = vor.u32 %v3759, %v3763
      %v3766 = vshll.u32 %v3586, 16
      %v3768 = vrot.slane %v3766, 1
      %v3769 = vsel %vm564, %v3764, %v3768
      %v3771 = vshrl.u32 %v3515, 16
      %v3773 = vshll.u32 %v3515, 16
      %v3775 = vrot.slane %v3773, 1
      %v3776 = vor.u32 %v3771, %v3775
      %v3778 = vshll.u32 %v3587, 16
      %v3780 = vrot.slane %v3778, 1
      %v3781 = vsel %vm564, %v3776, %v3780
      %v3783 = vshrl.u32 %v3516, 16
      %v3785 = vshll.u32 %v3516, 16
      %v3787 = vrot.slane %v3785, 1
      %v3788 = vor.u32 %v3783, %v3787
      %v3790 = vshll.u32 %v3588, 16
      %v3792 = vrot.slane %v3790, 1
      %v3793 = vsel %vm564, %v3788, %v3792
      %v3795 = vshrl.u32 %v3517, 16
      %v3797 = vshll.u32 %v3517, 16
      %v3799 = vrot.slane %v3797, 1
      %v3800 = vor.u32 %v3795, %v3799
      %v3802 = vshll.u32 %v3589, 16
      %v3804 = vrot.slane %v3802, 1
      %v3805 = vsel %vm564, %v3800, %v3804
      %v3842 = vunpack.c.l.b16 %v3410
      %v3843 = vunpack.c.l.b16 %v3411
      %v3844 = vunpack.c.l.b16 %v3412
      %v3845 = vunpack.c.l.b16 %v3413
      %v3846 = vunpack.c.l.b16 %v3414
      %v3847 = vunpack.c.l.b16 %v3415
      %v3848 = vunpack.c.l.b16 %v3416
      %v3849 = vunpack.c.l.b16 %v3417
      %v3850 = vunpack.c.l.b16 %v3418
      %v3851 = vunpack.c.l.b16 %v3419
      %v3852 = vunpack.c.l.b16 %v3420
      %v3853 = vunpack.c.l.b16 %v3421
      %v3854 = vunpack.c.l.b16 %v3422
      %v3855 = vunpack.c.l.b16 %v3423
      %v3856 = vunpack.c.l.b16 %v3424
      %v3857 = vunpack.c.l.b16 %v3425
      %v3858 = vunpack.c.l.b16 %v3426
      %v3859 = vunpack.c.l.b16 %v3427
      %v3860 = vpack.c.b16 %v3465, %v3842
      %v3861 = vpack.c.b16 %v3467, %v3843
      %v3862 = vpack.c.b16 %v3469, %v3844
      %v3863 = vpack.c.b16 %v3471, %v3845
      %v3864 = vpack.c.b16 %v3473, %v3846
      %v3865 = vpack.c.b16 %v3475, %v3847
      %v3866 = vpack.c.b16 %v3477, %v3848
      %v3867 = vpack.c.b16 %v3479, %v3849
      %v3868 = vpack.c.b16 %v3481, %v3850
      %v3869 = vpack.c.b16 %v3483, %v3851
      %v3870 = vpack.c.b16 %v3485, %v3852
      %v3871 = vpack.c.b16 %v3487, %v3853
      %v3872 = vpack.c.b16 %v3489, %v3854
      %v3873 = vpack.c.b16 %v3491, %v3855
      %v3874 = vpack.c.b16 %v3493, %v3856
      %v3875 = vpack.c.b16 %v3495, %v3857
      %v3876 = vpack.c.b16 %v3497, %v3858
      %v3877 = vpack.c.b16 %v3499, %v3859
      %v3878 = vrot.slane %v3860, 1
      %v3879 = vrot.slane %v3572, 1
      %v3880 = vsel %vm853, %v3878, %v3879
      %v3881 = vrot.slane %v3861, 1
      %v3882 = vrot.slane %v3573, 1
      %v3883 = vsel %vm853, %v3881, %v3882
      %v3884 = vrot.slane %v3862, 1
      %v3885 = vrot.slane %v3574, 1
      %v3886 = vsel %vm853, %v3884, %v3885
      %v3887 = vrot.slane %v3863, 1
      %v3888 = vrot.slane %v3575, 1
      %v3889 = vsel %vm853, %v3887, %v3888
      %v3890 = vrot.slane %v3864, 1
      %v3891 = vrot.slane %v3576, 1
      %v3892 = vsel %vm853, %v3890, %v3891
      %v3893 = vrot.slane %v3865, 1
      %v3894 = vrot.slane %v3577, 1
      %v3895 = vsel %vm853, %v3893, %v3894
      %v3896 = vrot.slane %v3866, 1
      %v3897 = vrot.slane %v3578, 1
      %v3898 = vsel %vm853, %v3896, %v3897
      %v3899 = vrot.slane %v3867, 1
      %v3900 = vrot.slane %v3579, 1
      %v3901 = vsel %vm853, %v3899, %v3900
      %v3902 = vrot.slane %v3868, 1
      %v3903 = vrot.slane %v3580, 1
      %v3904 = vsel %vm853, %v3902, %v3903
      %v3905 = vrot.slane %v3869, 1
      %v3906 = vrot.slane %v3581, 1
      %v3907 = vsel %vm853, %v3905, %v3906
      %v3908 = vrot.slane %v3870, 1
      %v3909 = vrot.slane %v3582, 1
      %v3910 = vsel %vm853, %v3908, %v3909
      %v3911 = vrot.slane %v3871, 1
      %v3912 = vrot.slane %v3583, 1
      %v3913 = vsel %vm853, %v3911, %v3912
      %v3914 = vrot.slane %v3872, 1
      %v3915 = vrot.slane %v3584, 1
      %v3916 = vsel %vm853, %v3914, %v3915
      %v3917 = vrot.slane %v3873, 1
      %v3918 = vrot.slane %v3585, 1
      %v3919 = vsel %vm853, %v3917, %v3918
      %v3920 = vrot.slane %v3874, 1
      %v3921 = vrot.slane %v3586, 1
      %v3922 = vsel %vm853, %v3920, %v3921
      %v3923 = vrot.slane %v3875, 1
      %v3924 = vrot.slane %v3587, 1
      %v3925 = vsel %vm853, %v3923, %v3924
      %v3926 = vrot.slane %v3876, 1
      %v3927 = vrot.slane %v3588, 1
      %v3928 = vsel %vm853, %v3926, %v3927
      %v3929 = vrot.slane %v3877, 1
      %v3930 = vrot.slane %v3589, 1
      %v3931 = vsel %vm853, %v3929, %v3930
      %v3950 = vld [vmem:[%s316] sm:$0xf]
      %v3951 = vld [vmem:[%s316 + $0x4] sm:$0xf]
      %v3952 = vld [vmem:[%s316 + $0x8] sm:$0xf]
      %v3953 = vld [vmem:[%s316 + $0xc] sm:$0xf]
      %v3954 = vld [vmem:[%s316 + $0x10] sm:$0xf]
      %v3955 = vld [vmem:[%s316 + $0x14] sm:$0xf]
      %v3956 = vld [vmem:[%s316 + $0x18] sm:$0xf]
      %v3957 = vld [vmem:[%s316 + $0x1c] sm:$0xf]
      %v3958 = vld [vmem:[%s316 + $0x20] sm:$0xf]
      %v3959 = vld [vmem:[%s316 + $0x24] sm:$0xf]
      %v3960 = vld [vmem:[%s316 + $0x28] sm:$0xf]
      %v3961 = vld [vmem:[%s316 + $0x2c] sm:$0xf]
      %v3962 = vld [vmem:[%s316 + $0x30] sm:$0xf]
      %v3963 = vld [vmem:[%s316 + $0x34] sm:$0xf]
      %v3964 = vld [vmem:[%s316 + $0x38] sm:$0xf]
      %v3965 = vld [vmem:[%s316 + $0x3c] sm:$0xf]
      %v3966 = vld [vmem:[%s316 + $0x40] sm:$0xf]
      %v3967 = vld [vmem:[%s316 + $0x44] sm:$0xf]
      %v3968 = vld [vmem:[%s316 + $0x48] sm:$0xf]
      %v3969 = vld [vmem:[%s316 + $0x4c] sm:$0xf]
      %v3970 = vld [vmem:[%s316 + $0x50] sm:$0xf]
      %v3971 = vld [vmem:[%s316 + $0x54] sm:$0xf]
      %v3972 = vld [vmem:[%s316 + $0x58] sm:$0xf]
      %v3973 = vld [vmem:[%s316 + $0x5c] sm:$0xf]
      %v3974 = vld [vmem:[%s316 + $0x60] sm:$0xf]
      %v3975 = vld [vmem:[%s316 + $0x64] sm:$0xf]
      %v3976 = vld [vmem:[%s316 + $0x68] sm:$0xf]
      %v3977 = vld [vmem:[%s316 + $0x6c] sm:$0xf]
      %v3978 = vld [vmem:[%s316 + $0x70] sm:$0xf]
      %v3979 = vld [vmem:[%s316 + $0x74] sm:$0xf]
      %v3980 = vld [vmem:[%s316 + $0x78] sm:$0xf]
      %v3981 = vld [vmem:[%s316 + $0x7c] sm:$0xf]
      %v3982 = vld [vmem:[%s316 + $0x80] sm:$0xf]
      %v3983 = vld [vmem:[%s316 + $0x84] sm:$0xf]
      %v3984 = vld [vmem:[%s316 + $0x88] sm:$0xf]
      %v3985 = vld [vmem:[%s316 + $0x8c] sm:$0xf]
      %v3986 = vld [vmem:[%s316 + $0x90] sm:$0xf]
      %v3987 = vld [vmem:[%s316 + $0x94] sm:$0xf]
      %v3988 = vld [vmem:[%s316 + $0x98] sm:$0xf]
      %v3989 = vld [vmem:[%s316 + $0x9c] sm:$0xf]
      %v3990 = vld [vmem:[%s316 + $0xa0] sm:$0xf]
      %v3991 = vld [vmem:[%s316 + $0xa4] sm:$0xf]
      %v3992 = vld [vmem:[%s316 + $0xa8] sm:$0xf]
      %v3993 = vld [vmem:[%s316 + $0xac] sm:$0xf]
      %v3994 = vld [vmem:[%s316 + $0xb0] sm:$0xf]
      %v3995 = vld [vmem:[%s316 + $0xb4] sm:$0xf]
      %v3996 = vld [vmem:[%s316 + $0xb8] sm:$0xf]
      %v3997 = vld [vmem:[%s316 + $0xbc] sm:$0xf]
      %s3998 = scalar_lea.vmem %s316, 192
      %v3999 = vld [vmem:[%s3998] sm:$0xf]
      %v4000 = vld [vmem:[%s3998 + $0x4] sm:$0xf]
      %v4001 = vld [vmem:[%s3998 + $0x8] sm:$0xf]
      %v4002 = vld [vmem:[%s3998 + $0xc] sm:$0xf]
      %v4003 = vld [vmem:[%s3998 + $0x10] sm:$0xf]
      %v4004 = vld [vmem:[%s3998 + $0x14] sm:$0xf]
      %v4005 = vld [vmem:[%s3998 + $0x18] sm:$0xf]
      %v4006 = vld [vmem:[%s3998 + $0x1c] sm:$0xf]
      %v4007 = vld [vmem:[%s3998 + $0x20] sm:$0xf]
      %v4008 = vld [vmem:[%s3998 + $0x24] sm:$0xf]
      %v4009 = vld [vmem:[%s3998 + $0x28] sm:$0xf]
      %v4010 = vld [vmem:[%s3998 + $0x2c] sm:$0xf]
      %v4011 = vld [vmem:[%s3998 + $0x30] sm:$0xf]
      %v4012 = vld [vmem:[%s3998 + $0x34] sm:$0xf]
      %v4013 = vld [vmem:[%s3998 + $0x38] sm:$0xf]
      %v4014 = vld [vmem:[%s3998 + $0x3c] sm:$0xf]
      %v4015 = vld [vmem:[%s3998 + $0x40] sm:$0xf]
      %v4016 = vld [vmem:[%s3998 + $0x44] sm:$0xf]
      %v4017 = vld [vmem:[%s3998 + $0x48] sm:$0xf]
      %v4018 = vld [vmem:[%s3998 + $0x4c] sm:$0xf]
      %v4019 = vld [vmem:[%s3998 + $0x50] sm:$0xf]
      %v4020 = vld [vmem:[%s3998 + $0x54] sm:$0xf]
      %v4021 = vld [vmem:[%s3998 + $0x58] sm:$0xf]
      %v4022 = vld [vmem:[%s3998 + $0x5c] sm:$0xf]
      %v4023 = vld [vmem:[%s3998 + $0x60] sm:$0xf]
      %v4024 = vld [vmem:[%s3998 + $0x64] sm:$0xf]
      %v4025 = vld [vmem:[%s3998 + $0x68] sm:$0xf]
      %v4026 = vld [vmem:[%s3998 + $0x6c] sm:$0xf]
      %v4027 = vld [vmem:[%s3998 + $0x70] sm:$0xf]
      %v4028 = vld [vmem:[%s3998 + $0x74] sm:$0xf]
      %v4029 = vld [vmem:[%s3998 + $0x78] sm:$0xf]
      %v4030 = vld [vmem:[%s3998 + $0x7c] sm:$0xf]
      %v4031 = vld [vmem:[%s3998 + $0x80] sm:$0xf]
      %v4032 = vld [vmem:[%s3998 + $0x84] sm:$0xf]
      %v4033 = vld [vmem:[%s3998 + $0x88] sm:$0xf]
      %v4034 = vld [vmem:[%s3998 + $0x8c] sm:$0xf]
      %v4035 = vld [vmem:[%s3998 + $0x90] sm:$0xf]
      %v4036 = vld [vmem:[%s3998 + $0x94] sm:$0xf]
      %v4037 = vld [vmem:[%s3998 + $0x98] sm:$0xf]
      %v4038 = vld [vmem:[%s3998 + $0x9c] sm:$0xf]
      %v4039 = vld [vmem:[%s3998 + $0xa0] sm:$0xf]
      %v4040 = vld [vmem:[%s3998 + $0xa4] sm:$0xf]
      %v4041 = vld [vmem:[%s3998 + $0xa8] sm:$0xf]
      %v4042 = vld [vmem:[%s3998 + $0xac] sm:$0xf]
      %v4043 = vld [vmem:[%s3998 + $0xb0] sm:$0xf]
      %v4044 = vld [vmem:[%s3998 + $0xb4] sm:$0xf]
      %v4045 = vld [vmem:[%s3998 + $0xb8] sm:$0xf]
      %v4046 = vld [vmem:[%s3998 + $0xbc] sm:$0xf]
      %v4095 = vunpack.c.l.b16 %v3999
      %v4096 = vunpack.c.l.b16 %v4000
      %v4097 = vunpack.c.l.b16 %v4001
      %v4098 = vunpack.c.l.b16 %v4002
      %v4099 = vunpack.c.l.b16 %v4003
      %v4100 = vunpack.c.l.b16 %v4004
      %v4101 = vunpack.c.l.b16 %v4005
      %v4102 = vunpack.c.l.b16 %v4006
      %v4103 = vunpack.c.l.b16 %v4007
      %v4104 = vunpack.c.l.b16 %v4008
      %v4105 = vunpack.c.l.b16 %v4009
      %v4106 = vunpack.c.l.b16 %v4010
      %v4107 = vunpack.c.l.b16 %v4011
      %v4108 = vunpack.c.l.b16 %v4012
      %v4109 = vunpack.c.l.b16 %v4013
      %v4110 = vunpack.c.l.b16 %v4014
      %v4111 = vunpack.c.l.b16 %v4015
      %v4112 = vunpack.c.l.b16 %v4016
      %v4113 = vunpack.c.l.b16 %v4017
      %v4114 = vunpack.c.l.b16 %v4018
      %v4115 = vunpack.c.l.b16 %v4019
      %v4116 = vunpack.c.l.b16 %v4020
      %v4117 = vunpack.c.l.b16 %v4021
      %v4118 = vunpack.c.l.b16 %v4022
      %v4119 = vunpack.c.l.b16 %v4023
      %v4120 = vunpack.c.l.b16 %v4024
      %v4121 = vunpack.c.l.b16 %v4025
      %v4122 = vunpack.c.l.b16 %v4026
      %v4123 = vunpack.c.l.b16 %v4027
      %v4124 = vunpack.c.l.b16 %v4028
      %v4125 = vunpack.c.l.b16 %v4029
      %v4126 = vunpack.c.l.b16 %v4030
      %v4127 = vunpack.c.l.b16 %v4031
      %v4128 = vunpack.c.l.b16 %v4032
      %v4129 = vunpack.c.l.b16 %v4033
      %v4130 = vunpack.c.l.b16 %v4034
      %v4131 = vunpack.c.l.b16 %v4035
      %v4132 = vunpack.c.l.b16 %v4036
      %v4133 = vunpack.c.l.b16 %v4037
      %v4134 = vunpack.c.l.b16 %v4038
      %v4135 = vunpack.c.l.b16 %v4039
      %v4136 = vunpack.c.l.b16 %v4040
      %v4137 = vunpack.c.l.b16 %v4041
      %v4138 = vunpack.c.l.b16 %v4042
      %v4139 = vunpack.c.l.b16 %v4043
      %v4140 = vunpack.c.l.b16 %v4044
      %v4141 = vunpack.c.l.b16 %v4045
      %v4142 = vunpack.c.l.b16 %v4046
      %v4143 = vpack.c.b16 %v4096, %v4095
      %v4144 = vpack.c.b16 %v4098, %v4097
      %v4145 = vpack.c.b16 %v4100, %v4099
      %v4146 = vpack.c.b16 %v4102, %v4101
      %v4147 = vpack.c.b16 %v4104, %v4103
      %v4148 = vpack.c.b16 %v4106, %v4105
      %v4149 = vpack.c.b16 %v4108, %v4107
      %v4150 = vpack.c.b16 %v4110, %v4109
      %v4151 = vpack.c.b16 %v4112, %v4111
      %v4152 = vpack.c.b16 %v4114, %v4113
      %v4153 = vpack.c.b16 %v4116, %v4115
      %v4154 = vpack.c.b16 %v4118, %v4117
      %v4155 = vpack.c.b16 %v4120, %v4119
      %v4156 = vpack.c.b16 %v4122, %v4121
      %v4157 = vpack.c.b16 %v4124, %v4123
      %v4158 = vpack.c.b16 %v4126, %v4125
      %v4159 = vpack.c.b16 %v4128, %v4127
      %v4160 = vpack.c.b16 %v4130, %v4129
      %v4161 = vpack.c.b16 %v4132, %v4131
      %v4162 = vpack.c.b16 %v4134, %v4133
      %v4163 = vpack.c.b16 %v4136, %v4135
      %v4164 = vpack.c.b16 %v4138, %v4137
      %v4165 = vpack.c.b16 %v4140, %v4139
      %v4166 = vpack.c.b16 %v4142, %v4141
      %4191 = vmatprep.subr.bf16.mxu0 0
      %4192 = vmatpush1.bf16.msra.mxu0 %v4143
      %4193 = vmatprep.subr.bf16.mxu0 0
      %4194 = vmatpush1.bf16.msra.mxu0 %v4144
      %4195 = vmatprep.subr.bf16.mxu0 0
      %4196 = vmatpush1.bf16.msra.mxu0 %v4145
      %4197 = vmatprep.subr.bf16.mxu0 0
      %4198 = vmatpush1.bf16.msra.mxu0 %v4146
      %4199 = vmatprep.subr.bf16.mxu0 0
      %4200 = vmatpush1.bf16.msra.mxu0 %v4147
      %4201 = vmatprep.subr.bf16.mxu0 0
      %4202 = vmatpush1.bf16.msra.mxu0 %v4148
      %4203 = vmatprep.subr.bf16.mxu0 0
      %4204 = vmatpush1.bf16.msra.mxu0 %v4149
      %4205 = vmatprep.subr.bf16.mxu0 0
      %4206 = vmatpush1.bf16.msra.mxu0 %v4150
      %4207 = vmatprep.subr.bf16.mxu0 0
      %4208 = vmatpush1.bf16.msra.mxu0 %v4151
      %4209 = vmatprep.subr.bf16.mxu0 0
      %4210 = vmatpush1.bf16.msra.mxu0 %v4152
      %4211 = vmatprep.subr.bf16.mxu0 0
      %4212 = vmatpush1.bf16.msra.mxu0 %v4153
      %4213 = vmatprep.subr.bf16.mxu0 0
      %4214 = vmatpush1.bf16.msra.mxu0 %v4154
      %4215 = vmatprep.subr.bf16.mxu0 0
      %4216 = vmatpush1.bf16.msra.mxu0 %v4155
      %4217 = vmatprep.subr.bf16.mxu0 0
      %4218 = vmatpush1.bf16.msra.mxu0 %v4156
      %4219 = vmatprep.subr.bf16.mxu0 0
      %4220 = vmatpush1.bf16.msra.mxu0 %v4157
      %4221 = vmatprep.subr.bf16.mxu0 0
      %4222 = vmatpush1.bf16.msra.mxu0 %v4158
      %4223 = vmatprep.mubr.bf16.mxu0 %v3613
      %4224 = vmatmul.mubr.bf16.gmra.mrb[0].mxu0 %v3501
      %v4225 = vpop.f32.mrb[0].mxu0
      %v4226 = vadd.f32 0.0, %v4225
      %v4227 = vpop.f32.mrb[0].mxu0
      %v4228 = vpop.f32.mrb[0].mxu0
      %v4229 = vadd.f32 0.0, %v4228
      %v4230 = vpop.f32.mrb[0].mxu0
      %4231 = vmatprep.mubr.bf16.mxu0 %v3625
      %4232 = vmatmul.mubr.bf16.gmra.mrb[0].mxu0 %v3502
      %v4233 = vpop.f32.mrb[0].mxu0
      %v4234 = vadd.f32 0.0, %v4233
      %v4235 = vpop.f32.mrb[0].mxu0
      %v4236 = vpop.f32.mrb[0].mxu0
      %v4237 = vadd.f32 0.0, %v4236
      %v4238 = vpop.f32.mrb[0].mxu0
      %4239 = vmatprep.mubr.bf16.mxu0 %v3637
      %4240 = vmatmul.mubr.bf16.gmra.mrb[0].mxu0 %v3503
      %v4241 = vpop.f32.mrb[0].mxu0
      %v4242 = vadd.f32 0.0, %v4241
      %v4243 = vpop.f32.mrb[0].mxu0
      %v4244 = vpop.f32.mrb[0].mxu0
      %v4245 = vadd.f32 0.0, %v4244
      %v4246 = vpop.f32.mrb[0].mxu0
      %4247 = vmatprep.mubr.bf16.mxu0 %v3649
      %4248 = vmatmul.mubr.bf16.gmra.mrb[0].mxu0 %v3504
      %v4249 = vpop.f32.mrb[0].mxu0
      %v4250 = vadd.f32 0.0, %v4249
      %v4251 = vpop.f32.mrb[0].mxu0
      %v4252 = vpop.f32.mrb[0].mxu0
      %v4253 = vadd.f32 0.0, %v4252
      %v4254 = vpop.f32.mrb[0].mxu0
      %4255 = vmatprep.mubr.bf16.mxu0 %v3661
      %4256 = vmatmul.mubr.bf16.gmra.mrb[0].mxu0 %v3505
      %v4257 = vpop.f32.mrb[0].mxu0
      %v4258 = vadd.f32 0.0, %v4257
      %v4259 = vpop.f32.mrb[0].mxu0
      %v4260 = vpop.f32.mrb[0].mxu0
      %v4261 = vadd.f32 0.0, %v4260
      %v4262 = vpop.f32.mrb[0].mxu0
      %4263 = vmatprep.mubr.bf16.mxu0 %v3673
      %4264 = vmatmul.mubr.bf16.gmra.mrb[0].mxu0 %v3506
      %v4265 = vpop.f32.mrb[0].mxu0
      %v4266 = vadd.f32 0.0, %v4265
      %v4267 = vpop.f32.mrb[0].mxu0
      %v4268 = vpop.f32.mrb[0].mxu0
      %v4269 = vadd.f32 0.0, %v4268
      %v4270 = vpop.f32.mrb[0].mxu0
      %4271 = vmatprep.mubr.bf16.mxu0 %v3685
      %4272 = vmatmul.mubr.bf16.gmra.mrb[0].mxu0 %v3507
      %v4273 = vpop.f32.mrb[0].mxu0
      %v4274 = vadd.f32 0.0, %v4273
      %v4275 = vpop.f32.mrb[0].mxu0
      %v4276 = vpop.f32.mrb[0].mxu0
      %v4277 = vadd.f32 0.0, %v4276
      %v4278 = vpop.f32.mrb[0].mxu0
      %4279 = vmatprep.mubr.bf16.mxu0 %v3697
      %4280 = vmatmul.mubr.bf16.gmra.mrb[0].mxu0 %v3508
      %v4281 = vpop.f32.mrb[0].mxu0
      %v4282 = vadd.f32 0.0, %v4281
      %v4283 = vpop.f32.mrb[0].mxu0
      %v4284 = vpop.f32.mrb[0].mxu0
      %v4285 = vadd.f32 0.0, %v4284
      %v4286 = vpop.f32.mrb[0].mxu0
      %4287 = vmatprep.mubr.bf16.mxu0 %v3709
      %4288 = vmatmul.mubr.bf16.gmra.mrb[0].mxu0 %v3509
      %v4289 = vpop.f32.mrb[0].mxu0
      %v4290 = vadd.f32 0.0, %v4289
      %v4291 = vpop.f32.mrb[0].mxu0
      %v4292 = vpop.f32.mrb[0].mxu0
      %v4293 = vadd.f32 0.0, %v4292
      %v4294 = vpop.f32.mrb[0].mxu0
      %4295 = vmatprep.mubr.bf16.mxu0 %v3721
      %4296 = vmatmul.mubr.bf16.gmra.mrb[0].mxu0 %v3510
      %v4297 = vpop.f32.mrb[0].mxu0
      %v4298 = vadd.f32 0.0, %v4297
      %v4299 = vpop.f32.mrb[0].mxu0
      %v4300 = vpop.f32.mrb[0].mxu0
      %v4301 = vadd.f32 0.0, %v4300
      %v4302 = vpop.f32.mrb[0].mxu0
      %4303 = vmatprep.mubr.bf16.mxu0 %v3733
      %4304 = vmatmul.mubr.bf16.gmra.mrb[0].mxu0 %v3511
      %v4305 = vpop.f32.mrb[0].mxu0
      %v4306 = vadd.f32 0.0, %v4305
      %v4307 = vpop.f32.mrb[0].mxu0
      %v4308 = vpop.f32.mrb[0].mxu0
      %v4309 = vadd.f32 0.0, %v4308
      %v4310 = vpop.f32.mrb[0].mxu0
      %4311 = vmatprep.mubr.bf16.mxu0 %v3745
      %4312 = vmatmul.mubr.bf16.gmra.mrb[0].mxu0 %v3512
      %v4313 = vpop.f32.mrb[0].mxu0
      %v4314 = vadd.f32 0.0, %v4313
      %v4315 = vpop.f32.mrb[0].mxu0
      %v4316 = vpop.f32.mrb[0].mxu0
      %v4317 = vadd.f32 0.0, %v4316
      %v4318 = vpop.f32.mrb[0].mxu0
      %4319 = vmatprep.mubr.bf16.mxu0 %v3757
      %4320 = vmatmul.mubr.bf16.gmra.mrb[0].mxu0 %v3513
      %v4321 = vpop.f32.mrb[0].mxu0
      %v4322 = vadd.f32 0.0, %v4321
      %v4323 = vpop.f32.mrb[0].mxu0
      %v4324 = vpop.f32.mrb[0].mxu0
      %v4325 = vadd.f32 0.0, %v4324
      %v4326 = vpop.f32.mrb[0].mxu0
      %4327 = vmatprep.mubr.bf16.mxu0 %v3769
      %4328 = vmatmul.mubr.bf16.gmra.mrb[0].mxu0 %v3514
      %v4329 = vpop.f32.mrb[0].mxu0
      %v4330 = vadd.f32 0.0, %v4329
      %v4331 = vpop.f32.mrb[0].mxu0
      %v4332 = vpop.f32.mrb[0].mxu0
      %v4333 = vadd.f32 0.0, %v4332
      %v4334 = vpop.f32.mrb[0].mxu0
      %4335 = vmatprep.mubr.bf16.mxu0 %v3781
      %4336 = vmatmul.mubr.bf16.gmra.mrb[0].mxu0 %v3515
      %v4337 = vpop.f32.mrb[0].mxu0
      %v4338 = vadd.f32 0.0, %v4337
      %v4339 = vpop.f32.mrb[0].mxu0
      %v4340 = vpop.f32.mrb[0].mxu0
      %v4341 = vadd.f32 0.0, %v4340
      %v4342 = vpop.f32.mrb[0].mxu0
      %4343 = vmatprep.mubr.bf16.mxu0 %v3793
      %4344 = vmatmul.mubr.bf16.gmra.mrb[0].mxu0 %v3516
      %v4345 = vpop.f32.mrb[0].mxu0
      %v4346 = vadd.f32 0.0, %v4345
      %v4347 = vpop.f32.mrb[0].mxu0
      %v4348 = vpop.f32.mrb[0].mxu0
      %v4349 = vadd.f32 0.0, %v4348
      %v4350 = vpop.f32.mrb[0].mxu0
      %4351 = vdwg.mxu0
      %4352 = vmatprep.subr.bf16.mxu0 0
      %4353 = vmatpush1.bf16.msra.mxu0 %v4159
      %4354 = vmatprep.subr.bf16.mxu0 0
      %4355 = vmatpush1.bf16.msra.mxu0 %v4160
      %4356 = vmatprep.subr.bf16.mxu0 0
      %4357 = vmatpush1.bf16.msra.mxu0 %v4161
      %4358 = vmatprep.subr.bf16.mxu0 0
      %4359 = vmatpush1.bf16.msra.mxu0 %v4162
      %4360 = vmatprep.subr.bf16.mxu0 0
      %4361 = vmatpush1.bf16.msra.mxu0 %v4163
      %4362 = vmatprep.subr.bf16.mxu0 0
      %4363 = vmatpush1.bf16.msra.mxu0 %v4164
      %4364 = vmatprep.subr.bf16.mxu0 0
      %4365 = vmatpush1.bf16.msra.mxu0 %v4165
      %4366 = vmatprep.subr.bf16.mxu0 0
      %4367 = vmatpush1.bf16.msra.mxu0 %v4166
      %4368 = vmatprep.subr.bf16.mxu0 0
      %4369 = vmatpush1.bf16.msra.mxu0 0
      %4370 = vmatprep.subr.bf16.mxu0 0
      %4371 = vmatpush1.bf16.msra.mxu0 0
      %4372 = vmatprep.subr.bf16.mxu0 0
      %4373 = vmatpush1.bf16.msra.mxu0 0
      %4374 = vmatprep.subr.bf16.mxu0 0
      %4375 = vmatpush1.bf16.msra.mxu0 0
      %4376 = vmatprep.subr.bf16.mxu0 0
      %4377 = vmatpush1.bf16.msra.mxu0 0
      %4378 = vmatprep.subr.bf16.mxu0 0
      %4379 = vmatpush1.bf16.msra.mxu0 0
      %4380 = vmatprep.subr.bf16.mxu0 0
      %4381 = vmatpush1.bf16.msra.mxu0 0
      %4382 = vmatprep.subr.bf16.mxu0 0
      %4383 = vmatpush1.bf16.msra.mxu0 0
      %4384 = vmatprep.mubr.bf16.mxu0 0
      %4385 = vmatmul.mubr.bf16.gmra.mrb[0].mxu0 %v3883
      %v4386 = vpop.f32.mrb[0].mxu0
      %v4387 = vadd.f32 %v4226, %v4386
      %v4388 = vpop.f32.mrb[0].mxu0
      %v4389 = vpop.f32.mrb[0].mxu0
      %v4390 = vadd.f32 %v4229, %v4389
      %v4391 = vpop.f32.mrb[0].mxu0
      %4392 = vmatprep.mubr.bf16.mxu0 0
      %4393 = vmatmul.mubr.bf16.gmra.mrb[0].mxu0 %v3886
      %v4394 = vpop.f32.mrb[0].mxu0
      %v4395 = vadd.f32 %v4234, %v4394
      %v4396 = vpop.f32.mrb[0].mxu0
      %v4397 = vpop.f32.mrb[0].mxu0
      %v4398 = vadd.f32 %v4237, %v4397
      %v4399 = vpop.f32.mrb[0].mxu0
      %4400 = vmatprep.mubr.bf16.mxu0 0
      %4401 = vmatmul.mubr.bf16.gmra.mrb[0].mxu0 %v3889
      %v4402 = vpop.f32.mrb[0].mxu0
      %v4403 = vadd.f32 %v4242, %v4402
      %v4404 = vpop.f32.mrb[0].mxu0
      %v4405 = vpop.f32.mrb[0].mxu0
      %v4406 = vadd.f32 %v4245, %v4405
      %v4407 = vpop.f32.mrb[0].mxu0
      %4408 = vmatprep.mubr.bf16.mxu0 0
      %4409 = vmatmul.mubr.bf16.gmra.mrb[0].mxu0 %v3892
      %v4410 = vpop.f32.mrb[0].mxu0
      %v4411 = vadd.f32 %v4250, %v4410
      %v4412 = vpop.f32.mrb[0].mxu0
      %v4413 = vpop.f32.mrb[0].mxu0
      %v4414 = vadd.f32 %v4253, %v4413
      %v4415 = vpop.f32.mrb[0].mxu0
      %4416 = vmatprep.mubr.bf16.mxu0 0
      %4417 = vmatmul.mubr.bf16.gmra.mrb[0].mxu0 %v3895
      %v4418 = vpop.f32.mrb[0].mxu0
      %v4419 = vadd.f32 %v4258, %v4418
      %v4420 = vpop.f32.mrb[0].mxu0
      %v4421 = vpop.f32.mrb[0].mxu0
      %v4422 = vadd.f32 %v4261, %v4421
      %v4423 = vpop.f32.mrb[0].mxu0
      %4424 = vmatprep.mubr.bf16.mxu0 0
      %4425 = vmatmul.mubr.bf16.gmra.mrb[0].mxu0 %v3898
      %v4426 = vpop.f32.mrb[0].mxu0
      %v4427 = vadd.f32 %v4266, %v4426
      %v4428 = vpop.f32.mrb[0].mxu0
      %v4429 = vpop.f32.mrb[0].mxu0
      %v4430 = vadd.f32 %v4269, %v4429
      %v4431 = vpop.f32.mrb[0].mxu0
      %4432 = vmatprep.mubr.bf16.mxu0 0
      %4433 = vmatmul.mubr.bf16.gmra.mrb[0].mxu0 %v3901
      %v4434 = vpop.f32.mrb[0].mxu0
      %v4435 = vadd.f32 %v4274, %v4434
      %v4436 = vpop.f32.mrb[0].mxu0
      %v4437 = vpop.f32.mrb[0].mxu0
      %v4438 = vadd.f32 %v4277, %v4437
      %v4439 = vpop.f32.mrb[0].mxu0
      %4440 = vmatprep.mubr.bf16.mxu0 0
      %4441 = vmatmul.mubr.bf16.gmra.mrb[0].mxu0 %v3904
      %v4442 = vpop.f32.mrb[0].mxu0
      %v4443 = vadd.f32 %v4282, %v4442
      %v4444 = vpop.f32.mrb[0].mxu0
      %v4445 = vpop.f32.mrb[0].mxu0
      %v4446 = vadd.f32 %v4285, %v4445
      %v4447 = vpop.f32.mrb[0].mxu0
      %4448 = vmatprep.mubr.bf16.mxu0 0
      %4449 = vmatmul.mubr.bf16.gmra.mrb[0].mxu0 %v3907
      %v4450 = vpop.f32.mrb[0].mxu0
      %v4451 = vadd.f32 %v4290, %v4450
      %v4452 = vpop.f32.mrb[0].mxu0
      %v4453 = vpop.f32.mrb[0].mxu0
      %v4454 = vadd.f32 %v4293, %v4453
      %v4455 = vpop.f32.mrb[0].mxu0
      %4456 = vmatprep.mubr.bf16.mxu0 0
      %4457 = vmatmul.mubr.bf16.gmra.mrb[0].mxu0 %v3910
      %v4458 = vpop.f32.mrb[0].mxu0
      %v4459 = vadd.f32 %v4298, %v4458
      %v4460 = vpop.f32.mrb[0].mxu0
      %v4461 = vpop.f32.mrb[0].mxu0
      %v4462 = vadd.f32 %v4301, %v4461
      %v4463 = vpop.f32.mrb[0].mxu0
      %4464 = vmatprep.mubr.bf16.mxu0 0
      %4465 = vmatmul.mubr.bf16.gmra.mrb[0].mxu0 %v3913
      %v4466 = vpop.f32.mrb[0].mxu0
      %v4467 = vadd.f32 %v4306, %v4466
      %v4468 = vpop.f32.mrb[0].mxu0
      %v4469 = vpop.f32.mrb[0].mxu0
      %v4470 = vadd.f32 %v4309, %v4469
      %v4471 = vpop.f32.mrb[0].mxu0
      %4472 = vmatprep.mubr.bf16.mxu0 0
      %4473 = vmatmul.mubr.bf16.gmra.mrb[0].mxu0 %v3916
      %v4474 = vpop.f32.mrb[0].mxu0
      %v4475 = vadd.f32 %v4314, %v4474
      %v4476 = vpop.f32.mrb[0].mxu0
      %v4477 = vpop.f32.mrb[0].mxu0
      %v4478 = vadd.f32 %v4317, %v4477
      %v4479 = vpop.f32.mrb[0].mxu0
      %4480 = vmatprep.mubr.bf16.mxu0 0
      %4481 = vmatmul.mubr.bf16.gmra.mrb[0].mxu0 %v3919
      %v4482 = vpop.f32.mrb[0].mxu0
      %v4483 = vadd.f32 %v4322, %v4482
      %v4484 = vpop.f32.mrb[0].mxu0
      %v4485 = vpop.f32.mrb[0].mxu0
      %v4486 = vadd.f32 %v4325, %v4485
      %v4487 = vpop.f32.mrb[0].mxu0
      %4488 = vmatprep.mubr.bf16.mxu0 0
      %4489 = vmatmul.mubr.bf16.gmra.mrb[0].mxu0 %v3922
      %v4490 = vpop.f32.mrb[0].mxu0
      %v4491 = vadd.f32 %v4330, %v4490
      %v4492 = vpop.f32.mrb[0].mxu0
      %v4493 = vpop.f32.mrb[0].mxu0
      %v4494 = vadd.f32 %v4333, %v4493
      %v4495 = vpop.f32.mrb[0].mxu0
      %4496 = vmatprep.mubr.bf16.mxu0 0
      %4497 = vmatmul.mubr.bf16.gmra.mrb[0].mxu0 %v3925
      %v4498 = vpop.f32.mrb[0].mxu0
      %v4499 = vadd.f32 %v4338, %v4498
      %v4500 = vpop.f32.mrb[0].mxu0
      %v4501 = vpop.f32.mrb[0].mxu0
      %v4502 = vadd.f32 %v4341, %v4501
      %v4503 = vpop.f32.mrb[0].mxu0
      %4504 = vmatprep.mubr.bf16.mxu0 0
      %4505 = vmatmul.mubr.bf16.gmra.mrb[0].mxu0 %v3928
      %v4506 = vpop.f32.mrb[0].mxu0
      %v4507 = vadd.f32 %v4346, %v4506
      %v4508 = vpop.f32.mrb[0].mxu0
      %v4509 = vpop.f32.mrb[0].mxu0
      %v4510 = vadd.f32 %v4349, %v4509
      %v4511 = vpop.f32.mrb[0].mxu0
      %4512 = vdwg.mxu0
      %v4561 = vunpack.c.l.b16 %v3950
      %v4562 = vunpack.c.l.b16 %v3951
      %v4563 = vunpack.c.l.b16 %v3952
      %v4564 = vunpack.c.l.b16 %v3953
      %v4565 = vunpack.c.l.b16 %v3954
      %v4566 = vunpack.c.l.b16 %v3955
      %v4567 = vunpack.c.l.b16 %v3956
      %v4568 = vunpack.c.l.b16 %v3957
      %v4569 = vunpack.c.l.b16 %v3958
      %v4570 = vunpack.c.l.b16 %v3959
      %v4571 = vunpack.c.l.b16 %v3960
      %v4572 = vunpack.c.l.b16 %v3961
      %v4573 = vunpack.c.l.b16 %v3962
      %v4574 = vunpack.c.l.b16 %v3963
      %v4575 = vunpack.c.l.b16 %v3964
      %v4576 = vunpack.c.l.b16 %v3965
      %v4577 = vunpack.c.l.b16 %v3966
      %v4578 = vunpack.c.l.b16 %v3967
      %v4579 = vunpack.c.l.b16 %v3968
      %v4580 = vunpack.c.l.b16 %v3969
      %v4581 = vunpack.c.l.b16 %v3970
      %v4582 = vunpack.c.l.b16 %v3971
      %v4583 = vunpack.c.l.b16 %v3972
      %v4584 = vunpack.c.l.b16 %v3973
      %v4585 = vunpack.c.l.b16 %v3974
      %v4586 = vunpack.c.l.b16 %v3975
      %v4587 = vunpack.c.l.b16 %v3976
      %v4588 = vunpack.c.l.b16 %v3977
      %v4589 = vunpack.c.l.b16 %v3978
      %v4590 = vunpack.c.l.b16 %v3979
      %v4591 = vunpack.c.l.b16 %v3980
      %v4592 = vunpack.c.l.b16 %v3981
      %v4593 = vunpack.c.l.b16 %v3982
      %v4594 = vunpack.c.l.b16 %v3983
      %v4595 = vunpack.c.l.b16 %v3984
      %v4596 = vunpack.c.l.b16 %v3985
      %v4597 = vunpack.c.l.b16 %v3986
      %v4598 = vunpack.c.l.b16 %v3987
      %v4599 = vunpack.c.l.b16 %v3988
      %v4600 = vunpack.c.l.b16 %v3989
      %v4601 = vunpack.c.l.b16 %v3990
      %v4602 = vunpack.c.l.b16 %v3991
      %v4603 = vunpack.c.l.b16 %v3992
      %v4604 = vunpack.c.l.b16 %v3993
      %v4605 = vunpack.c.l.b16 %v3994
      %v4606 = vunpack.c.l.b16 %v3995
      %v4607 = vunpack.c.l.b16 %v3996
      %v4608 = vunpack.c.l.b16 %v3997
      %v4609 = vpack.c.b16 %v4562, %v4561
      %v4610 = vpack.c.b16 %v4564, %v4563
      %v4611 = vpack.c.b16 %v4566, %v4565
      %v4612 = vpack.c.b16 %v4568, %v4567
      %v4613 = vpack.c.b16 %v4570, %v4569
      %v4614 = vpack.c.b16 %v4572, %v4571
      %v4615 = vpack.c.b16 %v4574, %v4573
      %v4616 = vpack.c.b16 %v4576, %v4575
      %v4617 = vpack.c.b16 %v4578, %v4577
      %v4618 = vpack.c.b16 %v4580, %v4579
      %v4619 = vpack.c.b16 %v4582, %v4581
      %v4620 = vpack.c.b16 %v4584, %v4583
      %v4621 = vpack.c.b16 %v4586, %v4585
      %v4622 = vpack.c.b16 %v4588, %v4587
      %v4623 = vpack.c.b16 %v4590, %v4589
      %v4624 = vpack.c.b16 %v4592, %v4591
      %v4625 = vpack.c.b16 %v4594, %v4593
      %v4626 = vpack.c.b16 %v4596, %v4595
      %v4627 = vpack.c.b16 %v4598, %v4597
      %v4628 = vpack.c.b16 %v4600, %v4599
      %v4629 = vpack.c.b16 %v4602, %v4601
      %v4630 = vpack.c.b16 %v4604, %v4603
      %v4631 = vpack.c.b16 %v4606, %v4605
      %v4632 = vpack.c.b16 %v4608, %v4607
      %4657 = vmatprep.subr.bf16.mxu0 0
      %4658 = vmatpush1.bf16.msra.mxu0 %v4609
      %4659 = vmatprep.subr.bf16.mxu0 0
      %4660 = vmatpush1.bf16.msra.mxu0 %v4610
      %4661 = vmatprep.subr.bf16.mxu0 0
      %4662 = vmatpush1.bf16.msra.mxu0 %v4611
      %4663 = vmatprep.subr.bf16.mxu0 0
      %4664 = vmatpush1.bf16.msra.mxu0 %v4612
      %4665 = vmatprep.subr.bf16.mxu0 0
      %4666 = vmatpush1.bf16.msra.mxu0 %v4613
      %4667 = vmatprep.subr.bf16.mxu0 0
      %4668 = vmatpush1.bf16.msra.mxu0 %v4614
      %4669 = vmatprep.subr.bf16.mxu0 0
      %4670 = vmatpush1.bf16.msra.mxu0 %v4615
      %4671 = vmatprep.subr.bf16.mxu0 0
      %4672 = vmatpush1.bf16.msra.mxu0 %v4616
      %4673 = vmatprep.subr.bf16.mxu0 0
      %4674 = vmatpush1.bf16.msra.mxu0 %v4617
      %4675 = vmatprep.subr.bf16.mxu0 0
      %4676 = vmatpush1.bf16.msra.mxu0 %v4618
      %4677 = vmatprep.subr.bf16.mxu0 0
      %4678 = vmatpush1.bf16.msra.mxu0 %v4619
      %4679 = vmatprep.subr.bf16.mxu0 0
      %4680 = vmatpush1.bf16.msra.mxu0 %v4620
      %4681 = vmatprep.subr.bf16.mxu0 0
      %4682 = vmatpush1.bf16.msra.mxu0 %v4621
      %4683 = vmatprep.subr.bf16.mxu0 0
      %4684 = vmatpush1.bf16.msra.mxu0 %v4622
      %4685 = vmatprep.subr.bf16.mxu0 0
      %4686 = vmatpush1.bf16.msra.mxu0 %v4623
      %4687 = vmatprep.subr.bf16.mxu0 0
      %4688 = vmatpush1.bf16.msra.mxu0 %v4624
      %4689 = vmatprep.mubr.bf16.mxu0 %v3601
      %4690 = vmatmul.mubr.bf16.gmra.mrb[0].mxu0 %v3500
      %v4691 = vpop.f32.mrb[0].mxu0
      %v4692 = vadd.f32 %v4387, %v4691
      %v4693 = vpop.f32.mrb[0].mxu0
      %v4694 = vpop.f32.mrb[0].mxu0
      %v4695 = vadd.f32 %v4390, %v4694
      %v4696 = vpop.f32.mrb[0].mxu0
      %4697 = vmatprep.mubr.bf16.mxu0 %v3613
      %4698 = vmatmul.mubr.bf16.gmra.mrb[0].mxu0 %v3501
      %v4699 = vpop.f32.mrb[0].mxu0
      %v4700 = vadd.f32 %v4395, %v4699
      %v4701 = vpop.f32.mrb[0].mxu0
      %v4702 = vpop.f32.mrb[0].mxu0
      %v4703 = vadd.f32 %v4398, %v4702
      %v4704 = vpop.f32.mrb[0].mxu0
      %4705 = vmatprep.mubr.bf16.mxu0 %v3625
      %4706 = vmatmul.mubr.bf16.gmra.mrb[0].mxu0 %v3502
      %v4707 = vpop.f32.mrb[0].mxu0
      %v4708 = vadd.f32 %v4403, %v4707
      %v4709 = vpop.f32.mrb[0].mxu0
      %v4710 = vpop.f32.mrb[0].mxu0
      %v4711 = vadd.f32 %v4406, %v4710
      %v4712 = vpop.f32.mrb[0].mxu0
      %4713 = vmatprep.mubr.bf16.mxu0 %v3637
      %4714 = vmatmul.mubr.bf16.gmra.mrb[0].mxu0 %v3503
      %v4715 = vpop.f32.mrb[0].mxu0
      %v4716 = vadd.f32 %v4411, %v4715
      %v4717 = vpop.f32.mrb[0].mxu0
      %v4718 = vpop.f32.mrb[0].mxu0
      %v4719 = vadd.f32 %v4414, %v4718
      %v4720 = vpop.f32.mrb[0].mxu0
      %4721 = vmatprep.mubr.bf16.mxu0 %v3649
      %4722 = vmatmul.mubr.bf16.gmra.mrb[0].mxu0 %v3504
      %v4723 = vpop.f32.mrb[0].mxu0
      %v4724 = vadd.f32 %v4419, %v4723
      %v4725 = vpop.f32.mrb[0].mxu0
      %v4726 = vpop.f32.mrb[0].mxu0
      %v4727 = vadd.f32 %v4422, %v4726
      %v4728 = vpop.f32.mrb[0].mxu0
      %4729 = vmatprep.mubr.bf16.mxu0 %v3661
      %4730 = vmatmul.mubr.bf16.gmra.mrb[0].mxu0 %v3505
      %v4731 = vpop.f32.mrb[0].mxu0
      %v4732 = vadd.f32 %v4427, %v4731
      %v4733 = vpop.f32.mrb[0].mxu0
      %v4734 = vpop.f32.mrb[0].mxu0
      %v4735 = vadd.f32 %v4430, %v4734
      %v4736 = vpop.f32.mrb[0].mxu0
      %4737 = vmatprep.mubr.bf16.mxu0 %v3673
      %4738 = vmatmul.mubr.bf16.gmra.mrb[0].mxu0 %v3506
      %v4739 = vpop.f32.mrb[0].mxu0
      %v4740 = vadd.f32 %v4435, %v4739
      %v4741 = vpop.f32.mrb[0].mxu0
      %v4742 = vpop.f32.mrb[0].mxu0
      %v4743 = vadd.f32 %v4438, %v4742
      %v4744 = vpop.f32.mrb[0].mxu0
      %4745 = vmatprep.mubr.bf16.mxu0 %v3685
      %4746 = vmatmul.mubr.bf16.gmra.mrb[0].mxu0 %v3507
      %v4747 = vpop.f32.mrb[0].mxu0
      %v4748 = vadd.f32 %v4443, %v4747
      %v4749 = vpop.f32.mrb[0].mxu0
      %v4750 = vpop.f32.mrb[0].mxu0
      %v4751 = vadd.f32 %v4446, %v4750
      %v4752 = vpop.f32.mrb[0].mxu0
      %4753 = vmatprep.mubr.bf16.mxu0 %v3697
      %4754 = vmatmul.mubr.bf16.gmra.mrb[0].mxu0 %v3508
      %v4755 = vpop.f32.mrb[0].mxu0
      %v4756 = vadd.f32 %v4451, %v4755
      %v4757 = vpop.f32.mrb[0].mxu0
      %v4758 = vpop.f32.mrb[0].mxu0
      %v4759 = vadd.f32 %v4454, %v4758
      %v4760 = vpop.f32.mrb[0].mxu0
      %4761 = vmatprep.mubr.bf16.mxu0 %v3709
      %4762 = vmatmul.mubr.bf16.gmra.mrb[0].mxu0 %v3509
      %v4763 = vpop.f32.mrb[0].mxu0
      %v4764 = vadd.f32 %v4459, %v4763
      %v4765 = vpop.f32.mrb[0].mxu0
      %v4766 = vpop.f32.mrb[0].mxu0
      %v4767 = vadd.f32 %v4462, %v4766
      %v4768 = vpop.f32.mrb[0].mxu0
      %4769 = vmatprep.mubr.bf16.mxu0 %v3721
      %4770 = vmatmul.mubr.bf16.gmra.mrb[0].mxu0 %v3510
      %v4771 = vpop.f32.mrb[0].mxu0
      %v4772 = vadd.f32 %v4467, %v4771
      %v4773 = vpop.f32.mrb[0].mxu0
      %v4774 = vpop.f32.mrb[0].mxu0
      %v4775 = vadd.f32 %v4470, %v4774
      %v4776 = vpop.f32.mrb[0].mxu0
      %4777 = vmatprep.mubr.bf16.mxu0 %v3733
      %4778 = vmatmul.mubr.bf16.gmra.mrb[0].mxu0 %v3511
      %v4779 = vpop.f32.mrb[0].mxu0
      %v4780 = vadd.f32 %v4475, %v4779
      %v4781 = vpop.f32.mrb[0].mxu0
      %v4782 = vpop.f32.mrb[0].mxu0
      %v4783 = vadd.f32 %v4478, %v4782
      %v4784 = vpop.f32.mrb[0].mxu0
      %4785 = vmatprep.mubr.bf16.mxu0 %v3745
      %4786 = vmatmul.mubr.bf16.gmra.mrb[0].mxu0 %v3512
      %v4787 = vpop.f32.mrb[0].mxu0
      %v4788 = vadd.f32 %v4483, %v4787
      %v4789 = vpop.f32.mrb[0].mxu0
      %v4790 = vpop.f32.mrb[0].mxu0
      %v4791 = vadd.f32 %v4486, %v4790
      %v4792 = vpop.f32.mrb[0].mxu0
      %4793 = vmatprep.mubr.bf16.mxu0 %v3757
      %4794 = vmatmul.mubr.bf16.gmra.mrb[0].mxu0 %v3513
      %v4795 = vpop.f32.mrb[0].mxu0
      %v4796 = vadd.f32 %v4491, %v4795
      %v4797 = vpop.f32.mrb[0].mxu0
      %v4798 = vpop.f32.mrb[0].mxu0
      %v4799 = vadd.f32 %v4494, %v4798
      %v4800 = vpop.f32.mrb[0].mxu0
      %4801 = vmatprep.mubr.bf16.mxu0 %v3769
      %4802 = vmatmul.mubr.bf16.gmra.mrb[0].mxu0 %v3514
      %v4803 = vpop.f32.mrb[0].mxu0
      %v4804 = vadd.f32 %v4499, %v4803
      %v4805 = vpop.f32.mrb[0].mxu0
      %v4806 = vpop.f32.mrb[0].mxu0
      %v4807 = vadd.f32 %v4502, %v4806
      %v4808 = vpop.f32.mrb[0].mxu0
      %4809 = vmatprep.mubr.bf16.mxu0 %v3781
      %4810 = vmatmul.mubr.bf16.gmra.mrb[0].mxu0 %v3515
      %v4811 = vpop.f32.mrb[0].mxu0
      %v4812 = vadd.f32 %v4507, %v4811
      %v4813 = vpop.f32.mrb[0].mxu0
      %v4814 = vpop.f32.mrb[0].mxu0
      %v4815 = vadd.f32 %v4510, %v4814
      %v4816 = vpop.f32.mrb[0].mxu0
      %4817 = vdwg.mxu0
      %4818 = vmatprep.subr.bf16.mxu0 0
      %4819 = vmatpush1.bf16.msra.mxu0 %v4625
      %4820 = vmatprep.subr.bf16.mxu0 0
      %4821 = vmatpush1.bf16.msra.mxu0 %v4626
      %4822 = vmatprep.subr.bf16.mxu0 0
      %4823 = vmatpush1.bf16.msra.mxu0 %v4627
      %4824 = vmatprep.subr.bf16.mxu0 0
      %4825 = vmatpush1.bf16.msra.mxu0 %v4628
      %4826 = vmatprep.subr.bf16.mxu0 0
      %4827 = vmatpush1.bf16.msra.mxu0 %v4629
      %4828 = vmatprep.subr.bf16.mxu0 0
      %4829 = vmatpush1.bf16.msra.mxu0 %v4630
      %4830 = vmatprep.subr.bf16.mxu0 0
      %4831 = vmatpush1.bf16.msra.mxu0 %v4631
      %4832 = vmatprep.subr.bf16.mxu0 0
      %4833 = vmatpush1.bf16.msra.mxu0 %v4632
      %4834 = vmatprep.subr.bf16.mxu0 0
      %4835 = vmatpush1.bf16.msra.mxu0 0
      %4836 = vmatprep.subr.bf16.mxu0 0
      %4837 = vmatpush1.bf16.msra.mxu0 0
      %4838 = vmatprep.subr.bf16.mxu0 0
      %4839 = vmatpush1.bf16.msra.mxu0 0
      %4840 = vmatprep.subr.bf16.mxu0 0
      %4841 = vmatpush1.bf16.msra.mxu0 0
      %4842 = vmatprep.subr.bf16.mxu0 0
      %4843 = vmatpush1.bf16.msra.mxu0 0
      %4844 = vmatprep.subr.bf16.mxu0 0
      %4845 = vmatpush1.bf16.msra.mxu0 0
      %4846 = vmatprep.subr.bf16.mxu0 0
      %4847 = vmatpush1.bf16.msra.mxu0 0
      %4848 = vmatprep.subr.bf16.mxu0 0
      %4849 = vmatpush1.bf16.msra.mxu0 0
      %4850 = vmatprep.mubr.bf16.mxu0 0
      %4851 = vmatmul.mubr.bf16.gmra.mrb[0].mxu0 %v3880
      %v4852 = vpop.f32.mrb[0].mxu0
      %v4853 = vadd.f32 %v4692, %v4852
      %v4854 = vpop.f32.mrb[0].mxu0
      %v4855 = vpop.f32.mrb[0].mxu0
      %v4856 = vadd.f32 %v4695, %v4855
      %v4857 = vpop.f32.mrb[0].mxu0
      %4858 = vmatprep.mubr.bf16.mxu0 0
      %4859 = vmatmul.mubr.bf16.gmra.mrb[0].mxu0 %v3883
      %v4860 = vpop.f32.mrb[0].mxu0
      %v4861 = vadd.f32 %v4700, %v4860
      %v4862 = vpop.f32.mrb[0].mxu0
      %v4863 = vpop.f32.mrb[0].mxu0
      %v4864 = vadd.f32 %v4703, %v4863
      %v4865 = vpop.f32.mrb[0].mxu0
      %4866 = vmatprep.mubr.bf16.mxu0 0
      %4867 = vmatmul.mubr.bf16.gmra.mrb[0].mxu0 %v3886
      %v4868 = vpop.f32.mrb[0].mxu0
      %v4869 = vadd.f32 %v4708, %v4868
      %v4870 = vpop.f32.mrb[0].mxu0
      %v4871 = vpop.f32.mrb[0].mxu0
      %v4872 = vadd.f32 %v4711, %v4871
      %v4873 = vpop.f32.mrb[0].mxu0
      %4874 = vmatprep.mubr.bf16.mxu0 0
      %4875 = vmatmul.mubr.bf16.gmra.mrb[0].mxu0 %v3889
      %v4876 = vpop.f32.mrb[0].mxu0
      %v4877 = vadd.f32 %v4716, %v4876
      %v4878 = vpop.f32.mrb[0].mxu0
      %v4879 = vpop.f32.mrb[0].mxu0
      %v4880 = vadd.f32 %v4719, %v4879
      %v4881 = vpop.f32.mrb[0].mxu0
      %4882 = vmatprep.mubr.bf16.mxu0 0
      %4883 = vmatmul.mubr.bf16.gmra.mrb[0].mxu0 %v3892
      %v4884 = vpop.f32.mrb[0].mxu0
      %v4885 = vadd.f32 %v4724, %v4884
      %v4886 = vpop.f32.mrb[0].mxu0
      %v4887 = vpop.f32.mrb[0].mxu0
      %v4888 = vadd.f32 %v4727, %v4887
      %v4889 = vpop.f32.mrb[0].mxu0
      %4890 = vmatprep.mubr.bf16.mxu0 0
      %4891 = vmatmul.mubr.bf16.gmra.mrb[0].mxu0 %v3895
      %v4892 = vpop.f32.mrb[0].mxu0
      %v4893 = vadd.f32 %v4732, %v4892
      %v4894 = vpop.f32.mrb[0].mxu0
      %v4895 = vpop.f32.mrb[0].mxu0
      %v4896 = vadd.f32 %v4735, %v4895
      %v4897 = vpop.f32.mrb[0].mxu0
      %4898 = vmatprep.mubr.bf16.mxu0 0
      %4899 = vmatmul.mubr.bf16.gmra.mrb[0].mxu0 %v3898
      %v4900 = vpop.f32.mrb[0].mxu0
      %v4901 = vadd.f32 %v4740, %v4900
      %v4902 = vpop.f32.mrb[0].mxu0
      %v4903 = vpop.f32.mrb[0].mxu0
      %v4904 = vadd.f32 %v4743, %v4903
      %v4905 = vpop.f32.mrb[0].mxu0
      %4906 = vmatprep.mubr.bf16.mxu0 0
      %4907 = vmatmul.mubr.bf16.gmra.mrb[0].mxu0 %v3901
      %v4908 = vpop.f32.mrb[0].mxu0
      %v4909 = vadd.f32 %v4748, %v4908
      %v4910 = vpop.f32.mrb[0].mxu0
      %v4911 = vpop.f32.mrb[0].mxu0
      %v4912 = vadd.f32 %v4751, %v4911
      %v4913 = vpop.f32.mrb[0].mxu0
      %4914 = vmatprep.mubr.bf16.mxu0 0
      %4915 = vmatmul.mubr.bf16.gmra.mrb[0].mxu0 %v3904
      %v4916 = vpop.f32.mrb[0].mxu0
      %v4917 = vadd.f32 %v4756, %v4916
      %v4918 = vpop.f32.mrb[0].mxu0
      %v4919 = vpop.f32.mrb[0].mxu0
      %v4920 = vadd.f32 %v4759, %v4919
      %v4921 = vpop.f32.mrb[0].mxu0
      %4922 = vmatprep.mubr.bf16.mxu0 0
      %4923 = vmatmul.mubr.bf16.gmra.mrb[0].mxu0 %v3907
      %v4924 = vpop.f32.mrb[0].mxu0
      %v4925 = vadd.f32 %v4764, %v4924
      %v4926 = vpop.f32.mrb[0].mxu0
      %v4927 = vpop.f32.mrb[0].mxu0
      %v4928 = vadd.f32 %v4767, %v4927
      %v4929 = vpop.f32.mrb[0].mxu0
      %4930 = vmatprep.mubr.bf16.mxu0 0
      %4931 = vmatmul.mubr.bf16.gmra.mrb[0].mxu0 %v3910
      %v4932 = vpop.f32.mrb[0].mxu0
      %v4933 = vadd.f32 %v4772, %v4932
      %v4934 = vpop.f32.mrb[0].mxu0
      %v4935 = vpop.f32.mrb[0].mxu0
      %v4936 = vadd.f32 %v4775, %v4935
      %v4937 = vpop.f32.mrb[0].mxu0
      %4938 = vmatprep.mubr.bf16.mxu0 0
      %4939 = vmatmul.mubr.bf16.gmra.mrb[0].mxu0 %v3913
      %v4940 = vpop.f32.mrb[0].mxu0
      %v4941 = vadd.f32 %v4780, %v4940
      %v4942 = vpop.f32.mrb[0].mxu0
      %v4943 = vpop.f32.mrb[0].mxu0
      %v4944 = vadd.f32 %v4783, %v4943
      %v4945 = vpop.f32.mrb[0].mxu0
      %4946 = vmatprep.mubr.bf16.mxu0 0
      %4947 = vmatmul.mubr.bf16.gmra.mrb[0].mxu0 %v3916
      %v4948 = vpop.f32.mrb[0].mxu0
      %v4949 = vadd.f32 %v4788, %v4948
      %v4950 = vpop.f32.mrb[0].mxu0
      %v4951 = vpop.f32.mrb[0].mxu0
      %v4952 = vadd.f32 %v4791, %v4951
      %v4953 = vpop.f32.mrb[0].mxu0
      %4954 = vmatprep.mubr.bf16.mxu0 0
      %4955 = vmatmul.mubr.bf16.gmra.mrb[0].mxu0 %v3919
      %v4956 = vpop.f32.mrb[0].mxu0
      %v4957 = vadd.f32 %v4796, %v4956
      %v4958 = vpop.f32.mrb[0].mxu0
      %v4959 = vpop.f32.mrb[0].mxu0
      %v4960 = vadd.f32 %v4799, %v4959
      %v4961 = vpop.f32.mrb[0].mxu0
      %4962 = vmatprep.mubr.bf16.mxu0 0
      %4963 = vmatmul.mubr.bf16.gmra.mrb[0].mxu0 %v3922
      %v4964 = vpop.f32.mrb[0].mxu0
      %v4965 = vadd.f32 %v4804, %v4964
      %v4966 = vpop.f32.mrb[0].mxu0
      %v4967 = vpop.f32.mrb[0].mxu0
      %v4968 = vadd.f32 %v4807, %v4967
      %v4969 = vpop.f32.mrb[0].mxu0
      %4970 = vmatprep.mubr.bf16.mxu0 0
      %4971 = vmatmul.mubr.bf16.gmra.mrb[0].mxu0 %v3925
      %v4972 = vpop.f32.mrb[0].mxu0
      %v4973 = vadd.f32 %v4812, %v4972
      %v4974 = vpop.f32.mrb[0].mxu0
      %v4975 = vpop.f32.mrb[0].mxu0
      %v4976 = vadd.f32 %v4815, %v4975
      %v4977 = vpop.f32.mrb[0].mxu0
      %4978 = vdwg.mxu0
      %s4979 = scalar_lea.vmem %s316, 384
      %v4980 = vld [vmem:[%s4979] sm:$0xf]
      %v4981 = vld [vmem:[%s4979 + $0x4] sm:$0xf]
      %v4982 = vld [vmem:[%s4979 + $0x8] sm:$0xf]
      %v4983 = vld [vmem:[%s4979 + $0xc] sm:$0xf]
      %v4984 = vld [vmem:[%s4979 + $0x10] sm:$0xf]
      %v4985 = vld [vmem:[%s4979 + $0x14] sm:$0xf]
      %v4986 = vld [vmem:[%s4979 + $0x18] sm:$0xf]
      %v4987 = vld [vmem:[%s4979 + $0x1c] sm:$0xf]
      %v4988 = vld [vmem:[%s4979 + $0x20] sm:$0xf]
      %v4989 = vld [vmem:[%s4979 + $0x24] sm:$0xf]
      %v4990 = vld [vmem:[%s4979 + $0x28] sm:$0xf]
      %v4991 = vld [vmem:[%s4979 + $0x2c] sm:$0xf]
      %v4992 = vld [vmem:[%s4979 + $0x30] sm:$0xf]
      %v4993 = vld [vmem:[%s4979 + $0x34] sm:$0xf]
      %v4994 = vld [vmem:[%s4979 + $0x38] sm:$0xf]
      %v4995 = vld [vmem:[%s4979 + $0x3c] sm:$0xf]
      %v4996 = vld [vmem:[%s4979 + $0x40] sm:$0xf]
      %v4997 = vld [vmem:[%s4979 + $0x44] sm:$0xf]
      %v4998 = vld [vmem:[%s4979 + $0x48] sm:$0xf]
      %v4999 = vld [vmem:[%s4979 + $0x4c] sm:$0xf]
      %v5000 = vld [vmem:[%s4979 + $0x50] sm:$0xf]
      %v5001 = vld [vmem:[%s4979 + $0x54] sm:$0xf]
      %v5002 = vld [vmem:[%s4979 + $0x58] sm:$0xf]
      %v5003 = vld [vmem:[%s4979 + $0x5c] sm:$0xf]
      %v5004 = vld [vmem:[%s4979 + $0x60] sm:$0xf]
      %v5005 = vld [vmem:[%s4979 + $0x64] sm:$0xf]
      %v5006 = vld [vmem:[%s4979 + $0x68] sm:$0xf]
      %v5007 = vld [vmem:[%s4979 + $0x6c] sm:$0xf]
      %v5008 = vld [vmem:[%s4979 + $0x70] sm:$0xf]
      %v5009 = vld [vmem:[%s4979 + $0x74] sm:$0xf]
      %v5010 = vld [vmem:[%s4979 + $0x78] sm:$0xf]
      %v5011 = vld [vmem:[%s4979 + $0x7c] sm:$0xf]
      %v5012 = vld [vmem:[%s4979 + $0x80] sm:$0xf]
      %v5013 = vld [vmem:[%s4979 + $0x84] sm:$0xf]
      %v5014 = vld [vmem:[%s4979 + $0x88] sm:$0xf]
      %v5015 = vld [vmem:[%s4979 + $0x8c] sm:$0xf]
      %v5016 = vld [vmem:[%s4979 + $0x90] sm:$0xf]
      %v5017 = vld [vmem:[%s4979 + $0x94] sm:$0xf]
      %v5018 = vld [vmem:[%s4979 + $0x98] sm:$0xf]
      %v5019 = vld [vmem:[%s4979 + $0x9c] sm:$0xf]
      %v5020 = vld [vmem:[%s4979 + $0xa0] sm:$0xf]
      %v5021 = vld [vmem:[%s4979 + $0xa4] sm:$0xf]
      %v5022 = vld [vmem:[%s4979 + $0xa8] sm:$0xf]
      %v5023 = vld [vmem:[%s4979 + $0xac] sm:$0xf]
      %v5024 = vld [vmem:[%s4979 + $0xb0] sm:$0xf]
      %v5025 = vld [vmem:[%s4979 + $0xb4] sm:$0xf]
      %v5026 = vld [vmem:[%s4979 + $0xb8] sm:$0xf]
      %v5027 = vld [vmem:[%s4979 + $0xbc] sm:$0xf]
      %v5076 = vunpack.c.l.b16 %v4980
      %v5077 = vunpack.c.l.b16 %v4981
      %v5078 = vunpack.c.l.b16 %v4982
      %v5079 = vunpack.c.l.b16 %v4983
      %v5080 = vunpack.c.l.b16 %v4984
      %v5081 = vunpack.c.l.b16 %v4985
      %v5082 = vunpack.c.l.b16 %v4986
      %v5083 = vunpack.c.l.b16 %v4987
      %v5084 = vunpack.c.l.b16 %v4988
      %v5085 = vunpack.c.l.b16 %v4989
      %v5086 = vunpack.c.l.b16 %v4990
      %v5087 = vunpack.c.l.b16 %v4991
      %v5088 = vunpack.c.l.b16 %v4992
      %v5089 = vunpack.c.l.b16 %v4993
      %v5090 = vunpack.c.l.b16 %v4994
      %v5091 = vunpack.c.l.b16 %v4995
      %v5092 = vunpack.c.l.b16 %v4996
      %v5093 = vunpack.c.l.b16 %v4997
      %v5094 = vunpack.c.l.b16 %v4998
      %v5095 = vunpack.c.l.b16 %v4999
      %v5096 = vunpack.c.l.b16 %v5000
      %v5097 = vunpack.c.l.b16 %v5001
      %v5098 = vunpack.c.l.b16 %v5002
      %v5099 = vunpack.c.l.b16 %v5003
      %v5100 = vunpack.c.l.b16 %v5004
      %v5101 = vunpack.c.l.b16 %v5005
      %v5102 = vunpack.c.l.b16 %v5006
      %v5103 = vunpack.c.l.b16 %v5007
      %v5104 = vunpack.c.l.b16 %v5008
      %v5105 = vunpack.c.l.b16 %v5009
      %v5106 = vunpack.c.l.b16 %v5010
      %v5107 = vunpack.c.l.b16 %v5011
      %v5108 = vunpack.c.l.b16 %v5012
      %v5109 = vunpack.c.l.b16 %v5013
      %v5110 = vunpack.c.l.b16 %v5014
      %v5111 = vunpack.c.l.b16 %v5015
      %v5112 = vunpack.c.l.b16 %v5016
      %v5113 = vunpack.c.l.b16 %v5017
      %v5114 = vunpack.c.l.b16 %v5018
      %v5115 = vunpack.c.l.b16 %v5019
      %v5116 = vunpack.c.l.b16 %v5020
      %v5117 = vunpack.c.l.b16 %v5021
      %v5118 = vunpack.c.l.b16 %v5022
      %v5119 = vunpack.c.l.b16 %v5023
      %v5120 = vunpack.c.l.b16 %v5024
      %v5121 = vunpack.c.l.b16 %v5025
      %v5122 = vunpack.c.l.b16 %v5026
      %v5123 = vunpack.c.l.b16 %v5027
      %v5124 = vpack.c.b16 %v5077, %v5076
      %v5125 = vpack.c.b16 %v5079, %v5078
      %v5126 = vpack.c.b16 %v5081, %v5080
      %v5127 = vpack.c.b16 %v5083, %v5082
      %v5128 = vpack.c.b16 %v5085, %v5084
      %v5129 = vpack.c.b16 %v5087, %v5086
      %v5130 = vpack.c.b16 %v5089, %v5088
      %v5131 = vpack.c.b16 %v5091, %v5090
      %v5132 = vpack.c.b16 %v5093, %v5092
      %v5133 = vpack.c.b16 %v5095, %v5094
      %v5134 = vpack.c.b16 %v5097, %v5096
      %v5135 = vpack.c.b16 %v5099, %v5098
      %v5136 = vpack.c.b16 %v5101, %v5100
      %v5137 = vpack.c.b16 %v5103, %v5102
      %v5138 = vpack.c.b16 %v5105, %v5104
      %v5139 = vpack.c.b16 %v5107, %v5106
      %v5140 = vpack.c.b16 %v5109, %v5108
      %v5141 = vpack.c.b16 %v5111, %v5110
      %v5142 = vpack.c.b16 %v5113, %v5112
      %v5143 = vpack.c.b16 %v5115, %v5114
      %v5144 = vpack.c.b16 %v5117, %v5116
      %v5145 = vpack.c.b16 %v5119, %v5118
      %v5146 = vpack.c.b16 %v5121, %v5120
      %v5147 = vpack.c.b16 %v5123, %v5122
      %5172 = vmatprep.subr.bf16.mxu0 0
      %5173 = vmatpush1.bf16.msra.mxu0 %v5124
      %5174 = vmatprep.subr.bf16.mxu0 0
      %5175 = vmatpush1.bf16.msra.mxu0 %v5125
      %5176 = vmatprep.subr.bf16.mxu0 0
      %5177 = vmatpush1.bf16.msra.mxu0 %v5126
      %5178 = vmatprep.subr.bf16.mxu0 0
      %5179 = vmatpush1.bf16.msra.mxu0 %v5127
      %5180 = vmatprep.subr.bf16.mxu0 0
      %5181 = vmatpush1.bf16.msra.mxu0 %v5128
      %5182 = vmatprep.subr.bf16.mxu0 0
      %5183 = vmatpush1.bf16.msra.mxu0 %v5129
      %5184 = vmatprep.subr.bf16.mxu0 0
      %5185 = vmatpush1.bf16.msra.mxu0 %v5130
      %5186 = vmatprep.subr.bf16.mxu0 0
      %5187 = vmatpush1.bf16.msra.mxu0 %v5131
      %5188 = vmatprep.subr.bf16.mxu0 0
      %5189 = vmatpush1.bf16.msra.mxu0 %v5132
      %5190 = vmatprep.subr.bf16.mxu0 0
      %5191 = vmatpush1.bf16.msra.mxu0 %v5133
      %5192 = vmatprep.subr.bf16.mxu0 0
      %5193 = vmatpush1.bf16.msra.mxu0 %v5134
      %5194 = vmatprep.subr.bf16.mxu0 0
      %5195 = vmatpush1.bf16.msra.mxu0 %v5135
      %5196 = vmatprep.subr.bf16.mxu0 0
      %5197 = vmatpush1.bf16.msra.mxu0 %v5136
      %5198 = vmatprep.subr.bf16.mxu0 0
      %5199 = vmatpush1.bf16.msra.mxu0 %v5137
      %5200 = vmatprep.subr.bf16.mxu0 0
      %5201 = vmatpush1.bf16.msra.mxu0 %v5138
      %5202 = vmatprep.subr.bf16.mxu0 0
      %5203 = vmatpush1.bf16.msra.mxu0 %v5139
      %5204 = vmatprep.mubr.bf16.mxu0 %v3625
      %5205 = vmatmul.mubr.bf16.gmra.mrb[0].mxu0 %v3502
      %v5206 = vpop.f32.mrb[0].mxu0
      %v5207 = vadd.f32 0.0, %v5206
      %v5208 = vpop.f32.mrb[0].mxu0
      %v5209 = vpop.f32.mrb[0].mxu0
      %v5210 = vadd.f32 0.0, %v5209
      %v5211 = vpop.f32.mrb[0].mxu0
      %5212 = vmatprep.mubr.bf16.mxu0 %v3637
      %5213 = vmatmul.mubr.bf16.gmra.mrb[0].mxu0 %v3503
      %v5214 = vpop.f32.mrb[0].mxu0
      %v5215 = vadd.f32 0.0, %v5214
      %v5216 = vpop.f32.mrb[0].mxu0
      %v5217 = vpop.f32.mrb[0].mxu0
      %v5218 = vadd.f32 0.0, %v5217
      %v5219 = vpop.f32.mrb[0].mxu0
      %5220 = vmatprep.mubr.bf16.mxu0 %v3649
      %5221 = vmatmul.mubr.bf16.gmra.mrb[0].mxu0 %v3504
      %v5222 = vpop.f32.mrb[0].mxu0
      %v5223 = vadd.f32 0.0, %v5222
      %v5224 = vpop.f32.mrb[0].mxu0
      %v5225 = vpop.f32.mrb[0].mxu0
      %v5226 = vadd.f32 0.0, %v5225
      %v5227 = vpop.f32.mrb[0].mxu0
      %5228 = vmatprep.mubr.bf16.mxu0 %v3661
      %5229 = vmatmul.mubr.bf16.gmra.mrb[0].mxu0 %v3505
      %v5230 = vpop.f32.mrb[0].mxu0
      %v5231 = vadd.f32 0.0, %v5230
      %v5232 = vpop.f32.mrb[0].mxu0
      %v5233 = vpop.f32.mrb[0].mxu0
      %v5234 = vadd.f32 0.0, %v5233
      %v5235 = vpop.f32.mrb[0].mxu0
      %5236 = vmatprep.mubr.bf16.mxu0 %v3673
      %5237 = vmatmul.mubr.bf16.gmra.mrb[0].mxu0 %v3506
      %v5238 = vpop.f32.mrb[0].mxu0
      %v5239 = vadd.f32 0.0, %v5238
      %v5240 = vpop.f32.mrb[0].mxu0
      %v5241 = vpop.f32.mrb[0].mxu0
      %v5242 = vadd.f32 0.0, %v5241
      %v5243 = vpop.f32.mrb[0].mxu0
      %5244 = vmatprep.mubr.bf16.mxu0 %v3685
      %5245 = vmatmul.mubr.bf16.gmra.mrb[0].mxu0 %v3507
      %v5246 = vpop.f32.mrb[0].mxu0
      %v5247 = vadd.f32 0.0, %v5246
      %v5248 = vpop.f32.mrb[0].mxu0
      %v5249 = vpop.f32.mrb[0].mxu0
      %v5250 = vadd.f32 0.0, %v5249
      %v5251 = vpop.f32.mrb[0].mxu0
      %5252 = vmatprep.mubr.bf16.mxu0 %v3697
      %5253 = vmatmul.mubr.bf16.gmra.mrb[0].mxu0 %v3508
      %v5254 = vpop.f32.mrb[0].mxu0
      %v5255 = vadd.f32 0.0, %v5254
      %v5256 = vpop.f32.mrb[0].mxu0
      %v5257 = vpop.f32.mrb[0].mxu0
      %v5258 = vadd.f32 0.0, %v5257
      %v5259 = vpop.f32.mrb[0].mxu0
      %5260 = vmatprep.mubr.bf16.mxu0 %v3709
      %5261 = vmatmul.mubr.bf16.gmra.mrb[0].mxu0 %v3509
      %v5262 = vpop.f32.mrb[0].mxu0
      %v5263 = vadd.f32 0.0, %v5262
      %v5264 = vpop.f32.mrb[0].mxu0
      %v5265 = vpop.f32.mrb[0].mxu0
      %v5266 = vadd.f32 0.0, %v5265
      %v5267 = vpop.f32.mrb[0].mxu0
      %5268 = vmatprep.mubr.bf16.mxu0 %v3721
      %5269 = vmatmul.mubr.bf16.gmra.mrb[0].mxu0 %v3510
      %v5270 = vpop.f32.mrb[0].mxu0
      %v5271 = vadd.f32 0.0, %v5270
      %v5272 = vpop.f32.mrb[0].mxu0
      %v5273 = vpop.f32.mrb[0].mxu0
      %v5274 = vadd.f32 0.0, %v5273
      %v5275 = vpop.f32.mrb[0].mxu0
      %5276 = vmatprep.mubr.bf16.mxu0 %v3733
      %5277 = vmatmul.mubr.bf16.gmra.mrb[0].mxu0 %v3511
      %v5278 = vpop.f32.mrb[0].mxu0
      %v5279 = vadd.f32 0.0, %v5278
      %v5280 = vpop.f32.mrb[0].mxu0
      %v5281 = vpop.f32.mrb[0].mxu0
      %v5282 = vadd.f32 0.0, %v5281
      %v5283 = vpop.f32.mrb[0].mxu0
      %5284 = vmatprep.mubr.bf16.mxu0 %v3745
      %5285 = vmatmul.mubr.bf16.gmra.mrb[0].mxu0 %v3512
      %v5286 = vpop.f32.mrb[0].mxu0
      %v5287 = vadd.f32 0.0, %v5286
      %v5288 = vpop.f32.mrb[0].mxu0
      %v5289 = vpop.f32.mrb[0].mxu0
      %v5290 = vadd.f32 0.0, %v5289
      %v5291 = vpop.f32.mrb[0].mxu0
      %5292 = vmatprep.mubr.bf16.mxu0 %v3757
      %5293 = vmatmul.mubr.bf16.gmra.mrb[0].mxu0 %v3513
      %v5294 = vpop.f32.mrb[0].mxu0
      %v5295 = vadd.f32 0.0, %v5294
      %v5296 = vpop.f32.mrb[0].mxu0
      %v5297 = vpop.f32.mrb[0].mxu0
      %v5298 = vadd.f32 0.0, %v5297
      %v5299 = vpop.f32.mrb[0].mxu0
      %5300 = vmatprep.mubr.bf16.mxu0 %v3769
      %5301 = vmatmul.mubr.bf16.gmra.mrb[0].mxu0 %v3514
      %v5302 = vpop.f32.mrb[0].mxu0
      %v5303 = vadd.f32 0.0, %v5302
      %v5304 = vpop.f32.mrb[0].mxu0
      %v5305 = vpop.f32.mrb[0].mxu0
      %v5306 = vadd.f32 0.0, %v5305
      %v5307 = vpop.f32.mrb[0].mxu0
      %5308 = vmatprep.mubr.bf16.mxu0 %v3781
      %5309 = vmatmul.mubr.bf16.gmra.mrb[0].mxu0 %v3515
      %v5310 = vpop.f32.mrb[0].mxu0
      %v5311 = vadd.f32 0.0, %v5310
      %v5312 = vpop.f32.mrb[0].mxu0
      %v5313 = vpop.f32.mrb[0].mxu0
      %v5314 = vadd.f32 0.0, %v5313
      %v5315 = vpop.f32.mrb[0].mxu0
      %5316 = vmatprep.mubr.bf16.mxu0 %v3793
      %5317 = vmatmul.mubr.bf16.gmra.mrb[0].mxu0 %v3516
      %v5318 = vpop.f32.mrb[0].mxu0
      %v5319 = vadd.f32 0.0, %v5318
      %v5320 = vpop.f32.mrb[0].mxu0
      %v5321 = vpop.f32.mrb[0].mxu0
      %v5322 = vadd.f32 0.0, %v5321
      %v5323 = vpop.f32.mrb[0].mxu0
      %5324 = vmatprep.mubr.bf16.mxu0 %v3805
      %5325 = vmatmul.mubr.bf16.gmra.mrb[0].mxu0 %v3517
      %v5326 = vpop.f32.mrb[0].mxu0
      %v5327 = vadd.f32 0.0, %v5326
      %v5328 = vpop.f32.mrb[0].mxu0
      %v5329 = vpop.f32.mrb[0].mxu0
      %v5330 = vadd.f32 0.0, %v5329
      %v5331 = vpop.f32.mrb[0].mxu0
      %5332 = vdwg.mxu0
      %5333 = vmatprep.subr.bf16.mxu0 0
      %5334 = vmatpush1.bf16.msra.mxu0 %v5140
      %5335 = vmatprep.subr.bf16.mxu0 0
      %5336 = vmatpush1.bf16.msra.mxu0 %v5141
      %5337 = vmatprep.subr.bf16.mxu0 0
      %5338 = vmatpush1.bf16.msra.mxu0 %v5142
      %5339 = vmatprep.subr.bf16.mxu0 0
      %5340 = vmatpush1.bf16.msra.mxu0 %v5143
      %5341 = vmatprep.subr.bf16.mxu0 0
      %5342 = vmatpush1.bf16.msra.mxu0 %v5144
      %5343 = vmatprep.subr.bf16.mxu0 0
      %5344 = vmatpush1.bf16.msra.mxu0 %v5145
      %5345 = vmatprep.subr.bf16.mxu0 0
      %5346 = vmatpush1.bf16.msra.mxu0 %v5146
      %5347 = vmatprep.subr.bf16.mxu0 0
      %5348 = vmatpush1.bf16.msra.mxu0 %v5147
      %5349 = vmatprep.subr.bf16.mxu0 0
      %5350 = vmatpush1.bf16.msra.mxu0 0
      %5351 = vmatprep.subr.bf16.mxu0 0
      %5352 = vmatpush1.bf16.msra.mxu0 0
      %5353 = vmatprep.subr.bf16.mxu0 0
      %5354 = vmatpush1.bf16.msra.mxu0 0
      %5355 = vmatprep.subr.bf16.mxu0 0
      %5356 = vmatpush1.bf16.msra.mxu0 0
      %5357 = vmatprep.subr.bf16.mxu0 0
      %5358 = vmatpush1.bf16.msra.mxu0 0
      %5359 = vmatprep.subr.bf16.mxu0 0
      %5360 = vmatpush1.bf16.msra.mxu0 0
      %5361 = vmatprep.subr.bf16.mxu0 0
      %5362 = vmatpush1.bf16.msra.mxu0 0
      %5363 = vmatprep.subr.bf16.mxu0 0
      %5364 = vmatpush1.bf16.msra.mxu0 0
      %5365 = vmatprep.mubr.bf16.mxu0 0
      %5366 = vmatmul.mubr.bf16.gmra.mrb[0].mxu0 %v3886
      %v5367 = vpop.f32.mrb[0].mxu0
      %v5368 = vadd.f32 %v5207, %v5367
      %v5369 = vpop.f32.mrb[0].mxu0
      %v5370 = vpop.f32.mrb[0].mxu0
      %v5371 = vadd.f32 %v5210, %v5370
      %v5372 = vpop.f32.mrb[0].mxu0
      %5373 = vmatprep.mubr.bf16.mxu0 0
      %5374 = vmatmul.mubr.bf16.gmra.mrb[0].mxu0 %v3889
      %v5375 = vpop.f32.mrb[0].mxu0
      %v5376 = vadd.f32 %v5215, %v5375
      %v5377 = vpop.f32.mrb[0].mxu0
      %v5378 = vpop.f32.mrb[0].mxu0
      %v5379 = vadd.f32 %v5218, %v5378
      %v5380 = vpop.f32.mrb[0].mxu0
      %5381 = vmatprep.mubr.bf16.mxu0 0
      %5382 = vmatmul.mubr.bf16.gmra.mrb[0].mxu0 %v3892
      %v5383 = vpop.f32.mrb[0].mxu0
      %v5384 = vadd.f32 %v5223, %v5383
      %v5385 = vpop.f32.mrb[0].mxu0
      %v5386 = vpop.f32.mrb[0].mxu0
      %v5387 = vadd.f32 %v5226, %v5386
      %v5388 = vpop.f32.mrb[0].mxu0
      %5389 = vmatprep.mubr.bf16.mxu0 0
      %5390 = vmatmul.mubr.bf16.gmra.mrb[0].mxu0 %v3895
      %v5391 = vpop.f32.mrb[0].mxu0
      %v5392 = vadd.f32 %v5231, %v5391
      %v5393 = vpop.f32.mrb[0].mxu0
      %v5394 = vpop.f32.mrb[0].mxu0
      %v5395 = vadd.f32 %v5234, %v5394
      %v5396 = vpop.f32.mrb[0].mxu0
      %5397 = vmatprep.mubr.bf16.mxu0 0
      %5398 = vmatmul.mubr.bf16.gmra.mrb[0].mxu0 %v3898
      %v5399 = vpop.f32.mrb[0].mxu0
      %v5400 = vadd.f32 %v5239, %v5399
      %v5401 = vpop.f32.mrb[0].mxu0
      %v5402 = vpop.f32.mrb[0].mxu0
      %v5403 = vadd.f32 %v5242, %v5402
      %v5404 = vpop.f32.mrb[0].mxu0
      %5405 = vmatprep.mubr.bf16.mxu0 0
      %5406 = vmatmul.mubr.bf16.gmra.mrb[0].mxu0 %v3901
      %v5407 = vpop.f32.mrb[0].mxu0
      %v5408 = vadd.f32 %v5247, %v5407
      %v5409 = vpop.f32.mrb[0].mxu0
      %v5410 = vpop.f32.mrb[0].mxu0
      %v5411 = vadd.f32 %v5250, %v5410
      %v5412 = vpop.f32.mrb[0].mxu0
      %5413 = vmatprep.mubr.bf16.mxu0 0
      %5414 = vmatmul.mubr.bf16.gmra.mrb[0].mxu0 %v3904
      %v5415 = vpop.f32.mrb[0].mxu0
      %v5416 = vadd.f32 %v5255, %v5415
      %v5417 = vpop.f32.mrb[0].mxu0
      %v5418 = vpop.f32.mrb[0].mxu0
      %v5419 = vadd.f32 %v5258, %v5418
      %v5420 = vpop.f32.mrb[0].mxu0
      %5421 = vmatprep.mubr.bf16.mxu0 0
      %5422 = vmatmul.mubr.bf16.gmra.mrb[0].mxu0 %v3907
      %v5423 = vpop.f32.mrb[0].mxu0
      %v5424 = vadd.f32 %v5263, %v5423
      %v5425 = vpop.f32.mrb[0].mxu0
      %v5426 = vpop.f32.mrb[0].mxu0
      %v5427 = vadd.f32 %v5266, %v5426
      %v5428 = vpop.f32.mrb[0].mxu0
      %5429 = vmatprep.mubr.bf16.mxu0 0
      %5430 = vmatmul.mubr.bf16.gmra.mrb[0].mxu0 %v3910
      %v5431 = vpop.f32.mrb[0].mxu0
      %v5432 = vadd.f32 %v5271, %v5431
      %v5433 = vpop.f32.mrb[0].mxu0
      %v5434 = vpop.f32.mrb[0].mxu0
      %v5435 = vadd.f32 %v5274, %v5434
      %v5436 = vpop.f32.mrb[0].mxu0
      %5437 = vmatprep.mubr.bf16.mxu0 0
      %5438 = vmatmul.mubr.bf16.gmra.mrb[0].mxu0 %v3913
      %v5439 = vpop.f32.mrb[0].mxu0
      %v5440 = vadd.f32 %v5279, %v5439
      %v5441 = vpop.f32.mrb[0].mxu0
      %v5442 = vpop.f32.mrb[0].mxu0
      %v5443 = vadd.f32 %v5282, %v5442
      %v5444 = vpop.f32.mrb[0].mxu0
      %5445 = vmatprep.mubr.bf16.mxu0 0
      %5446 = vmatmul.mubr.bf16.gmra.mrb[0].mxu0 %v3916
      %v5447 = vpop.f32.mrb[0].mxu0
      %v5448 = vadd.f32 %v5287, %v5447
      %v5449 = vpop.f32.mrb[0].mxu0
      %v5450 = vpop.f32.mrb[0].mxu0
      %v5451 = vadd.f32 %v5290, %v5450
      %v5452 = vpop.f32.mrb[0].mxu0
      %5453 = vmatprep.mubr.bf16.mxu0 0
      %5454 = vmatmul.mubr.bf16.gmra.mrb[0].mxu0 %v3919
      %v5455 = vpop.f32.mrb[0].mxu0
      %v5456 = vadd.f32 %v5295, %v5455
      %v5457 = vpop.f32.mrb[0].mxu0
      %v5458 = vpop.f32.mrb[0].mxu0
      %v5459 = vadd.f32 %v5298, %v5458
      %v5460 = vpop.f32.mrb[0].mxu0
      %5461 = vmatprep.mubr.bf16.mxu0 0
      %5462 = vmatmul.mubr.bf16.gmra.mrb[0].mxu0 %v3922
      %v5463 = vpop.f32.mrb[0].mxu0
      %v5464 = vadd.f32 %v5303, %v5463
      %v5465 = vpop.f32.mrb[0].mxu0
      %v5466 = vpop.f32.mrb[0].mxu0
      %v5467 = vadd.f32 %v5306, %v5466
      %v5468 = vpop.f32.mrb[0].mxu0
      %5469 = vmatprep.mubr.bf16.mxu0 0
      %5470 = vmatmul.mubr.bf16.gmra.mrb[0].mxu0 %v3925
      %v5471 = vpop.f32.mrb[0].mxu0
      %v5472 = vadd.f32 %v5311, %v5471
      %v5473 = vpop.f32.mrb[0].mxu0
      %v5474 = vpop.f32.mrb[0].mxu0
      %v5475 = vadd.f32 %v5314, %v5474
      %v5476 = vpop.f32.mrb[0].mxu0
      %5477 = vmatprep.mubr.bf16.mxu0 0
      %5478 = vmatmul.mubr.bf16.gmra.mrb[0].mxu0 %v3928
      %v5479 = vpop.f32.mrb[0].mxu0
      %v5480 = vadd.f32 %v5319, %v5479
      %v5481 = vpop.f32.mrb[0].mxu0
      %v5482 = vpop.f32.mrb[0].mxu0
      %v5483 = vadd.f32 %v5322, %v5482
      %v5484 = vpop.f32.mrb[0].mxu0
      %5485 = vmatprep.mubr.bf16.mxu0 0
      %5486 = vmatmul.mubr.bf16.gmra.mrb[0].mxu0 %v3931
      %v5487 = vpop.f32.mrb[0].mxu0
      %v5488 = vadd.f32 %v5327, %v5487
      %v5489 = vpop.f32.mrb[0].mxu0
      %v5490 = vpop.f32.mrb[0].mxu0
      %v5491 = vadd.f32 %v5330, %v5490
      %v5492 = vpop.f32.mrb[0].mxu0
      %5493 = vdwg.mxu0
      %v5494 = vadd.f32 %v4853, %v5368
      %v5495 = vadd.f32 %v4856, %v5371
      %v5496 = vadd.f32 %v4861, %v5376
      %v5497 = vadd.f32 %v4864, %v5379
      %v5498 = vadd.f32 %v4869, %v5384
      %v5499 = vadd.f32 %v4872, %v5387
      %v5500 = vadd.f32 %v4877, %v5392
      %v5501 = vadd.f32 %v4880, %v5395
      %v5502 = vadd.f32 %v4885, %v5400
      %v5503 = vadd.f32 %v4888, %v5403
      %v5504 = vadd.f32 %v4893, %v5408
      %v5505 = vadd.f32 %v4896, %v5411
      %v5506 = vadd.f32 %v4901, %v5416
      %v5507 = vadd.f32 %v4904, %v5419
      %v5508 = vadd.f32 %v4909, %v5424
      %v5509 = vadd.f32 %v4912, %v5427
      %v5510 = vadd.f32 %v4917, %v5432
      %v5511 = vadd.f32 %v4920, %v5435
      %v5512 = vadd.f32 %v4925, %v5440
      %v5513 = vadd.f32 %v4928, %v5443
      %v5514 = vadd.f32 %v4933, %v5448
      %v5515 = vadd.f32 %v4936, %v5451
      %v5516 = vadd.f32 %v4941, %v5456
      %v5517 = vadd.f32 %v4944, %v5459
      %v5518 = vadd.f32 %v4949, %v5464
      %v5519 = vadd.f32 %v4952, %v5467
      %v5520 = vadd.f32 %v4957, %v5472
      %v5521 = vadd.f32 %v4960, %v5475
      %v5522 = vadd.f32 %v4965, %v5480
      %v5523 = vadd.f32 %v4968, %v5483
      %v5524 = vadd.f32 %v4973, %v5488
      %v5525 = vadd.f32 %v4976, %v5491
      %v5526 = vld [vmem:[%s319] sm:$0x1]
      %v5528 = vlaneseq
      %v5529 = vshrl.u32 %v5528, 7
      %v5530 = vsub.s32 0, %v5529
      %v5531 = vrot.slane %v5526, %v5530
      %v5533 = vadd.f32 %v5494, %v5531
      %v5534 = vadd.f32 %v5495, %v5531
      %v5535 = vadd.f32 %v5496, %v5531
      %v5536 = vadd.f32 %v5497, %v5531
      %v5537 = vadd.f32 %v5498, %v5531
      %v5538 = vadd.f32 %v5499, %v5531
      %v5539 = vadd.f32 %v5500, %v5531
      %v5540 = vadd.f32 %v5501, %v5531
      %v5541 = vadd.f32 %v5502, %v5531
      %v5542 = vadd.f32 %v5503, %v5531
      %v5543 = vadd.f32 %v5504, %v5531
      %v5544 = vadd.f32 %v5505, %v5531
      %v5545 = vadd.f32 %v5506, %v5531
      %v5546 = vadd.f32 %v5507, %v5531
      %v5547 = vadd.f32 %v5508, %v5531
      %v5548 = vadd.f32 %v5509, %v5531
      %v5549 = vadd.f32 %v5510, %v5531
      %v5550 = vadd.f32 %v5511, %v5531
      %v5551 = vadd.f32 %v5512, %v5531
      %v5552 = vadd.f32 %v5513, %v5531
      %v5553 = vadd.f32 %v5514, %v5531
      %v5554 = vadd.f32 %v5515, %v5531
      %v5555 = vadd.f32 %v5516, %v5531
      %v5556 = vadd.f32 %v5517, %v5531
      %v5557 = vadd.f32 %v5518, %v5531
      %v5558 = vadd.f32 %v5519, %v5531
      %v5559 = vadd.f32 %v5520, %v5531
      %v5560 = vadd.f32 %v5521, %v5531
      %v5561 = vadd.f32 %v5522, %v5531
      %v5562 = vadd.f32 %v5523, %v5531
      %v5563 = vadd.f32 %v5524, %v5531
      %v5564 = vadd.f32 %v5525, %v5531
      %v5565 = vxor.u32 %v5533, 2147483648
      %v5566 = vxor.u32 %v5534, 2147483648
      %v5567 = vxor.u32 %v5535, 2147483648
      %v5568 = vxor.u32 %v5536, 2147483648
      %v5569 = vxor.u32 %v5537, 2147483648
      %v5570 = vxor.u32 %v5538, 2147483648
      %v5571 = vxor.u32 %v5539, 2147483648
      %v5572 = vxor.u32 %v5540, 2147483648
      %v5573 = vxor.u32 %v5541, 2147483648
      %v5574 = vxor.u32 %v5542, 2147483648
      %v5575 = vxor.u32 %v5543, 2147483648
      %v5576 = vxor.u32 %v5544, 2147483648
      %v5577 = vxor.u32 %v5545, 2147483648
      %v5578 = vxor.u32 %v5546, 2147483648
      %v5579 = vxor.u32 %v5547, 2147483648
      %v5580 = vxor.u32 %v5548, 2147483648
      %v5581 = vxor.u32 %v5549, 2147483648
      %v5582 = vxor.u32 %v5550, 2147483648
      %v5583 = vxor.u32 %v5551, 2147483648
      %v5584 = vxor.u32 %v5552, 2147483648
      %v5585 = vxor.u32 %v5553, 2147483648
      %v5586 = vxor.u32 %v5554, 2147483648
      %v5587 = vxor.u32 %v5555, 2147483648
      %v5588 = vxor.u32 %v5556, 2147483648
      %v5589 = vxor.u32 %v5557, 2147483648
      %v5590 = vxor.u32 %v5558, 2147483648
      %v5591 = vxor.u32 %v5559, 2147483648
      %v5592 = vxor.u32 %v5560, 2147483648
      %v5593 = vxor.u32 %v5561, 2147483648
      %v5594 = vxor.u32 %v5562, 2147483648
      %v5595 = vxor.u32 %v5563, 2147483648
      %v5596 = vxor.u32 %v5564, 2147483648
      %v5597 = vmul.f32 %v5565, 1.442695
      %v5598 = vpow.pop %v5597
      %v5599 = vmul.f32 %v5566, 1.442695
      %v5600 = vpow.pop %v5599
      %v5601 = vmul.f32 %v5567, 1.442695
      %v5602 = vpow.pop %v5601
      %v5603 = vmul.f32 %v5568, 1.442695
      %v5604 = vpow.pop %v5603
      %v5605 = vmul.f32 %v5569, 1.442695
      %v5606 = vpow.pop %v5605
      %v5607 = vmul.f32 %v5570, 1.442695
      %v5608 = vpow.pop %v5607
      %v5609 = vmul.f32 %v5571, 1.442695
      %v5610 = vpow.pop %v5609
      %v5611 = vmul.f32 %v5572, 1.442695
      %v5612 = vpow.pop %v5611
      %v5613 = vmul.f32 %v5573, 1.442695
      %v5614 = vpow.pop %v5613
      %v5615 = vmul.f32 %v5574, 1.442695
      %v5616 = vpow.pop %v5615
      %v5617 = vmul.f32 %v5575, 1.442695
      %v5618 = vpow.pop %v5617
      %v5619 = vmul.f32 %v5576, 1.442695
      %v5620 = vpow.pop %v5619
      %v5621 = vmul.f32 %v5577, 1.442695
      %v5622 = vpow.pop %v5621
      %v5623 = vmul.f32 %v5578, 1.442695
      %v5624 = vpow.pop %v5623
      %v5625 = vmul.f32 %v5579, 1.442695
      %v5626 = vpow.pop %v5625
      %v5627 = vmul.f32 %v5580, 1.442695
      %v5628 = vpow.pop %v5627
      %v5629 = vmul.f32 %v5581, 1.442695
      %v5630 = vpow.pop %v5629
      %v5631 = vmul.f32 %v5582, 1.442695
      %v5632 = vpow.pop %v5631
      %v5633 = vmul.f32 %v5583, 1.442695
      %v5634 = vpow.pop %v5633
      %v5635 = vmul.f32 %v5584, 1.442695
      %v5636 = vpow.pop %v5635
      %v5637 = vmul.f32 %v5585, 1.442695
      %v5638 = vpow.pop %v5637
      %v5639 = vmul.f32 %v5586, 1.442695
      %v5640 = vpow.pop %v5639
      %v5641 = vmul.f32 %v5587, 1.442695
      %v5642 = vpow.pop %v5641
      %v5643 = vmul.f32 %v5588, 1.442695
      %v5644 = vpow.pop %v5643
      %v5645 = vmul.f32 %v5589, 1.442695
      %v5646 = vpow.pop %v5645
      %v5647 = vmul.f32 %v5590, 1.442695
      %v5648 = vpow.pop %v5647
      %v5649 = vmul.f32 %v5591, 1.442695
      %v5650 = vpow.pop %v5649
      %v5651 = vmul.f32 %v5592, 1.442695
      %v5652 = vpow.pop %v5651
      %v5653 = vmul.f32 %v5593, 1.442695
      %v5654 = vpow.pop %v5653
      %v5655 = vmul.f32 %v5594, 1.442695
      %v5656 = vpow.pop %v5655
      %v5657 = vmul.f32 %v5595, 1.442695
      %v5658 = vpow.pop %v5657
      %v5659 = vmul.f32 %v5596, 1.442695
      %v5660 = vpow.pop %v5659
      %v5661 = vadd.f32 %v5598, 1.0
      %v5662 = vadd.f32 %v5600, 1.0
      %v5663 = vadd.f32 %v5602, 1.0
      %v5664 = vadd.f32 %v5604, 1.0
      %v5665 = vadd.f32 %v5606, 1.0
      %v5666 = vadd.f32 %v5608, 1.0
      %v5667 = vadd.f32 %v5610, 1.0
      %v5668 = vadd.f32 %v5612, 1.0
      %v5669 = vadd.f32 %v5614, 1.0
      %v5670 = vadd.f32 %v5616, 1.0
      %v5671 = vadd.f32 %v5618, 1.0
      %v5672 = vadd.f32 %v5620, 1.0
      %v5673 = vadd.f32 %v5622, 1.0
      %v5674 = vadd.f32 %v5624, 1.0
      %v5675 = vadd.f32 %v5626, 1.0
      %v5676 = vadd.f32 %v5628, 1.0
      %v5677 = vadd.f32 %v5630, 1.0
      %v5678 = vadd.f32 %v5632, 1.0
      %v5679 = vadd.f32 %v5634, 1.0
      %v5680 = vadd.f32 %v5636, 1.0
      %v5681 = vadd.f32 %v5638, 1.0
      %v5682 = vadd.f32 %v5640, 1.0
      %v5683 = vadd.f32 %v5642, 1.0
      %v5684 = vadd.f32 %v5644, 1.0
      %v5685 = vadd.f32 %v5646, 1.0
      %v5686 = vadd.f32 %v5648, 1.0
      %v5687 = vadd.f32 %v5650, 1.0
      %v5688 = vadd.f32 %v5652, 1.0
      %v5689 = vadd.f32 %v5654, 1.0
      %v5690 = vadd.f32 %v5656, 1.0
      %v5691 = vadd.f32 %v5658, 1.0
      %v5692 = vadd.f32 %v5660, 1.0
      %v5693 = vrcp.pop %v5661
      %v5694 = vmul.f32 1.0, %v5693
      %v5695 = vrcp.pop %v5662
      %v5696 = vmul.f32 1.0, %v5695
      %v5697 = vrcp.pop %v5663
      %v5698 = vmul.f32 1.0, %v5697
      %v5699 = vrcp.pop %v5664
      %v5700 = vmul.f32 1.0, %v5699
      %v5701 = vrcp.pop %v5665
      %v5702 = vmul.f32 1.0, %v5701
      %v5703 = vrcp.pop %v5666
      %v5704 = vmul.f32 1.0, %v5703
      %v5705 = vrcp.pop %v5667
      %v5706 = vmul.f32 1.0, %v5705
      %v5707 = vrcp.pop %v5668
      %v5708 = vmul.f32 1.0, %v5707
      %v5709 = vrcp.pop %v5669
      %v5710 = vmul.f32 1.0, %v5709
      %v5711 = vrcp.pop %v5670
      %v5712 = vmul.f32 1.0, %v5711
      %v5713 = vrcp.pop %v5671
      %v5714 = vmul.f32 1.0, %v5713
      %v5715 = vrcp.pop %v5672
      %v5716 = vmul.f32 1.0, %v5715
      %v5717 = vrcp.pop %v5673
      %v5718 = vmul.f32 1.0, %v5717
      %v5719 = vrcp.pop %v5674
      %v5720 = vmul.f32 1.0, %v5719
      %v5721 = vrcp.pop %v5675
      %v5722 = vmul.f32 1.0, %v5721
      %v5723 = vrcp.pop %v5676
      %v5724 = vmul.f32 1.0, %v5723
      %v5725 = vrcp.pop %v5677
      %v5726 = vmul.f32 1.0, %v5725
      %v5727 = vrcp.pop %v5678
      %v5728 = vmul.f32 1.0, %v5727
      %v5729 = vrcp.pop %v5679
      %v5730 = vmul.f32 1.0, %v5729
      %v5731 = vrcp.pop %v5680
      %v5732 = vmul.f32 1.0, %v5731
      %v5733 = vrcp.pop %v5681
      %v5734 = vmul.f32 1.0, %v5733
      %v5735 = vrcp.pop %v5682
      %v5736 = vmul.f32 1.0, %v5735
      %v5737 = vrcp.pop %v5683
      %v5738 = vmul.f32 1.0, %v5737
      %v5739 = vrcp.pop %v5684
      %v5740 = vmul.f32 1.0, %v5739
      %v5741 = vrcp.pop %v5685
      %v5742 = vmul.f32 1.0, %v5741
      %v5743 = vrcp.pop %v5686
      %v5744 = vmul.f32 1.0, %v5743
      %v5745 = vrcp.pop %v5687
      %v5746 = vmul.f32 1.0, %v5745
      %v5747 = vrcp.pop %v5688
      %v5748 = vmul.f32 1.0, %v5747
      %v5749 = vrcp.pop %v5689
      %v5750 = vmul.f32 1.0, %v5749
      %v5751 = vrcp.pop %v5690
      %v5752 = vmul.f32 1.0, %v5751
      %v5753 = vrcp.pop %v5691
      %v5754 = vmul.f32 1.0, %v5753
      %v5755 = vrcp.pop %v5692
      %v5756 = vmul.f32 1.0, %v5755
      %v5757 = vmul.f32 %v5533, %v5694
      %v5758 = vmul.f32 %v5534, %v5696
      %v5759 = vmul.f32 %v5535, %v5698
      %v5760 = vmul.f32 %v5536, %v5700
      %v5761 = vmul.f32 %v5537, %v5702
      %v5762 = vmul.f32 %v5538, %v5704
      %v5763 = vmul.f32 %v5539, %v5706
      %v5764 = vmul.f32 %v5540, %v5708
      %v5765 = vmul.f32 %v5541, %v5710
      %v5766 = vmul.f32 %v5542, %v5712
      %v5767 = vmul.f32 %v5543, %v5714
      %v5768 = vmul.f32 %v5544, %v5716
      %v5769 = vmul.f32 %v5545, %v5718
      %v5770 = vmul.f32 %v5546, %v5720
      %v5771 = vmul.f32 %v5547, %v5722
      %v5772 = vmul.f32 %v5548, %v5724
      %v5773 = vmul.f32 %v5549, %v5726
      %v5774 = vmul.f32 %v5550, %v5728
      %v5775 = vmul.f32 %v5551, %v5730
      %v5776 = vmul.f32 %v5552, %v5732
      %v5777 = vmul.f32 %v5553, %v5734
      %v5778 = vmul.f32 %v5554, %v5736
      %v5779 = vmul.f32 %v5555, %v5738
      %v5780 = vmul.f32 %v5556, %v5740
      %v5781 = vmul.f32 %v5557, %v5742
      %v5782 = vmul.f32 %v5558, %v5744
      %v5783 = vmul.f32 %v5559, %v5746
      %v5784 = vmul.f32 %v5560, %v5748
      %v5785 = vmul.f32 %v5561, %v5750
      %v5786 = vmul.f32 %v5562, %v5752
      %v5787 = vmul.f32 %v5563, %v5754
      %v5788 = vmul.f32 %v5564, %v5756
      %s5789 = scalar_lea.vmem %s301, 12
      %v5790 = vld [vmem:[%s5789] sm:$0xf]
      %v5791 = vld [vmem:[%s5789 + $0x4] sm:$0xf]
      %v5792 = vld [vmem:[%s5789 + $0x8] sm:$0x1]
      %v5793 = vld [vmem:[%s5789 + $0xc] sm:$0xf]
      %v5794 = vld [vmem:[%s5789 + $0x10] sm:$0xf]
      %v5795 = vld [vmem:[%s5789 + $0x14] sm:$0x1]
      %v5796 = vld [vmem:[%s5789 + $0x18] sm:$0xf]
      %v5797 = vld [vmem:[%s5789 + $0x1c] sm:$0xf]
      %v5798 = vld [vmem:[%s5789 + $0x20] sm:$0x1]
      %v5799 = vld [vmem:[%s5789 + $0x24] sm:$0xf]
      %v5800 = vld [vmem:[%s5789 + $0x28] sm:$0xf]
      %v5801 = vld [vmem:[%s5789 + $0x2c] sm:$0x1]
      %v5802 = vld [vmem:[%s5789 + $0x30] sm:$0xf]
      %v5803 = vld [vmem:[%s5789 + $0x34] sm:$0xf]
      %v5804 = vld [vmem:[%s5789 + $0x38] sm:$0x1]
      %v5805 = vld [vmem:[%s5789 + $0x3c] sm:$0xf]
      %v5806 = vld [vmem:[%s5789 + $0x40] sm:$0xf]
      %v5807 = vld [vmem:[%s5789 + $0x44] sm:$0x1]
      %v5808 = vld [vmem:[%s5789 + $0x48] sm:$0xf]
      %v5809 = vld [vmem:[%s5789 + $0x4c] sm:$0xf]
      %v5810 = vld [vmem:[%s5789 + $0x50] sm:$0x1]
      %v5811 = vld [vmem:[%s5789 + $0x54] sm:$0xf]
      %v5812 = vld [vmem:[%s5789 + $0x58] sm:$0xf]
      %v5813 = vld [vmem:[%s5789 + $0x5c] sm:$0x1]
      %v5814 = vld [vmem:[%s5789 + $0x60] sm:$0xf]
      %v5815 = vld [vmem:[%s5789 + $0x64] sm:$0xf]
      %v5816 = vld [vmem:[%s5789 + $0x68] sm:$0x1]
      %v5817 = vld [vmem:[%s5789 + $0x6c] sm:$0xf]
      %v5818 = vld [vmem:[%s5789 + $0x70] sm:$0xf]
      %v5819 = vld [vmem:[%s5789 + $0x74] sm:$0x1]
      %v5820 = vld [vmem:[%s5789 + $0x78] sm:$0xf]
      %v5821 = vld [vmem:[%s5789 + $0x7c] sm:$0xf]
      %v5822 = vld [vmem:[%s5789 + $0x80] sm:$0x1]
      %v5823 = vld [vmem:[%s5789 + $0x84] sm:$0xf]
      %v5824 = vld [vmem:[%s5789 + $0x88] sm:$0xf]
      %v5825 = vld [vmem:[%s5789 + $0x8c] sm:$0x1]
      %v5826 = vld [vmem:[%s5789 + $0x90] sm:$0xf]
      %v5827 = vld [vmem:[%s5789 + $0x94] sm:$0xf]
      %v5828 = vld [vmem:[%s5789 + $0x98] sm:$0x1]
      %v5829 = vld [vmem:[%s5789 + $0x9c] sm:$0xf]
      %v5830 = vld [vmem:[%s5789 + $0xa0] sm:$0xf]
      %v5831 = vld [vmem:[%s5789 + $0xa4] sm:$0x1]
      %v5832 = vld [vmem:[%s5789 + $0xa8] sm:$0xf]
      %v5833 = vld [vmem:[%s5789 + $0xac] sm:$0xf]
      %v5834 = vld [vmem:[%s5789 + $0xb0] sm:$0x1]
      %v5835 = vld [vmem:[%s5789 + $0xb4] sm:$0xf]
      %v5836 = vld [vmem:[%s5789 + $0xb8] sm:$0xf]
      %v5837 = vld [vmem:[%s5789 + $0xbc] sm:$0x1]
      %v5838 = vunpack.c.l.bf16 %v5790
      %v5839 = vunpack.c.l.bf16 %v5791
      %v5840 = vunpack.c.l.bf16 %v5792
      %v5841 = vunpack.c.l.bf16 %v5793
      %v5842 = vunpack.c.l.bf16 %v5794
      %v5843 = vunpack.c.l.bf16 %v5795
      %v5844 = vunpack.c.l.bf16 %v5796
      %v5845 = vunpack.c.l.bf16 %v5797
      %v5846 = vunpack.c.l.bf16 %v5798
      %v5847 = vunpack.c.l.bf16 %v5799
      %v5848 = vunpack.c.l.bf16 %v5800
      %v5849 = vunpack.c.l.bf16 %v5801
      %v5850 = vunpack.c.l.bf16 %v5802
      %v5851 = vunpack.c.l.bf16 %v5803
      %v5852 = vunpack.c.l.bf16 %v5804
      %v5853 = vunpack.c.l.bf16 %v5805
      %v5854 = vunpack.c.l.bf16 %v5806
      %v5855 = vunpack.c.l.bf16 %v5807
      %v5856 = vunpack.c.l.bf16 %v5808
      %v5857 = vunpack.c.l.bf16 %v5809
      %v5858 = vunpack.c.l.bf16 %v5810
      %v5859 = vunpack.c.l.bf16 %v5811
      %v5860 = vunpack.c.l.bf16 %v5812
      %v5861 = vunpack.c.l.bf16 %v5813
      %v5862 = vunpack.c.l.bf16 %v5814
      %v5863 = vunpack.c.l.bf16 %v5815
      %v5864 = vunpack.c.l.bf16 %v5816
      %v5865 = vunpack.c.l.bf16 %v5817
      %v5866 = vunpack.c.l.bf16 %v5818
      %v5867 = vunpack.c.l.bf16 %v5819
      %v5868 = vunpack.c.l.bf16 %v5820
      %v5869 = vunpack.c.l.bf16 %v5821
      %v5870 = vunpack.c.l.bf16 %v5822
      %v5871 = vunpack.c.l.bf16 %v5823
      %v5872 = vunpack.c.l.bf16 %v5824
      %v5873 = vunpack.c.l.bf16 %v5825
      %v5874 = vunpack.c.l.bf16 %v5826
      %v5875 = vunpack.c.l.bf16 %v5827
      %v5876 = vunpack.c.l.bf16 %v5828
      %v5877 = vunpack.c.l.bf16 %v5829
      %v5878 = vunpack.c.l.bf16 %v5830
      %v5879 = vunpack.c.l.bf16 %v5831
      %v5880 = vunpack.c.l.bf16 %v5832
      %v5881 = vunpack.c.l.bf16 %v5833
      %v5882 = vunpack.c.l.bf16 %v5834
      %v5883 = vunpack.c.l.bf16 %v5835
      %v5884 = vunpack.c.l.bf16 %v5836
      %v5885 = vunpack.c.l.bf16 %v5837
      %vm5934 = vcmask 1046528
      %v5935 = vrot.slane %v5838, 1
      %v5936 = vrot.slane %v5839, 1
      %v5937 = vsel %vm5934, %v5935, %v5936
      %v5938 = vrot.slane %v5840, 1
      %v5939 = vsel %vm5934, %v5936, %v5938
      %v5940 = vrot.slane %v5841, 1
      %v5941 = vrot.slane %v5842, 1
      %v5942 = vsel %vm5934, %v5940, %v5941
      %v5943 = vrot.slane %v5843, 1
      %v5944 = vsel %vm5934, %v5941, %v5943
      %v5945 = vrot.slane %v5844, 1
      %v5946 = vrot.slane %v5845, 1
      %v5947 = vsel %vm5934, %v5945, %v5946
      %v5948 = vrot.slane %v5846, 1
      %v5949 = vsel %vm5934, %v5946, %v5948
      %v5950 = vrot.slane %v5847, 1
      %v5951 = vrot.slane %v5848, 1
      %v5952 = vsel %vm5934, %v5950, %v5951
      %v5953 = vrot.slane %v5849, 1
      %v5954 = vsel %vm5934, %v5951, %v5953
      %v5955 = vrot.slane %v5850, 1
      %v5956 = vrot.slane %v5851, 1
      %v5957 = vsel %vm5934, %v5955, %v5956
      %v5958 = vrot.slane %v5852, 1
      %v5959 = vsel %vm5934, %v5956, %v5958
      %v5960 = vrot.slane %v5853, 1
      %v5961 = vrot.slane %v5854, 1
      %v5962 = vsel %vm5934, %v5960, %v5961
      %v5963 = vrot.slane %v5855, 1
      %v5964 = vsel %vm5934, %v5961, %v5963
      %v5965 = vrot.slane %v5856, 1
      %v5966 = vrot.slane %v5857, 1
      %v5967 = vsel %vm5934, %v5965, %v5966
      %v5968 = vrot.slane %v5858, 1
      %v5969 = vsel %vm5934, %v5966, %v5968
      %v5970 = vrot.slane %v5859, 1
      %v5971 = vrot.slane %v5860, 1
      %v5972 = vsel %vm5934, %v5970, %v5971
      %v5973 = vrot.slane %v5861, 1
      %v5974 = vsel %vm5934, %v5971, %v5973
      %v5975 = vrot.slane %v5862, 1
      %v5976 = vrot.slane %v5863, 1
      %v5977 = vsel %vm5934, %v5975, %v5976
      %v5978 = vrot.slane %v5864, 1
      %v5979 = vsel %vm5934, %v5976, %v5978
      %v5980 = vrot.slane %v5865, 1
      %v5981 = vrot.slane %v5866, 1
      %v5982 = vsel %vm5934, %v5980, %v5981
      %v5983 = vrot.slane %v5867, 1
      %v5984 = vsel %vm5934, %v5981, %v5983
      %v5985 = vrot.slane %v5868, 1
      %v5986 = vrot.slane %v5869, 1
      %v5987 = vsel %vm5934, %v5985, %v5986
      %v5988 = vrot.slane %v5870, 1
      %v5989 = vsel %vm5934, %v5986, %v5988
      %v5990 = vrot.slane %v5871, 1
      %v5991 = vrot.slane %v5872, 1
      %v5992 = vsel %vm5934, %v5990, %v5991
      %v5993 = vrot.slane %v5873, 1
      %v5994 = vsel %vm5934, %v5991, %v5993
      %v5995 = vrot.slane %v5874, 1
      %v5996 = vrot.slane %v5875, 1
      %v5997 = vsel %vm5934, %v5995, %v5996
      %v5998 = vrot.slane %v5876, 1
      %v5999 = vsel %vm5934, %v5996, %v5998
      %v6000 = vrot.slane %v5877, 1
      %v6001 = vrot.slane %v5878, 1
      %v6002 = vsel %vm5934, %v6000, %v6001
      %v6003 = vrot.slane %v5879, 1
      %v6004 = vsel %vm5934, %v6001, %v6003
      %v6005 = vrot.slane %v5880, 1
      %v6006 = vrot.slane %v5881, 1
      %v6007 = vsel %vm5934, %v6005, %v6006
      %v6008 = vrot.slane %v5882, 1
      %v6009 = vsel %vm5934, %v6006, %v6008
      %v6010 = vrot.slane %v5883, 1
      %v6011 = vrot.slane %v5884, 1
      %v6012 = vsel %vm5934, %v6010, %v6011
      %v6013 = vrot.slane %v5885, 1
      %v6014 = vsel %vm5934, %v6011, %v6013
      %v6047 = vadd.f32 %v5757, %v5937
      %v6048 = vadd.f32 %v5758, %v5939
      %v6049 = vadd.f32 %v5759, %v5942
      %v6050 = vadd.f32 %v5760, %v5944
      %v6051 = vadd.f32 %v5761, %v5947
      %v6052 = vadd.f32 %v5762, %v5949
      %v6053 = vadd.f32 %v5763, %v5952
      %v6054 = vadd.f32 %v5764, %v5954
      %v6055 = vadd.f32 %v5765, %v5957
      %v6056 = vadd.f32 %v5766, %v5959
      %v6057 = vadd.f32 %v5767, %v5962
      %v6058 = vadd.f32 %v5768, %v5964
      %v6059 = vadd.f32 %v5769, %v5967
      %v6060 = vadd.f32 %v5770, %v5969
      %v6061 = vadd.f32 %v5771, %v5972
      %v6062 = vadd.f32 %v5772, %v5974
      %v6063 = vadd.f32 %v5773, %v5977
      %v6064 = vadd.f32 %v5774, %v5979
      %v6065 = vadd.f32 %v5775, %v5982
      %v6066 = vadd.f32 %v5776, %v5984
      %v6067 = vadd.f32 %v5777, %v5987
      %v6068 = vadd.f32 %v5778, %v5989
      %v6069 = vadd.f32 %v5779, %v5992
      %v6070 = vadd.f32 %v5780, %v5994
      %v6071 = vadd.f32 %v5781, %v5997
      %v6072 = vadd.f32 %v5782, %v5999
      %v6073 = vadd.f32 %v5783, %v6002
      %v6074 = vadd.f32 %v5784, %v6004
      %v6075 = vadd.f32 %v5785, %v6007
      %v6076 = vadd.f32 %v5786, %v6009
      %v6077 = vadd.f32 %v5787, %v6012
      %v6078 = vadd.f32 %v5788, %v6014
      %6079 = vst [vmem:[%s326] sm:$0xff] %v6047
      %6080 = vst [vmem:[%s326 + $0x8] sm:$0xff] %v6048
      %6081 = vst [vmem:[%s326 + $0x10] sm:$0xff] %v6049
      %6082 = vst [vmem:[%s326 + $0x18] sm:$0xff] %v6050
      %6083 = vst [vmem:[%s326 + $0x20] sm:$0xff] %v6051
      %6084 = vst [vmem:[%s326 + $0x28] sm:$0xff] %v6052
      %6085 = vst [vmem:[%s326 + $0x30] sm:$0xff] %v6053
      %6086 = vst [vmem:[%s326 + $0x38] sm:$0xff] %v6054
      %6087 = vst [vmem:[%s326 + $0x40] sm:$0xff] %v6055
      %6088 = vst [vmem:[%s326 + $0x48] sm:$0xff] %v6056
      %6089 = vst [vmem:[%s326 + $0x50] sm:$0xff] %v6057
      %6090 = vst [vmem:[%s326 + $0x58] sm:$0xff] %v6058
      %6091 = vst [vmem:[%s326 + $0x60] sm:$0xff] %v6059
      %6092 = vst [vmem:[%s326 + $0x68] sm:$0xff] %v6060
      %6093 = vst [vmem:[%s326 + $0x70] sm:$0xff] %v6061
      %6094 = vst [vmem:[%s326 + $0x78] sm:$0xff] %v6062
      %6095 = vst [vmem:[%s326 + $0x80] sm:$0xff] %v6063
      %6096 = vst [vmem:[%s326 + $0x88] sm:$0xff] %v6064
      %6097 = vst [vmem:[%s326 + $0x90] sm:$0xff] %v6065
      %6098 = vst [vmem:[%s326 + $0x98] sm:$0xff] %v6066
      %6099 = vst [vmem:[%s326 + $0xa0] sm:$0xff] %v6067
      %6100 = vst [vmem:[%s326 + $0xa8] sm:$0xff] %v6068
      %6101 = vst [vmem:[%s326 + $0xb0] sm:$0xff] %v6069
      %6102 = vst [vmem:[%s326 + $0xb8] sm:$0xff] %v6070
      %6103 = vst [vmem:[%s326 + $0xc0] sm:$0xff] %v6071
      %6104 = vst [vmem:[%s326 + $0xc8] sm:$0xff] %v6072
      %6105 = vst [vmem:[%s326 + $0xd0] sm:$0xff] %v6073
      %6106 = vst [vmem:[%s326 + $0xd8] sm:$0xff] %v6074
      %6107 = vst [vmem:[%s326 + $0xe0] sm:$0xff] %v6075
      %6108 = vst [vmem:[%s326 + $0xe8] sm:$0xff] %v6076
      %6109 = vst [vmem:[%s326 + $0xf0] sm:$0xff] %v6077
      %6110 = vst [vmem:[%s326 + $0xf8] sm:$0xff] %v6078
      %s6111 = smul.u32 %s20, 2
      %s6112 = sadd.s32 %s6111, %s21
      %p6113 = scmp.lt.s32.totalorder %s6112, 3
      %s6114 = scalar_select %p6113, %s6112, 3
      %s6115 = smul.addr %s6114, 32
      %s6116 = smul.addr %s6115, 8
      %s6117 = scalar_lea.vmem %s5, %s6116
      // Predicated region
      $region41: #{bottleneck_all_lora_m_forward.1} parent=39 // pred_check
        %p6118 = pneg %p184
      $region42: #{bottleneck_all_lora_m_forward.1} parent=39 // pred_check_branch
        %6120 = sbr.rel (%p6118) target = $region44
      $region43: #{bottleneck_all_lora_m_forward.1} parent=39 // pred_region
        %s6121 = smul.u32 %s20, 2
        %s6122 = sadd.s32 %s6121, %s21
      $region44: #{bottleneck_all_lora_m_forward.1} parent=39 // pred_fallthru
        _
    $region40: #{bottleneck_all_lora_m_forward.1} parent=5 // pred_fallthru
      _
    %p6123 = scmp.le.s32.totalorder 2, %s11
    // Predicated region
    $region45: #{bottleneck_all_lora_m_forward.1} parent=5 // pred_check
      %p6124 = pneg %p6123
    $region46: #{bottleneck_all_lora_m_forward.1} parent=5 // pred_check_branch
      %6126 = sbr.rel (%p6124) target = $region48
    $region47: #{bottleneck_all_lora_m_forward.1} parent=5 // pred_region
      %s6127 = ssub.s32 %s11, 2
      // Predicated region
      $region49: #{bottleneck_all_lora_m_forward.1} parent=47 // pred_check
        %p6128 = pneg %p190
      $region50: #{bottleneck_all_lora_m_forward.1} parent=47 // pred_check_branch
        %6130 = sbr.rel (%p6128) target = $region52
      $region51: #{bottleneck_all_lora_m_forward.1} parent=47 // pred_region
        %s6131 = smul.u32 %s22, 2
        %s6132 = sadd.s32 %s6131, %s23
        %p6133 = scmp.lt.s32.totalorder %s6132, 3
        %s6134 = scalar_select %p6133, %s6132, 3
        %s6135 = smul.addr %s6134, 32
        %s6136 = smul.addr %s6135, 8
        %s6137 = scalar_lea.vmem %s5, %s6136
      $region52: #{bottleneck_all_lora_m_forward.1} parent=47 // pred_fallthru
        _
    $region48: #{bottleneck_all_lora_m_forward.1} parent=5 // pred_fallthru
      _
  $region6: #{bottleneck_all_lora_m_forward.1} parent=0 // loop_footer
    %s15 = sadd.s32 1, %s11
  $region7: #{bottleneck_all_lora_m_forward.1} parent=0 // loop_footer_branch
    %10 = sbr.rel target = $region3
  $region8: #{bottleneck_all_lora_m_forward.1} parent=0 // loop_exit
    _

</llo_original>
